<compile_context>
chip_gen: v6e
topology: v6e:2x2x1
jax: 0.10.0
libtpu: 0.0.40
codegen_flags: <defaults>
</compile_context>

<pallas_src>
import numpy as np
import jax
import jax.numpy as jnp
from jax import lax
from jax.experimental import pallas as pl
from jax.experimental.pallas import tpu as pltpu


_STATIC_UNROLL_MAX_SEQ = 16   # fully unroll the time loop when seq is this short
_USE_CORE_PARALLEL = False    # set True on v7x (2 TCs/chip) to shard the batch-block
                              # grid axis across TensorCores (pltpu.CORE_PARALLEL)


# --------------------------------------------------------------------------- #
# Hardware-derived sizing helpers
# --------------------------------------------------------------------------- #
def _round_up(x, m):
    return (x + m - 1) // m * m


def _vmem_capacity_bytes():
    try:
        info = pltpu.get_tpu_info()
        cap = int(getattr(info, "vmem_capacity_bytes", 0))
        if cap > 0:
            return cap
    except Exception:
        pass
    return 64 * 1024 * 1024            # conservative default (v7x per-core VMEM)


def _mxu_rows_target():
    # One MXU-height tile per batch block: 128 rows on v2-v5, 256 on v6e/v7x.
    try:
        kind = jax.devices()[0].device_kind.lower()
    except Exception:
        return 128
    if any(v in kind for v in ("v2", "v3", "v4", "v5")):
        return 128
    return 256


def _pick_batch_block(batch, seq, emb_dim, hidden, n_layers, itemsize):
    """Largest batch block (multiple of 8) capped at one MXU-tile height and at
    the number of rows whose proj/act slabs + pipelined x block fit ~60% of VMEM."""
    bb_cap = _round_up(max(int(batch), 1), 8)
    target = _mxu_rows_target()
    budget = int(0.60 * _vmem_capacity_bytes())
    # Resident weights (x2 for potential double buffering) + f32 biases.
    w_bytes = 2 * itemsize * (2 * emb_dim * hidden
                              + max(n_layers - 1, 1) * 4 * hidden * hidden
                              + n_layers * 2 * hidden * hidden)
    w_bytes += 2 * 4 * n_layers * 2 * hidden
    # Per-batch-row VMEM: 4 slabs (proj_f/b, act_f/b) + double-buffered x block
    # + out/lens blocks.
    per_row = seq * itemsize * (4 * hidden + 2 * emb_dim) + 4 * (4 * hidden + 2)
    avail = max(budget - w_bytes, 8 * per_row)
    rows_fit = max(8, (avail // per_row) // 8 * 8)
    return int(max(8, min(bb_cap, target, rows_fit)))


# --------------------------------------------------------------------------- #
# Kernel
# --------------------------------------------------------------------------- #
def _make_rnn_kernel(seq, bb, hidden, n_layers, static_unroll, compute_dtype):
    two_h = 2 * hidden

    def kernel(maxlen_ref,                      # SMEM  [nb]        per-block max length
               x_ref,                           # VMEM  [1, seq*bb, emb]
               lens_ref,                        # VMEM  [bb, 1]     int32
               w_ih0_ref,                       # VMEM  [2, emb, H]
               w_ihr_ref,                       # VMEM  [max(L-1,1), 4, H, H]
               w_hh_ref,                        # VMEM  [L, 2, H, H]
               b_ref,                           # VMEM  [L, 2, 1, H] (f32)
               out_ref,                         # VMEM  [bb, 2H]
               pf_ref, pb_ref,                  # VMEM  [seq*bb, H] proj slabs (fwd/bwd)
               af_ref, ab_ref):                 # VMEM  [seq*bb, H] activation slabs
        lens = lens_ref[...]                                    # [bb, 1] int32
        h_f = jnp.zeros((bb, hidden), jnp.float32)
        h_b = jnp.zeros((bb, hidden), jnp.float32)

        if not static_unroll:
            # Sequences are sorted descending -> later batch blocks have smaller
            # max length; skipping fully-padded timesteps removes whole serial
            # matmul+tanh steps.
            n_steps = maxlen_ref[pl.program_id(0)]

        for l in range(n_layers):                               # small & static
            # ---- hoisted input projection: big MXU matmuls covering every
            #      timestep, written into separate lane-dense fwd/bwd slabs ----
            if l == 0:
                xin = x_ref[0]                                  # [seq*bb, emb]
                pf = jnp.dot(xin, w_ih0_ref[0], preferred_element_type=jnp.float32)
                pb = jnp.dot(xin, w_ih0_ref[1], preferred_element_type=jnp.float32)
            else:
                a_f = af_ref[...]
                a_b = ab_ref[...]
                pf = (jnp.dot(a_f, w_ihr_ref[l - 1, 0], preferred_element_type=jnp.float32)
                      + jnp.dot(a_b, w_ihr_ref[l - 1, 2], preferred_element_type=jnp.float32))
                pb = (jnp.dot(a_f, w_ihr_ref[l - 1, 1], preferred_element_type=jnp.float32)
                      + jnp.dot(a_b, w_ihr_ref[l - 1, 3], preferred_element_type=jnp.float32))
            pf_ref[...] = (pf + b_ref[l, 0]).astype(pf_ref.dtype)
            pb_ref[...] = (pb + b_ref[l, 1]).astype(pb_ref.dtype)

            w_hh_f = w_hh_ref[l, 0]                             # [H, H]
            w_hh_b = w_hh_ref[l, 1]
            write_act = l < n_layers - 1                        # last layer: no writeback

            # ---- interleaved fwd/bwd recurrence: only h @ W_hh is serial ----
            def step(t, tb, hf, hb):
                if isinstance(t, int):
                    rf = t * bb
                    rb = tb * bb
                else:
                    rf = pl.multiple_of(t * bb, bb)
                    rb = pl.multiple_of(tb * bb, bb)
                pre_f = pf_ref[pl.ds(rf, bb), :].astype(jnp.float32) + jnp.dot(
                    hf.astype(compute_dtype), w_hh_f, preferred_element_type=jnp.float32)
                pre_b = pb_ref[pl.ds(rb, bb), :].astype(jnp.float32) + jnp.dot(
                    hb.astype(compute_dtype), w_hh_b, preferred_element_type=jnp.float32)
                hf = jnp.where(lens > t, jnp.tanh(pre_f), hf)    # carry h on padded steps
                hb = jnp.where(lens > tb, jnp.tanh(pre_b), hb)   # bwd stays 0 until valid
                if write_act:
                    af_ref[pl.ds(rf, bb), :] = hf.astype(af_ref.dtype)
                    ab_ref[pl.ds(rb, bb), :] = hb.astype(ab_ref.dtype)
                return hf, hb

            h0 = jnp.zeros((bb, hidden), jnp.float32)
            if static_unroll:
                # Full unroll (seq <= 16): maximum LLO scheduling visibility,
                # no loop bookkeeping; masking handles padded steps exactly.
                hf, hb = h0, h0
                for t in range(seq):
                    hf, hb = step(t, seq - 1 - t, hf, hb)
                h_f, h_b = hf, hb
            else:
                # Dynamic trip count (per-block max length).  `unroll` is not
                # available with dynamic bounds; skipping padded serial steps
                # is the bigger win for ragged, sorted batches.
                def body(t, carry):
                    return step(t, n_steps - 1 - t, carry[0], carry[1])
                h_f, h_b = lax.fori_loop(0, n_steps, body, (h0, h0))

        out_ref[:, 0:hidden] = h_f
        out_ref[:, hidden:two_h] = h_b

    return kernel


# --------------------------------------------------------------------------- #
# Wrapper
# --------------------------------------------------------------------------- #
def rnn_forward(text, text_lengths, params, compute_dtype=jnp.float32):
    """embedding -> n-layer bidirectional tanh RNN over length-masked sequences
    -> concat(final fwd hidden, final bwd hidden) -> Linear.

    compute_dtype: jnp.float32 (default, bit-tight) or jnp.bfloat16 (recommended
    on v6e/v7x: native MXU dtype, halves the VMEM slabs -> larger batch blocks).
    """
    emb_table = params["embedding"]
    n_layers, _, hidden, _ = params["w_hh_t"].shape
    two_h = 2 * hidden
    seq, batch = text.shape
    emb_dim = emb_table.shape[1]
    cdt = jnp.dtype(compute_dtype)
    itemsize = cdt.itemsize

    # ---- batch-block choice: one MXU-height tile, VMEM-budgeted ----
    bb = _pick_batch_block(batch, seq, emb_dim, hidden, n_layers, itemsize)
    nb = pl.cdiv(max(batch, 1), bb)
    batch_p = nb * bb
    pad_b = batch_p - batch

    # Embedding gather + eval-mode dropout (identity) stay in XLA glue.  Padded
    # batch rows get length 0, so their hidden stays zero and is dropped below.
    x = emb_table[text].astype(cdt)                            # [seq, batch, emb]
    if pad_b:
        x = jnp.pad(x, ((0, 0), (0, pad_b), (0, 0)))
    lens = jnp.pad(text_lengths.astype(jnp.int32), (0, pad_b))  # [batch_p]
    # Pre-lay x out as one [seq*bb, emb] slab per batch block (no in-kernel reshape).
    x_blocks = (x.reshape(seq, nb, bb, emb_dim)
                  .transpose(1, 0, 2, 3)
                  .reshape(nb, seq * bb, emb_dim))
    lens_col = lens[:, None]                                    # [batch_p, 1]
    blk_maxlen = lens.reshape(nb, bb).max(axis=1).astype(jnp.int32)   # [nb]

    w_ih0 = params["w_ih0"].astype(cdt)       # [2, emb, H]
    w_ihr = params["w_ih_rest"].astype(cdt)   # [max(L-1,1), 4, H, H]
    w_hh = params["w_hh_t"].astype(cdt)       # [L, 2, H, H]
    b_cat = params["b_cat"]                   # [L, 2, 1, H]  (kept f32)

    static_unroll = seq <= _STATIC_UNROLL_MAX_SEQ
    kernel = _make_rnn_kernel(seq, bb, hidden, n_layers, static_unroll, cdt)

    grid_spec = pltpu.PrefetchScalarGridSpec(
        num_scalar_prefetch=1,                # per-block max length -> SMEM
        grid=(nb,),
        in_specs=[
            pl.BlockSpec((1, seq * bb, emb_dim), lambda i, ml: (i, 0, 0)),
            pl.BlockSpec((bb, 1), lambda i, ml: (i, 0)),
            # Weights: constant index_map -> VMEM-resident across the grid.
            pl.BlockSpec(w_ih0.shape, lambda i, ml: (0, 0, 0)),
            pl.BlockSpec(w_ihr.shape, lambda i, ml: (0, 0, 0, 0)),
            pl.BlockSpec(w_hh.shape, lambda i, ml: (0, 0, 0, 0)),
            pl.BlockSpec(b_cat.shape, lambda i, ml: (0, 0, 0, 0)),
        ],
        out_specs=pl.BlockSpec((bb, two_h), lambda i, ml: (i, 0)),
        scratch_shapes=[
            pltpu.VMEM((seq * bb, hidden), cdt),   # proj fwd
            pltpu.VMEM((seq * bb, hidden), cdt),   # proj bwd
            pltpu.VMEM((seq * bb, hidden), cdt),   # act fwd (next-layer input)
            pltpu.VMEM((seq * bb, hidden), cdt),   # act bwd
        ],
    )

    dim_sem = (pltpu.CORE_PARALLEL,) if _USE_CORE_PARALLEL else ("parallel",)

    # Advisory cost estimate so XLA schedules around the long recurrence.
    flops = 2 * seq * batch_p * emb_dim * two_h
    flops += 2 * seq * batch_p * two_h * two_h * max(n_layers - 1, 0)
    flops += n_layers * 2 * 2 * seq * batch_p * hidden * hidden
    transcendentals = n_layers * 2 * seq * batch_p * hidden
    bytes_accessed = (x_blocks.size * itemsize + lens_col.size * 4
                      + (w_ih0.size + w_ihr.size + w_hh.size) * itemsize
                      + b_cat.size * 4 + batch_p * two_h * 4)

    # VMEM budget derived from the actual slab / block / weight sizes.
    vmem_need = (4 * seq * bb * hidden * itemsize          # scratch slabs
                 + 2 * seq * bb * emb_dim * itemsize       # double-buffered x block
                 + 2 * bb * (two_h * 4 + 4)                # out + lens blocks
                 + 2 * (w_ih0.size + w_ihr.size + w_hh.size) * itemsize
                 + 2 * b_cat.size * 4)
    vmem_limit = int(min(max(vmem_need + vmem_need // 2 + (4 << 20), 32 << 20),
                         int(0.92 * _vmem_capacity_bytes())))

    hid = pl.pallas_call(
        kernel,
        out_shape=jax.ShapeDtypeStruct((batch_p, two_h), jnp.float32),
        grid_spec=grid_spec,
        compiler_params=pltpu.CompilerParams(
            dimension_semantics=dim_sem,
            vmem_limit_bytes=vmem_limit,
        ),
        cost_estimate=pl.CostEstimate(flops=int(flops),
                                      transcendentals=int(transcendentals),
                                      bytes_accessed=int(bytes_accessed)),
    )(blk_maxlen, x_blocks, lens_col, w_ih0, w_ihr, w_hh, b_cat)

    hid = hid[:batch]                                          # drop padded batch rows
    # Tiny [batch, out_dim] FC left to XLA (kernel returns the lane-dense hidden).
    return hid @ params["w_fc_t"] + params["b_fc"]


# --------------------------------------------------------------------------- #
# Parameters (PyTorch-equivalent init / layout)
# --------------------------------------------------------------------------- #
def init_params(key, vocab_size, emb_dim, hidden_dim, output_dim, n_layers, pad_idx):
    k_emb, k_rnn, k_fcw, k_fcb = jax.random.split(key, 4)

    emb = jax.random.normal(k_emb, (vocab_size, emb_dim), jnp.float32)
    emb = emb.at[pad_idx].set(0.0)                             # padding_idx row = 0

    k = 1.0 / np.sqrt(hidden_dim)
    rng = k_rnn
    w_ih0 = None
    w_ihr_layers, w_hh_layers, b_layers = [], [], []
    for l in range(n_layers):
        in_size = emb_dim if l == 0 else 2 * hidden_dim
        ih_dirs, hh_dirs, b_dirs = [], [], []
        for _d in range(2):                                    # 0 = forward, 1 = backward
            rng, k1, k2, k3, k4 = jax.random.split(rng, 5)
            w_ih = jax.random.uniform(k1, (hidden_dim, in_size), jnp.float32, -k, k)
            w_hh = jax.random.uniform(k2, (hidden_dim, hidden_dim), jnp.float32, -k, k)
            b_ih = jax.random.uniform(k3, (hidden_dim,), jnp.float32, -k, k)
            b_hh = jax.random.uniform(k4, (hidden_dim,), jnp.float32, -k, k)
            ih_dirs.append(w_ih.T)                             # [in_size, H]
            hh_dirs.append(w_hh.T)                             # [H, H]
            b_dirs.append((b_ih + b_hh)[None, :])              # [1, H]
        if l == 0:
            w_ih0 = jnp.stack(ih_dirs)                         # [2, emb, H]
        else:
            ih_f, ih_b = ih_dirs                               # each [2H, H]
            # order: (src f->dst f, src f->dst b, src b->dst f, src b->dst b)
            w_ihr_layers.append(jnp.stack([ih_f[:hidden_dim], ih_b[:hidden_dim],
                                           ih_f[hidden_dim:], ih_b[hidden_dim:]]))
        w_hh_layers.append(jnp.stack(hh_dirs))                 # [2, H, H]
        b_layers.append(jnp.stack(b_dirs))                     # [2, 1, H]

    if w_ihr_layers:
        w_ih_rest = jnp.stack(w_ihr_layers)                    # [L-1, 4, H, H]
    else:
        w_ih_rest = jnp.zeros((1, 4, hidden_dim, hidden_dim), jnp.float32)  # unused

    kf = 1.0 / np.sqrt(2 * hidden_dim)
    w_fc = jax.random.uniform(k_fcw, (output_dim, 2 * hidden_dim), jnp.float32, -kf, kf)
    b_fc = jax.random.uniform(k_fcb, (output_dim,), jnp.float32, -kf, kf)

    return dict(
        embedding=emb,
        w_ih0=w_ih0,                    # [2, emb, H]
        w_ih_rest=w_ih_rest,            # [max(L-1,1), 4, H, H]
        w_hh_t=jnp.stack(w_hh_layers),  # [L, 2, H, H]
        b_cat=jnp.stack(b_layers),      # [L, 2, 1, H]
        w_fc_t=w_fc.T,                  # [2H, out]
        b_fc=b_fc[None, :],             # [1, out]
    )


# --------------------------------------------------------------------------- #
# Pure-JAX reference (packed-sequence semantics) for validation
# --------------------------------------------------------------------------- #
def rnn_reference(text, text_lengths, params):
    emb_table = params["embedding"]
    n_layers, _, hidden, _ = params["w_hh_t"].shape
    seq, batch = text.shape

    x = emb_table[text].astype(jnp.float32)                    # [seq, batch, emb]
    mask = (jnp.arange(seq)[:, None] < text_lengths[None, :])[:, :, None]

    layer_in = x
    h_f = h_b = None
    for l in range(n_layers):
        if l == 0:
            pf = jnp.einsum("tbi,ih->tbh", layer_in, params["w_ih0"][0])
            pb = jnp.einsum("tbi,ih->tbh", layer_in, params["w_ih0"][1])
        else:
            a_f, a_b = layer_in
            w = params["w_ih_rest"][l - 1]
            pf = (jnp.einsum("tbi,ih->tbh", a_f, w[0])
                  + jnp.einsum("tbi,ih->tbh", a_b, w[2]))
            pb = (jnp.einsum("tbi,ih->tbh", a_f, w[1])
                  + jnp.einsum("tbi,ih->tbh", a_b, w[3]))
        pf = pf + params["b_cat"][l, 0]
        pb = pb + params["b_cat"][l, 1]
        whf, whb = params["w_hh_t"][l, 0], params["w_hh_t"][l, 1]
        hf = jnp.zeros((batch, hidden), jnp.float32)
        hb = jnp.zeros((batch, hidden), jnp.float32)
        outs_f, outs_b = [None] * seq, [None] * seq
        for t in range(seq):
            hf = jnp.where(mask[t], jnp.tanh(pf[t] + hf @ whf), hf)
            outs_f[t] = hf
        for t in range(seq - 1, -1, -1):
            hb = jnp.where(mask[t], jnp.tanh(pb[t] + hb @ whb), hb)
            outs_b[t] = hb
        h_f, h_b = hf, hb
        layer_in = (jnp.stack(outs_f), jnp.stack(outs_b))
    cat = jnp.concatenate([h_f, h_b], axis=-1)
    return cat @ params["w_fc_t"] + params["b_fc"]


if __name__ == "__main__":
    vocab_size, emb_dim, hidden_dim, output_dim = 50, 32, 32, 4
    n_layers, pad_idx = 2, 0
    seq_len, batch = 8, 4

    key = jax.random.PRNGKey(0)
    k_params, k_text = jax.random.split(key)
    params = init_params(k_params, vocab_size, emb_dim, hidden_dim,
                         output_dim, n_layers, pad_idx)

    # lengths sorted descending (pack_padded_sequence default enforce_sorted=True)
    text_lengths = jnp.array([8, 6, 5, 3], dtype=jnp.int32)
    toks = jax.random.randint(k_text, (seq_len, batch), 1, vocab_size, dtype=jnp.int32)
    t_idx = jnp.arange(seq_len)[:, None]
    text = jnp.where(t_idx < text_lengths[None, :], toks, pad_idx)

    out = jax.block_until_ready(rnn_forward(text, text_lengths, params))
    ref = rnn_reference(text, text_lengths, params)

    assert out.shape == (batch, output_dim)
    assert jnp.allclose(out, ref, atol=1e-4, rtol=1e-4), \
        float(jnp.max(jnp.abs(out - ref)))
    print("KERNEL_OK")
</pallas_src>

<mosaic_0001>
module attributes {stable_mosaic.version = 11 : i64} {
  func.func @kernel(%arg0: i32, %arg1: memref<1xi32, #tpu.memory_space<smem>>, %arg2: memref<1x64x32xf32, #tpu.memory_space<vmem>>, %arg3: memref<8x1xi32, #tpu.memory_space<vmem>>, %arg4: memref<2x32x32xf32, #tpu.memory_space<vmem>>, %arg5: memref<1x4x32x32xf32, #tpu.memory_space<vmem>>, %arg6: memref<2x2x32x32xf32, #tpu.memory_space<vmem>>, %arg7: memref<2x2x1x32xf32, #tpu.memory_space<vmem>>, %arg8: memref<8x64xf32, #tpu.memory_space<vmem>>, %arg9: memref<64x32xf32, #tpu.memory_space<vmem>>, %arg10: memref<64x32xf32, #tpu.memory_space<vmem>>, %arg11: memref<64x32xf32, #tpu.memory_space<vmem>>, %arg12: memref<64x32xf32, #tpu.memory_space<vmem>>) attributes {dimension_semantics = [#tpu.dimension_semantics<parallel>], iteration_bounds = array<i64: 1>, scalar_prefetch = 1 : i64, scratch_operands = 4 : i64, tpu.core_type = #tpu.core_type<tc>, window_params = [{transform_indices = @transform_0, window_bounds = array<i64: 1, 64, 32>}, {transform_indices = @transform_1, window_bounds = array<i64: 8, 1>}, {pipeline_mode = #tpu.pipeline_mode<synchronous>, transform_indices = @transform_2, window_bounds = array<i64: 2, 32, 32>}, {pipeline_mode = #tpu.pipeline_mode<synchronous>, transform_indices = @transform_3, window_bounds = array<i64: 1, 4, 32, 32>}, {pipeline_mode = #tpu.pipeline_mode<synchronous>, transform_indices = @transform_4, window_bounds = array<i64: 2, 2, 32, 32>}, {pipeline_mode = #tpu.pipeline_mode<synchronous>, transform_indices = @transform_5, window_bounds = array<i64: 2, 2, 1, 32>}, {transform_indices = @transform_6, window_bounds = array<i64: 8, 64>}]} {
    %c0 = arith.constant 0 : index
    %c0_0 = arith.constant 0 : index
    %0 = vector.load %arg3[%c0, %c0_0] : memref<8x1xi32, #tpu.memory_space<vmem>>, vector<8x1xi32>
    %c0_1 = arith.constant 0 : index
    %c0_2 = arith.constant 0 : index
    %c0_3 = arith.constant 0 : index
    %1 = vector.load %arg2[%c0_1, %c0_2, %c0_3] : memref<1x64x32xf32, #tpu.memory_space<vmem>>, vector<1x64x32xf32>
    %2 = vector.shape_cast %1 : vector<1x64x32xf32> to vector<64x32xf32>
    %c0_4 = arith.constant 0 : index
    %c0_5 = arith.constant 0 : index
    %c0_6 = arith.constant 0 : index
    %3 = vector.load %arg4[%c0_4, %c0_5, %c0_6] : memref<2x32x32xf32, #tpu.memory_space<vmem>>, vector<1x32x32xf32>
    %4 = vector.shape_cast %3 : vector<1x32x32xf32> to vector<32x32xf32>
    %cst = arith.constant dense<0.000000e+00> : vector<64x32xf32>
    %5 = tpu.matmul %2, %4, %cst {dimension_numbers = #tpu.dot_dimension_numbers<[1], [0], [0], [1], [0, 0, 1, 1], [], []>} : vector<64x32xf32>, vector<32x32xf32>, vector<64x32xf32> -> vector<64x32xf32>
    %c1 = arith.constant 1 : index
    %c0_7 = arith.constant 0 : index
    %c0_8 = arith.constant 0 : index
    %6 = vector.load %arg4[%c1, %c0_7, %c0_8] : memref<2x32x32xf32, #tpu.memory_space<vmem>>, vector<1x32x32xf32>
    %7 = vector.shape_cast %6 : vector<1x32x32xf32> to vector<32x32xf32>
    %cst_9 = arith.constant dense<0.000000e+00> : vector<64x32xf32>
    %8 = tpu.matmul %2, %7, %cst_9 {dimension_numbers = #tpu.dot_dimension_numbers<[1], [0], [0], [1], [0, 0, 1, 1], [], []>} : vector<64x32xf32>, vector<32x32xf32>, vector<64x32xf32> -> vector<64x32xf32>
    %c0_10 = arith.constant 0 : index
    %c0_11 = arith.constant 0 : index
    %c0_12 = arith.constant 0 : index
    %c0_13 = arith.constant 0 : index
    %9 = vector.load %arg7[%c0_10, %c0_11, %c0_12, %c0_13] : memref<2x2x1x32xf32, #tpu.memory_space<vmem>>, vector<1x1x1x32xf32>
    %10 = vector.shape_cast %9 : vector<1x1x1x32xf32> to vector<1x32xf32>
    %11 = vector.broadcast %10 : vector<1x32xf32> to vector<64x32xf32>
    %12 = arith.addf %5, %11 : vector<64x32xf32>
    %c0_14 = arith.constant 0 : index
    %c0_15 = arith.constant 0 : index
    %13 = vector.load %arg9[%c0_14, %c0_15] : memref<64x32xf32, #tpu.memory_space<vmem>>, vector<64x32xf32>
    tpu.vector_store %arg9[%c0_14, %c0_15], %12 {strides = array<i32>} : memref<64x32xf32, #tpu.memory_space<vmem>>, vector<64x32xf32>,
    %c0_16 = arith.constant 0 : index
    %c1_17 = arith.constant 1 : index
    %c0_18 = arith.constant 0 : index
    %c0_19 = arith.constant 0 : index
    %14 = vector.load %arg7[%c0_16, %c1_17, %c0_18, %c0_19] : memref<2x2x1x32xf32, #tpu.memory_space<vmem>>, vector<1x1x1x32xf32>
    %15 = vector.shape_cast %14 : vector<1x1x1x32xf32> to vector<1x32xf32>
    %16 = vector.broadcast %15 : vector<1x32xf32> to vector<64x32xf32>
    %17 = arith.addf %8, %16 : vector<64x32xf32>
    %c0_20 = arith.constant 0 : index
    %c0_21 = arith.constant 0 : index
    %18 = vector.load %arg10[%c0_20, %c0_21] : memref<64x32xf32, #tpu.memory_space<vmem>>, vector<64x32xf32>
    tpu.vector_store %arg10[%c0_20, %c0_21], %17 {strides = array<i32>} : memref<64x32xf32, #tpu.memory_space<vmem>>, vector<64x32xf32>,
    %c0_22 = arith.constant 0 : index
    %c0_23 = arith.constant 0 : index
    %c0_24 = arith.constant 0 : index
    %c0_25 = arith.constant 0 : index
    %19 = vector.load %arg6[%c0_22, %c0_23, %c0_24, %c0_25] : memref<2x2x32x32xf32, #tpu.memory_space<vmem>>, vector<1x1x32x32xf32>
    %20 = vector.shape_cast %19 : vector<1x1x32x32xf32> to vector<32x32xf32>
    %c0_26 = arith.constant 0 : index
    %c1_27 = arith.constant 1 : index
    %c0_28 = arith.constant 0 : index
    %c0_29 = arith.constant 0 : index
    %21 = vector.load %arg6[%c0_26, %c1_27, %c0_28, %c0_29] : memref<2x2x32x32xf32, #tpu.memory_space<vmem>>, vector<1x1x32x32xf32>
    %22 = vector.shape_cast %21 : vector<1x1x32x32xf32> to vector<32x32xf32>
    %cst_30 = arith.constant 0.000000e+00 : f32
    %23 = vector.broadcast %cst_30 : f32 to vector<8x32xf32>
    %c0_31 = arith.constant 0 : index
    %c0_32 = arith.constant 0 : index
    %24 = vector.load %arg9[%c0_31, %c0_32] : memref<64x32xf32, #tpu.memory_space<vmem>>, vector<8x32xf32>
    %cst_33 = arith.constant dense<0.000000e+00> : vector<8x32xf32>
    %25 = tpu.matmul %23, %20, %cst_33 {dimension_numbers = #tpu.dot_dimension_numbers<[1], [0], [0], [1], [0, 0, 1, 1], [], []>} : vector<8x32xf32>, vector<32x32xf32>, vector<8x32xf32> -> vector<8x32xf32>
    %26 = arith.addf %24, %25 : vector<8x32xf32>
    %c56 = arith.constant 56 : index
    %c0_34 = arith.constant 0 : index
    %27 = vector.load %arg10[%c56, %c0_34] : memref<64x32xf32, #tpu.memory_space<vmem>>, vector<8x32xf32>
    %cst_35 = arith.constant dense<0.000000e+00> : vector<8x32xf32>
    %28 = tpu.matmul %23, %22, %cst_35 {dimension_numbers = #tpu.dot_dimension_numbers<[1], [0], [0], [1], [0, 0, 1, 1], [], []>} : vector<8x32xf32>, vector<32x32xf32>, vector<8x32xf32> -> vector<8x32xf32>
    %29 = arith.addf %27, %28 : vector<8x32xf32>
    %c0_i32 = arith.constant 0 : i32
    %30 = vector.broadcast %c0_i32 : i32 to vector<8x1xi32>
    %31 = arith.cmpi sgt, %0, %30 : vector<8x1xi32>
    %32 = math.tanh %26 : vector<8x32xf32>
    %33 = vector.shape_cast %31 : vector<8x1xi1> to vector<8x1xi1>
    %34 = vector.broadcast %33 : vector<8x1xi1> to vector<8x32xi1>
    %35 = arith.select %34, %32, %23 : vector<8x32xi1>, vector<8x32xf32>
    %c7_i32 = arith.constant 7 : i32
    %36 = vector.broadcast %c7_i32 : i32 to vector<8x1xi32>
    %37 = arith.cmpi sgt, %0, %36 : vector<8x1xi32>
    %38 = math.tanh %29 : vector<8x32xf32>
    %39 = vector.shape_cast %37 : vector<8x1xi1> to vector<8x1xi1>
    %40 = vector.broadcast %39 : vector<8x1xi1> to vector<8x32xi1>
    %41 = arith.select %40, %38, %23 : vector<8x32xi1>, vector<8x32xf32>
    %c0_36 = arith.constant 0 : index
    %c0_37 = arith.constant 0 : index
    %42 = vector.load %arg11[%c0_36, %c0_37] : memref<64x32xf32, #tpu.memory_space<vmem>>, vector<8x32xf32>
    tpu.vector_store %arg11[%c0_36, %c0_37], %35 {strides = array<i32>} : memref<64x32xf32, #tpu.memory_space<vmem>>, vector<8x32xf32>,
    %c56_38 = arith.constant 56 : index
    %c0_39 = arith.constant 0 : index
    %43 = vector.load %arg12[%c56_38, %c0_39] : memref<64x32xf32, #tpu.memory_space<vmem>>, vector<8x32xf32>
    tpu.vector_store %arg12[%c56_38, %c0_39], %41 {strides = array<i32>} : memref<64x32xf32, #tpu.memory_space<vmem>>, vector<8x32xf32>,
    %c8 = arith.constant 8 : index
    %c0_40 = arith.constant 0 : index
    %44 = vector.load %arg9[%c8, %c0_40] : memref<64x32xf32, #tpu.memory_space<vmem>>, vector<8x32xf32>
    %cst_41 = arith.constant dense<0.000000e+00> : vector<8x32xf32>
    %45 = tpu.matmul %35, %20, %cst_41 {dimension_numbers = #tpu.dot_dimension_numbers<[1], [0], [0], [1], [0, 0, 1, 1], [], []>} : vector<8x32xf32>, vector<32x32xf32>, vector<8x32xf32> -> vector<8x32xf32>
    %46 = arith.addf %44, %45 : vector<8x32xf32>
    %c48 = arith.constant 48 : index
    %c0_42 = arith.constant 0 : index
    %47 = vector.load %arg10[%c48, %c0_42] : memref<64x32xf32, #tpu.memory_space<vmem>>, vector<8x32xf32>
    %cst_43 = arith.constant dense<0.000000e+00> : vector<8x32xf32>
    %48 = tpu.matmul %41, %22, %cst_43 {dimension_numbers = #tpu.dot_dimension_numbers<[1], [0], [0], [1], [0, 0, 1, 1], [], []>} : vector<8x32xf32>, vector<32x32xf32>, vector<8x32xf32> -> vector<8x32xf32>
    %49 = arith.addf %47, %48 : vector<8x32xf32>
    %c1_i32 = arith.constant 1 : i32
    %50 = vector.broadcast %c1_i32 : i32 to vector<8x1xi32>
    %51 = arith.cmpi sgt, %0, %50 : vector<8x1xi32>
    %52 = math.tanh %46 : vector<8x32xf32>
    %53 = vector.shape_cast %51 : vector<8x1xi1> to vector<8x1xi1>
    %54 = vector.broadcast %53 : vector<8x1xi1> to vector<8x32xi1>
    %55 = arith.select %54, %52, %35 : vector<8x32xi1>, vector<8x32xf32>
    %c6_i32 = arith.constant 6 : i32
    %56 = vector.broadcast %c6_i32 : i32 to vector<8x1xi32>
    %57 = arith.cmpi sgt, %0, %56 : vector<8x1xi32>
    %58 = math.tanh %49 : vector<8x32xf32>
    %59 = vector.shape_cast %57 : vector<8x1xi1> to vector<8x1xi1>
    %60 = vector.broadcast %59 : vector<8x1xi1> to vector<8x32xi1>
    %61 = arith.select %60, %58, %41 : vector<8x32xi1>, vector<8x32xf32>
    %c8_44 = arith.constant 8 : index
    %c0_45 = arith.constant 0 : index
    %62 = vector.load %arg11[%c8_44, %c0_45] : memref<64x32xf32, #tpu.memory_space<vmem>>, vector<8x32xf32>
    tpu.vector_store %arg11[%c8_44, %c0_45], %55 {strides = array<i32>} : memref<64x32xf32, #tpu.memory_space<vmem>>, vector<8x32xf32>,
    %c48_46 = arith.constant 48 : index
    %c0_47 = arith.constant 0 : index
    %63 = vector.load %arg12[%c48_46, %c0_47] : memref<64x32xf32, #tpu.memory_space<vmem>>, vector<8x32xf32>
    tpu.vector_store %arg12[%c48_46, %c0_47], %61 {strides = array<i32>} : memref<64x32xf32, #tpu.memory_space<vmem>>, vector<8x32xf32>,
    %c16 = arith.constant 16 : index
    %c0_48 = arith.constant 0 : index
    %64 = vector.load %arg9[%c16, %c0_48] : memref<64x32xf32, #tpu.memory_space<vmem>>, vector<8x32xf32>
    %cst_49 = arith.constant dense<0.000000e+00> : vector<8x32xf32>
    %65 = tpu.matmul %55, %20, %cst_49 {dimension_numbers = #tpu.dot_dimension_numbers<[1], [0], [0], [1], [0, 0, 1, 1], [], []>} : vector<8x32xf32>, vector<32x32xf32>, vector<8x32xf32> -> vector<8x32xf32>
    %66 = arith.addf %64, %65 : vector<8x32xf32>
    %c40 = arith.constant 40 : index
    %c0_50 = arith.constant 0 : index
    %67 = vector.load %arg10[%c40, %c0_50] : memref<64x32xf32, #tpu.memory_space<vmem>>, vector<8x32xf32>
    %cst_51 = arith.constant dense<0.000000e+00> : vector<8x32xf32>
    %68 = tpu.matmul %61, %22, %cst_51 {dimension_numbers = #tpu.dot_dimension_numbers<[1], [0], [0], [1], [0, 0, 1, 1], [], []>} : vector<8x32xf32>, vector<32x32xf32>, vector<8x32xf32> -> vector<8x32xf32>
    %69 = arith.addf %67, %68 : vector<8x32xf32>
    %c2_i32 = arith.constant 2 : i32
    %70 = vector.broadcast %c2_i32 : i32 to vector<8x1xi32>
    %71 = arith.cmpi sgt, %0, %70 : vector<8x1xi32>
    %72 = math.tanh %66 : vector<8x32xf32>
    %73 = vector.shape_cast %71 : vector<8x1xi1> to vector<8x1xi1>
    %74 = vector.broadcast %73 : vector<8x1xi1> to vector<8x32xi1>
    %75 = arith.select %74, %72, %55 : vector<8x32xi1>, vector<8x32xf32>
    %c5_i32 = arith.constant 5 : i32
    %76 = vector.broadcast %c5_i32 : i32 to vector<8x1xi32>
    %77 = arith.cmpi sgt, %0, %76 : vector<8x1xi32>
    %78 = math.tanh %69 : vector<8x32xf32>
    %79 = vector.shape_cast %77 : vector<8x1xi1> to vector<8x1xi1>
    %80 = vector.broadcast %79 : vector<8x1xi1> to vector<8x32xi1>
    %81 = arith.select %80, %78, %61 : vector<8x32xi1>, vector<8x32xf32>
    %c16_52 = arith.constant 16 : index
    %c0_53 = arith.constant 0 : index
    %82 = vector.load %arg11[%c16_52, %c0_53] : memref<64x32xf32, #tpu.memory_space<vmem>>, vector<8x32xf32>
    tpu.vector_store %arg11[%c16_52, %c0_53], %75 {strides = array<i32>} : memref<64x32xf32, #tpu.memory_space<vmem>>, vector<8x32xf32>,
    %c40_54 = arith.constant 40 : index
    %c0_55 = arith.constant 0 : index
    %83 = vector.load %arg12[%c40_54, %c0_55] : memref<64x32xf32, #tpu.memory_space<vmem>>, vector<8x32xf32>
    tpu.vector_store %arg12[%c40_54, %c0_55], %81 {strides = array<i32>} : memref<64x32xf32, #tpu.memory_space<vmem>>, vector<8x32xf32>,
    %c24 = arith.constant 24 : index
    %c0_56 = arith.constant 0 : index
    %84 = vector.load %arg9[%c24, %c0_56] : memref<64x32xf32, #tpu.memory_space<vmem>>, vector<8x32xf32>
    %cst_57 = arith.constant dense<0.000000e+00> : vector<8x32xf32>
    %85 = tpu.matmul %75, %20, %cst_57 {dimension_numbers = #tpu.dot_dimension_numbers<[1], [0], [0], [1], [0, 0, 1, 1], [], []>} : vector<8x32xf32>, vector<32x32xf32>, vector<8x32xf32> -> vector<8x32xf32>
    %86 = arith.addf %84, %85 : vector<8x32xf32>
    %c32 = arith.constant 32 : index
    %c0_58 = arith.constant 0 : index
    %87 = vector.load %arg10[%c32, %c0_58] : memref<64x32xf32, #tpu.memory_space<vmem>>, vector<8x32xf32>
    %cst_59 = arith.constant dense<0.000000e+00> : vector<8x32xf32>
    %88 = tpu.matmul %81, %22, %cst_59 {dimension_numbers = #tpu.dot_dimension_numbers<[1], [0], [0], [1], [0, 0, 1, 1], [], []>} : vector<8x32xf32>, vector<32x32xf32>, vector<8x32xf32> -> vector<8x32xf32>
    %89 = arith.addf %87, %88 : vector<8x32xf32>
    %c3_i32 = arith.constant 3 : i32
    %90 = vector.broadcast %c3_i32 : i32 to vector<8x1xi32>
    %91 = arith.cmpi sgt, %0, %90 : vector<8x1xi32>
    %92 = math.tanh %86 : vector<8x32xf32>
    %93 = vector.shape_cast %91 : vector<8x1xi1> to vector<8x1xi1>
    %94 = vector.broadcast %93 : vector<8x1xi1> to vector<8x32xi1>
    %95 = arith.select %94, %92, %75 : vector<8x32xi1>, vector<8x32xf32>
    %c4_i32 = arith.constant 4 : i32
    %96 = vector.broadcast %c4_i32 : i32 to vector<8x1xi32>
    %97 = arith.cmpi sgt, %0, %96 : vector<8x1xi32>
    %98 = math.tanh %89 : vector<8x32xf32>
    %99 = vector.shape_cast %97 : vector<8x1xi1> to vector<8x1xi1>
    %100 = vector.broadcast %99 : vector<8x1xi1> to vector<8x32xi1>
    %101 = arith.select %100, %98, %81 : vector<8x32xi1>, vector<8x32xf32>
    %c24_60 = arith.constant 24 : index
    %c0_61 = arith.constant 0 : index
    %102 = vector.load %arg11[%c24_60, %c0_61] : memref<64x32xf32, #tpu.memory_space<vmem>>, vector<8x32xf32>
    tpu.vector_store %arg11[%c24_60, %c0_61], %95 {strides = array<i32>} : memref<64x32xf32, #tpu.memory_space<vmem>>, vector<8x32xf32>,
    %c32_62 = arith.constant 32 : index
    %c0_63 = arith.constant 0 : index
    %103 = vector.load %arg12[%c32_62, %c0_63] : memref<64x32xf32, #tpu.memory_space<vmem>>, vector<8x32xf32>
    tpu.vector_store %arg12[%c32_62, %c0_63], %101 {strides = array<i32>} : memref<64x32xf32, #tpu.memory_space<vmem>>, vector<8x32xf32>,
    %c32_64 = arith.constant 32 : index
    %c0_65 = arith.constant 0 : index
    %104 = vector.load %arg9[%c32_64, %c0_65] : memref<64x32xf32, #tpu.memory_space<vmem>>, vector<8x32xf32>
    %cst_66 = arith.constant dense<0.000000e+00> : vector<8x32xf32>
    %105 = tpu.matmul %95, %20, %cst_66 {dimension_numbers = #tpu.dot_dimension_numbers<[1], [0], [0], [1], [0, 0, 1, 1], [], []>} : vector<8x32xf32>, vector<32x32xf32>, vector<8x32xf32> -> vector<8x32xf32>
    %106 = arith.addf %104, %105 : vector<8x32xf32>
    %c24_67 = arith.constant 24 : index
    %c0_68 = arith.constant 0 : index
    %107 = vector.load %arg10[%c24_67, %c0_68] : memref<64x32xf32, #tpu.memory_space<vmem>>, vector<8x32xf32>
    %cst_69 = arith.constant dense<0.000000e+00> : vector<8x32xf32>
    %108 = tpu.matmul %101, %22, %cst_69 {dimension_numbers = #tpu.dot_dimension_numbers<[1], [0], [0], [1], [0, 0, 1, 1], [], []>} : vector<8x32xf32>, vector<32x32xf32>, vector<8x32xf32> -> vector<8x32xf32>
    %109 = arith.addf %107, %108 : vector<8x32xf32>
    %c4_i32_70 = arith.constant 4 : i32
    %110 = vector.broadcast %c4_i32_70 : i32 to vector<8x1xi32>
    %111 = arith.cmpi sgt, %0, %110 : vector<8x1xi32>
    %112 = math.tanh %106 : vector<8x32xf32>
    %113 = vector.shape_cast %111 : vector<8x1xi1> to vector<8x1xi1>
    %114 = vector.broadcast %113 : vector<8x1xi1> to vector<8x32xi1>
    %115 = arith.select %114, %112, %95 : vector<8x32xi1>, vector<8x32xf32>
    %c3_i32_71 = arith.constant 3 : i32
    %116 = vector.broadcast %c3_i32_71 : i32 to vector<8x1xi32>
    %117 = arith.cmpi sgt, %0, %116 : vector<8x1xi32>
    %118 = math.tanh %109 : vector<8x32xf32>
    %119 = vector.shape_cast %117 : vector<8x1xi1> to vector<8x1xi1>
    %120 = vector.broadcast %119 : vector<8x1xi1> to vector<8x32xi1>
    %121 = arith.select %120, %118, %101 : vector<8x32xi1>, vector<8x32xf32>
    %c32_72 = arith.constant 32 : index
    %c0_73 = arith.constant 0 : index
    %122 = vector.load %arg11[%c32_72, %c0_73] : memref<64x32xf32, #tpu.memory_space<vmem>>, vector<8x32xf32>
    tpu.vector_store %arg11[%c32_72, %c0_73], %115 {strides = array<i32>} : memref<64x32xf32, #tpu.memory_space<vmem>>, vector<8x32xf32>,
    %c24_74 = arith.constant 24 : index
    %c0_75 = arith.constant 0 : index
    %123 = vector.load %arg12[%c24_74, %c0_75] : memref<64x32xf32, #tpu.memory_space<vmem>>, vector<8x32xf32>
    tpu.vector_store %arg12[%c24_74, %c0_75], %121 {strides = array<i32>} : memref<64x32xf32, #tpu.memory_space<vmem>>, vector<8x32xf32>,
    %c40_76 = arith.constant 40 : index
    %c0_77 = arith.constant 0 : index
    %124 = vector.load %arg9[%c40_76, %c0_77] : memref<64x32xf32, #tpu.memory_space<vmem>>, vector<8x32xf32>
    %cst_78 = arith.constant dense<0.000000e+00> : vector<8x32xf32>
    %125 = tpu.matmul %115, %20, %cst_78 {dimension_numbers = #tpu.dot_dimension_numbers<[1], [0], [0], [1], [0, 0, 1, 1], [], []>} : vector<8x32xf32>, vector<32x32xf32>, vector<8x32xf32> -> vector<8x32xf32>
    %126 = arith.addf %124, %125 : vector<8x32xf32>
    %c16_79 = arith.constant 16 : index
    %c0_80 = arith.constant 0 : index
    %127 = vector.load %arg10[%c16_79, %c0_80] : memref<64x32xf32, #tpu.memory_space<vmem>>, vector<8x32xf32>
    %cst_81 = arith.constant dense<0.000000e+00> : vector<8x32xf32>
    %128 = tpu.matmul %121, %22, %cst_81 {dimension_numbers = #tpu.dot_dimension_numbers<[1], [0], [0], [1], [0, 0, 1, 1], [], []>} : vector<8x32xf32>, vector<32x32xf32>, vector<8x32xf32> -> vector<8x32xf32>
    %129 = arith.addf %127, %128 : vector<8x32xf32>
    %c5_i32_82 = arith.constant 5 : i32
    %130 = vector.broadcast %c5_i32_82 : i32 to vector<8x1xi32>
    %131 = arith.cmpi sgt, %0, %130 : vector<8x1xi32>
    %132 = math.tanh %126 : vector<8x32xf32>
    %133 = vector.shape_cast %131 : vector<8x1xi1> to vector<8x1xi1>
    %134 = vector.broadcast %133 : vector<8x1xi1> to vector<8x32xi1>
    %135 = arith.select %134, %132, %115 : vector<8x32xi1>, vector<8x32xf32>
    %c2_i32_83 = arith.constant 2 : i32
    %136 = vector.broadcast %c2_i32_83 : i32 to vector<8x1xi32>
    %137 = arith.cmpi sgt, %0, %136 : vector<8x1xi32>
    %138 = math.tanh %129 : vector<8x32xf32>
    %139 = vector.shape_cast %137 : vector<8x1xi1> to vector<8x1xi1>
    %140 = vector.broadcast %139 : vector<8x1xi1> to vector<8x32xi1>
    %141 = arith.select %140, %138, %121 : vector<8x32xi1>, vector<8x32xf32>
    %c40_84 = arith.constant 40 : index
    %c0_85 = arith.constant 0 : index
    %142 = vector.load %arg11[%c40_84, %c0_85] : memref<64x32xf32, #tpu.memory_space<vmem>>, vector<8x32xf32>
    tpu.vector_store %arg11[%c40_84, %c0_85], %135 {strides = array<i32>} : memref<64x32xf32, #tpu.memory_space<vmem>>, vector<8x32xf32>,
    %c16_86 = arith.constant 16 : index
    %c0_87 = arith.constant 0 : index
    %143 = vector.load %arg12[%c16_86, %c0_87] : memref<64x32xf32, #tpu.memory_space<vmem>>, vector<8x32xf32>
    tpu.vector_store %arg12[%c16_86, %c0_87], %141 {strides = array<i32>} : memref<64x32xf32, #tpu.memory_space<vmem>>, vector<8x32xf32>,
    %c48_88 = arith.constant 48 : index
    %c0_89 = arith.constant 0 : index
    %144 = vector.load %arg9[%c48_88, %c0_89] : memref<64x32xf32, #tpu.memory_space<vmem>>, vector<8x32xf32>
    %cst_90 = arith.constant dense<0.000000e+00> : vector<8x32xf32>
    %145 = tpu.matmul %135, %20, %cst_90 {dimension_numbers = #tpu.dot_dimension_numbers<[1], [0], [0], [1], [0, 0, 1, 1], [], []>} : vector<8x32xf32>, vector<32x32xf32>, vector<8x32xf32> -> vector<8x32xf32>
    %146 = arith.addf %144, %145 : vector<8x32xf32>
    %c8_91 = arith.constant 8 : index
    %c0_92 = arith.constant 0 : index
    %147 = vector.load %arg10[%c8_91, %c0_92] : memref<64x32xf32, #tpu.memory_space<vmem>>, vector<8x32xf32>
    %cst_93 = arith.constant dense<0.000000e+00> : vector<8x32xf32>
    %148 = tpu.matmul %141, %22, %cst_93 {dimension_numbers = #tpu.dot_dimension_numbers<[1], [0], [0], [1], [0, 0, 1, 1], [], []>} : vector<8x32xf32>, vector<32x32xf32>, vector<8x32xf32> -> vector<8x32xf32>
    %149 = arith.addf %147, %148 : vector<8x32xf32>
    %c6_i32_94 = arith.constant 6 : i32
    %150 = vector.broadcast %c6_i32_94 : i32 to vector<8x1xi32>
    %151 = arith.cmpi sgt, %0, %150 : vector<8x1xi32>
    %152 = math.tanh %146 : vector<8x32xf32>
    %153 = vector.shape_cast %151 : vector<8x1xi1> to vector<8x1xi1>
    %154 = vector.broadcast %153 : vector<8x1xi1> to vector<8x32xi1>
    %155 = arith.select %154, %152, %135 : vector<8x32xi1>, vector<8x32xf32>
    %c1_i32_95 = arith.constant 1 : i32
    %156 = vector.broadcast %c1_i32_95 : i32 to vector<8x1xi32>
    %157 = arith.cmpi sgt, %0, %156 : vector<8x1xi32>
    %158 = math.tanh %149 : vector<8x32xf32>
    %159 = vector.shape_cast %157 : vector<8x1xi1> to vector<8x1xi1>
    %160 = vector.broadcast %159 : vector<8x1xi1> to vector<8x32xi1>
    %161 = arith.select %160, %158, %141 : vector<8x32xi1>, vector<8x32xf32>
    %c48_96 = arith.constant 48 : index
    %c0_97 = arith.constant 0 : index
    %162 = vector.load %arg11[%c48_96, %c0_97] : memref<64x32xf32, #tpu.memory_space<vmem>>, vector<8x32xf32>
    tpu.vector_store %arg11[%c48_96, %c0_97], %155 {strides = array<i32>} : memref<64x32xf32, #tpu.memory_space<vmem>>, vector<8x32xf32>,
    %c8_98 = arith.constant 8 : index
    %c0_99 = arith.constant 0 : index
    %163 = vector.load %arg12[%c8_98, %c0_99] : memref<64x32xf32, #tpu.memory_space<vmem>>, vector<8x32xf32>
    tpu.vector_store %arg12[%c8_98, %c0_99], %161 {strides = array<i32>} : memref<64x32xf32, #tpu.memory_space<vmem>>, vector<8x32xf32>,
    %c56_100 = arith.constant 56 : index
    %c0_101 = arith.constant 0 : index
    %164 = vector.load %arg9[%c56_100, %c0_101] : memref<64x32xf32, #tpu.memory_space<vmem>>, vector<8x32xf32>
    %cst_102 = arith.constant dense<0.000000e+00> : vector<8x32xf32>
    %165 = tpu.matmul %155, %20, %cst_102 {dimension_numbers = #tpu.dot_dimension_numbers<[1], [0], [0], [1], [0, 0, 1, 1], [], []>} : vector<8x32xf32>, vector<32x32xf32>, vector<8x32xf32> -> vector<8x32xf32>
    %166 = arith.addf %164, %165 : vector<8x32xf32>
    %c0_103 = arith.constant 0 : index
    %c0_104 = arith.constant 0 : index
    %167 = vector.load %arg10[%c0_103, %c0_104] : memref<64x32xf32, #tpu.memory_space<vmem>>, vector<8x32xf32>
    %cst_105 = arith.constant dense<0.000000e+00> : vector<8x32xf32>
    %168 = tpu.matmul %161, %22, %cst_105 {dimension_numbers = #tpu.dot_dimension_numbers<[1], [0], [0], [1], [0, 0, 1, 1], [], []>} : vector<8x32xf32>, vector<32x32xf32>, vector<8x32xf32> -> vector<8x32xf32>
    %169 = arith.addf %167, %168 : vector<8x32xf32>
    %c7_i32_106 = arith.constant 7 : i32
    %170 = vector.broadcast %c7_i32_106 : i32 to vector<8x1xi32>
    %171 = arith.cmpi sgt, %0, %170 : vector<8x1xi32>
    %172 = math.tanh %166 : vector<8x32xf32>
    %173 = vector.shape_cast %171 : vector<8x1xi1> to vector<8x1xi1>
    %174 = vector.broadcast %173 : vector<8x1xi1> to vector<8x32xi1>
    %175 = arith.select %174, %172, %155 : vector<8x32xi1>, vector<8x32xf32>
    %c0_i32_107 = arith.constant 0 : i32
    %176 = vector.broadcast %c0_i32_107 : i32 to vector<8x1xi32>
    %177 = arith.cmpi sgt, %0, %176 : vector<8x1xi32>
    %178 = math.tanh %169 : vector<8x32xf32>
    %179 = vector.shape_cast %177 : vector<8x1xi1> to vector<8x1xi1>
    %180 = vector.broadcast %179 : vector<8x1xi1> to vector<8x32xi1>
    %181 = arith.select %180, %178, %161 : vector<8x32xi1>, vector<8x32xf32>
    %c56_108 = arith.constant 56 : index
    %c0_109 = arith.constant 0 : index
    %182 = vector.load %arg11[%c56_108, %c0_109] : memref<64x32xf32, #tpu.memory_space<vmem>>, vector<8x32xf32>
    tpu.vector_store %arg11[%c56_108, %c0_109], %175 {strides = array<i32>} : memref<64x32xf32, #tpu.memory_space<vmem>>, vector<8x32xf32>,
    %c0_110 = arith.constant 0 : index
    %c0_111 = arith.constant 0 : index
    %183 = vector.load %arg12[%c0_110, %c0_111] : memref<64x32xf32, #tpu.memory_space<vmem>>, vector<8x32xf32>
    tpu.vector_store %arg12[%c0_110, %c0_111], %181 {strides = array<i32>} : memref<64x32xf32, #tpu.memory_space<vmem>>, vector<8x32xf32>,
    %c0_112 = arith.constant 0 : index
    %c0_113 = arith.constant 0 : index
    %184 = vector.load %arg11[%c0_112, %c0_113] : memref<64x32xf32, #tpu.memory_space<vmem>>, vector<64x32xf32>
    %c0_114 = arith.constant 0 : index
    %c0_115 = arith.constant 0 : index
    %185 = vector.load %arg12[%c0_114, %c0_115] : memref<64x32xf32, #tpu.memory_space<vmem>>, vector<64x32xf32>
    %c0_116 = arith.constant 0 : index
    %c0_117 = arith.constant 0 : index
    %c0_118 = arith.constant 0 : index
    %c0_119 = arith.constant 0 : index
    %186 = vector.load %arg5[%c0_116, %c0_117, %c0_118, %c0_119] : memref<1x4x32x32xf32, #tpu.memory_space<vmem>>, vector<1x1x32x32xf32>
    %187 = vector.shape_cast %186 : vector<1x1x32x32xf32> to vector<32x32xf32>
    %cst_120 = arith.constant dense<0.000000e+00> : vector<64x32xf32>
    %188 = tpu.matmul %184, %187, %cst_120 {dimension_numbers = #tpu.dot_dimension_numbers<[1], [0], [0], [1], [0, 0, 1, 1], [], []>} : vector<64x32xf32>, vector<32x32xf32>, vector<64x32xf32> -> vector<64x32xf32>
    %c0_121 = arith.constant 0 : index
    %c2 = arith.constant 2 : index
    %c0_122 = arith.constant 0 : index
    %c0_123 = arith.constant 0 : index
    %189 = vector.load %arg5[%c0_121, %c2, %c0_122, %c0_123] : memref<1x4x32x32xf32, #tpu.memory_space<vmem>>, vector<1x1x32x32xf32>
    %190 = vector.shape_cast %189 : vector<1x1x32x32xf32> to vector<32x32xf32>
    %cst_124 = arith.constant dense<0.000000e+00> : vector<64x32xf32>
    %191 = tpu.matmul %185, %190, %cst_124 {dimension_numbers = #tpu.dot_dimension_numbers<[1], [0], [0], [1], [0, 0, 1, 1], [], []>} : vector<64x32xf32>, vector<32x32xf32>, vector<64x32xf32> -> vector<64x32xf32>
    %192 = arith.addf %188, %191 : vector<64x32xf32>
    %c0_125 = arith.constant 0 : index
    %c1_126 = arith.constant 1 : index
    %c0_127 = arith.constant 0 : index
    %c0_128 = arith.constant 0 : index
    %193 = vector.load %arg5[%c0_125, %c1_126, %c0_127, %c0_128] : memref<1x4x32x32xf32, #tpu.memory_space<vmem>>, vector<1x1x32x32xf32>
    %194 = vector.shape_cast %193 : vector<1x1x32x32xf32> to vector<32x32xf32>
    %cst_129 = arith.constant dense<0.000000e+00> : vector<64x32xf32>
    %195 = tpu.matmul %184, %194, %cst_129 {dimension_numbers = #tpu.dot_dimension_numbers<[1], [0], [0], [1], [0, 0, 1, 1], [], []>} : vector<64x32xf32>, vector<32x32xf32>, vector<64x32xf32> -> vector<64x32xf32>
    %c0_130 = arith.constant 0 : index
    %c3 = arith.constant 3 : index
    %c0_131 = arith.constant 0 : index
    %c0_132 = arith.constant 0 : index
    %196 = vector.load %arg5[%c0_130, %c3, %c0_131, %c0_132] : memref<1x4x32x32xf32, #tpu.memory_space<vmem>>, vector<1x1x32x32xf32>
    %197 = vector.shape_cast %196 : vector<1x1x32x32xf32> to vector<32x32xf32>
    %cst_133 = arith.constant dense<0.000000e+00> : vector<64x32xf32>
    %198 = tpu.matmul %185, %197, %cst_133 {dimension_numbers = #tpu.dot_dimension_numbers<[1], [0], [0], [1], [0, 0, 1, 1], [], []>} : vector<64x32xf32>, vector<32x32xf32>, vector<64x32xf32> -> vector<64x32xf32>
    %199 = arith.addf %195, %198 : vector<64x32xf32>
    %c1_134 = arith.constant 1 : index
    %c0_135 = arith.constant 0 : index
    %c0_136 = arith.constant 0 : index
    %c0_137 = arith.constant 0 : index
    %200 = vector.load %arg7[%c1_134, %c0_135, %c0_136, %c0_137] : memref<2x2x1x32xf32, #tpu.memory_space<vmem>>, vector<1x1x1x32xf32>
    %201 = vector.shape_cast %200 : vector<1x1x1x32xf32> to vector<1x32xf32>
    %202 = vector.broadcast %201 : vector<1x32xf32> to vector<64x32xf32>
    %203 = arith.addf %192, %202 : vector<64x32xf32>
    %c0_138 = arith.constant 0 : index
    %c0_139 = arith.constant 0 : index
    %204 = vector.load %arg9[%c0_138, %c0_139] : memref<64x32xf32, #tpu.memory_space<vmem>>, vector<64x32xf32>
    tpu.vector_store %arg9[%c0_138, %c0_139], %203 {strides = array<i32>} : memref<64x32xf32, #tpu.memory_space<vmem>>, vector<64x32xf32>,
    %c1_140 = arith.constant 1 : index
    %c1_141 = arith.constant 1 : index
    %c0_142 = arith.constant 0 : index
    %c0_143 = arith.constant 0 : index
    %205 = vector.load %arg7[%c1_140, %c1_141, %c0_142, %c0_143] : memref<2x2x1x32xf32, #tpu.memory_space<vmem>>, vector<1x1x1x32xf32>
    %206 = vector.shape_cast %205 : vector<1x1x1x32xf32> to vector<1x32xf32>
    %207 = vector.broadcast %206 : vector<1x32xf32> to vector<64x32xf32>
    %208 = arith.addf %199, %207 : vector<64x32xf32>
    %c0_144 = arith.constant 0 : index
    %c0_145 = arith.constant 0 : index
    %209 = vector.load %arg10[%c0_144, %c0_145] : memref<64x32xf32, #tpu.memory_space<vmem>>, vector<64x32xf32>
    tpu.vector_store %arg10[%c0_144, %c0_145], %208 {strides = array<i32>} : memref<64x32xf32, #tpu.memory_space<vmem>>, vector<64x32xf32>,
    %c1_146 = arith.constant 1 : index
    %c0_147 = arith.constant 0 : index
    %c0_148 = arith.constant 0 : index
    %c0_149 = arith.constant 0 : index
    %210 = vector.load %arg6[%c1_146, %c0_147, %c0_148, %c0_149] : memref<2x2x32x32xf32, #tpu.memory_space<vmem>>, vector<1x1x32x32xf32>
    %211 = vector.shape_cast %210 : vector<1x1x32x32xf32> to vector<32x32xf32>
    %c1_150 = arith.constant 1 : index
    %c1_151 = arith.constant 1 : index
    %c0_152 = arith.constant 0 : index
    %c0_153 = arith.constant 0 : index
    %212 = vector.load %arg6[%c1_150, %c1_151, %c0_152, %c0_153] : memref<2x2x32x32xf32, #tpu.memory_space<vmem>>, vector<1x1x32x32xf32>
    %213 = vector.shape_cast %212 : vector<1x1x32x32xf32> to vector<32x32xf32>
    %cst_154 = arith.constant 0.000000e+00 : f32
    %214 = vector.broadcast %cst_154 : f32 to vector<8x32xf32>
    %c0_155 = arith.constant 0 : index
    %c0_156 = arith.constant 0 : index
    %215 = vector.load %arg9[%c0_155, %c0_156] : memref<64x32xf32, #tpu.memory_space<vmem>>, vector<8x32xf32>
    %cst_157 = arith.constant dense<0.000000e+00> : vector<8x32xf32>
    %216 = tpu.matmul %214, %211, %cst_157 {dimension_numbers = #tpu.dot_dimension_numbers<[1], [0], [0], [1], [0, 0, 1, 1], [], []>} : vector<8x32xf32>, vector<32x32xf32>, vector<8x32xf32> -> vector<8x32xf32>
    %217 = arith.addf %215, %216 : vector<8x32xf32>
    %c56_158 = arith.constant 56 : index
    %c0_159 = arith.constant 0 : index
    %218 = vector.load %arg10[%c56_158, %c0_159] : memref<64x32xf32, #tpu.memory_space<vmem>>, vector<8x32xf32>
    %cst_160 = arith.constant dense<0.000000e+00> : vector<8x32xf32>
    %219 = tpu.matmul %214, %213, %cst_160 {dimension_numbers = #tpu.dot_dimension_numbers<[1], [0], [0], [1], [0, 0, 1, 1], [], []>} : vector<8x32xf32>, vector<32x32xf32>, vector<8x32xf32> -> vector<8x32xf32>
    %220 = arith.addf %218, %219 : vector<8x32xf32>
    %c0_i32_161 = arith.constant 0 : i32
    %221 = vector.broadcast %c0_i32_161 : i32 to vector<8x1xi32>
    %222 = arith.cmpi sgt, %0, %221 : vector<8x1xi32>
    %223 = math.tanh %217 : vector<8x32xf32>
    %224 = vector.shape_cast %222 : vector<8x1xi1> to vector<8x1xi1>
    %225 = vector.broadcast %224 : vector<8x1xi1> to vector<8x32xi1>
    %226 = arith.select %225, %223, %214 : vector<8x32xi1>, vector<8x32xf32>
    %c7_i32_162 = arith.constant 7 : i32
    %227 = vector.broadcast %c7_i32_162 : i32 to vector<8x1xi32>
    %228 = arith.cmpi sgt, %0, %227 : vector<8x1xi32>
    %229 = math.tanh %220 : vector<8x32xf32>
    %230 = vector.shape_cast %228 : vector<8x1xi1> to vector<8x1xi1>
    %231 = vector.broadcast %230 : vector<8x1xi1> to vector<8x32xi1>
    %232 = arith.select %231, %229, %214 : vector<8x32xi1>, vector<8x32xf32>
    %c8_163 = arith.constant 8 : index
    %c0_164 = arith.constant 0 : index
    %233 = vector.load %arg9[%c8_163, %c0_164] : memref<64x32xf32, #tpu.memory_space<vmem>>, vector<8x32xf32>
    %cst_165 = arith.constant dense<0.000000e+00> : vector<8x32xf32>
    %234 = tpu.matmul %226, %211, %cst_165 {dimension_numbers = #tpu.dot_dimension_numbers<[1], [0], [0], [1], [0, 0, 1, 1], [], []>} : vector<8x32xf32>, vector<32x32xf32>, vector<8x32xf32> -> vector<8x32xf32>
    %235 = arith.addf %233, %234 : vector<8x32xf32>
    %c48_166 = arith.constant 48 : index
    %c0_167 = arith.constant 0 : index
    %236 = vector.load %arg10[%c48_166, %c0_167] : memref<64x32xf32, #tpu.memory_space<vmem>>, vector<8x32xf32>
    %cst_168 = arith.constant dense<0.000000e+00> : vector<8x32xf32>
    %237 = tpu.matmul %232, %213, %cst_168 {dimension_numbers = #tpu.dot_dimension_numbers<[1], [0], [0], [1], [0, 0, 1, 1], [], []>} : vector<8x32xf32>, vector<32x32xf32>, vector<8x32xf32> -> vector<8x32xf32>
    %238 = arith.addf %236, %237 : vector<8x32xf32>
    %c1_i32_169 = arith.constant 1 : i32
    %239 = vector.broadcast %c1_i32_169 : i32 to vector<8x1xi32>
    %240 = arith.cmpi sgt, %0, %239 : vector<8x1xi32>
    %241 = math.tanh %235 : vector<8x32xf32>
    %242 = vector.shape_cast %240 : vector<8x1xi1> to vector<8x1xi1>
    %243 = vector.broadcast %242 : vector<8x1xi1> to vector<8x32xi1>
    %244 = arith.select %243, %241, %226 : vector<8x32xi1>, vector<8x32xf32>
    %c6_i32_170 = arith.constant 6 : i32
    %245 = vector.broadcast %c6_i32_170 : i32 to vector<8x1xi32>
    %246 = arith.cmpi sgt, %0, %245 : vector<8x1xi32>
    %247 = math.tanh %238 : vector<8x32xf32>
    %248 = vector.shape_cast %246 : vector<8x1xi1> to vector<8x1xi1>
    %249 = vector.broadcast %248 : vector<8x1xi1> to vector<8x32xi1>
    %250 = arith.select %249, %247, %232 : vector<8x32xi1>, vector<8x32xf32>
    %c16_171 = arith.constant 16 : index
    %c0_172 = arith.constant 0 : index
    %251 = vector.load %arg9[%c16_171, %c0_172] : memref<64x32xf32, #tpu.memory_space<vmem>>, vector<8x32xf32>
    %cst_173 = arith.constant dense<0.000000e+00> : vector<8x32xf32>
    %252 = tpu.matmul %244, %211, %cst_173 {dimension_numbers = #tpu.dot_dimension_numbers<[1], [0], [0], [1], [0, 0, 1, 1], [], []>} : vector<8x32xf32>, vector<32x32xf32>, vector<8x32xf32> -> vector<8x32xf32>
    %253 = arith.addf %251, %252 : vector<8x32xf32>
    %c40_174 = arith.constant 40 : index
    %c0_175 = arith.constant 0 : index
    %254 = vector.load %arg10[%c40_174, %c0_175] : memref<64x32xf32, #tpu.memory_space<vmem>>, vector<8x32xf32>
    %cst_176 = arith.constant dense<0.000000e+00> : vector<8x32xf32>
    %255 = tpu.matmul %250, %213, %cst_176 {dimension_numbers = #tpu.dot_dimension_numbers<[1], [0], [0], [1], [0, 0, 1, 1], [], []>} : vector<8x32xf32>, vector<32x32xf32>, vector<8x32xf32> -> vector<8x32xf32>
    %256 = arith.addf %254, %255 : vector<8x32xf32>
    %c2_i32_177 = arith.constant 2 : i32
    %257 = vector.broadcast %c2_i32_177 : i32 to vector<8x1xi32>
    %258 = arith.cmpi sgt, %0, %257 : vector<8x1xi32>
    %259 = math.tanh %253 : vector<8x32xf32>
    %260 = vector.shape_cast %258 : vector<8x1xi1> to vector<8x1xi1>
    %261 = vector.broadcast %260 : vector<8x1xi1> to vector<8x32xi1>
    %262 = arith.select %261, %259, %244 : vector<8x32xi1>, vector<8x32xf32>
    %c5_i32_178 = arith.constant 5 : i32
    %263 = vector.broadcast %c5_i32_178 : i32 to vector<8x1xi32>
    %264 = arith.cmpi sgt, %0, %263 : vector<8x1xi32>
    %265 = math.tanh %256 : vector<8x32xf32>
    %266 = vector.shape_cast %264 : vector<8x1xi1> to vector<8x1xi1>
    %267 = vector.broadcast %266 : vector<8x1xi1> to vector<8x32xi1>
    %268 = arith.select %267, %265, %250 : vector<8x32xi1>, vector<8x32xf32>
    %c24_179 = arith.constant 24 : index
    %c0_180 = arith.constant 0 : index
    %269 = vector.load %arg9[%c24_179, %c0_180] : memref<64x32xf32, #tpu.memory_space<vmem>>, vector<8x32xf32>
    %cst_181 = arith.constant dense<0.000000e+00> : vector<8x32xf32>
    %270 = tpu.matmul %262, %211, %cst_181 {dimension_numbers = #tpu.dot_dimension_numbers<[1], [0], [0], [1], [0, 0, 1, 1], [], []>} : vector<8x32xf32>, vector<32x32xf32>, vector<8x32xf32> -> vector<8x32xf32>
    %271 = arith.addf %269, %270 : vector<8x32xf32>
    %c32_182 = arith.constant 32 : index
    %c0_183 = arith.constant 0 : index
    %272 = vector.load %arg10[%c32_182, %c0_183] : memref<64x32xf32, #tpu.memory_space<vmem>>, vector<8x32xf32>
    %cst_184 = arith.constant dense<0.000000e+00> : vector<8x32xf32>
    %273 = tpu.matmul %268, %213, %cst_184 {dimension_numbers = #tpu.dot_dimension_numbers<[1], [0], [0], [1], [0, 0, 1, 1], [], []>} : vector<8x32xf32>, vector<32x32xf32>, vector<8x32xf32> -> vector<8x32xf32>
    %274 = arith.addf %272, %273 : vector<8x32xf32>
    %c3_i32_185 = arith.constant 3 : i32
    %275 = vector.broadcast %c3_i32_185 : i32 to vector<8x1xi32>
    %276 = arith.cmpi sgt, %0, %275 : vector<8x1xi32>
    %277 = math.tanh %271 : vector<8x32xf32>
    %278 = vector.shape_cast %276 : vector<8x1xi1> to vector<8x1xi1>
    %279 = vector.broadcast %278 : vector<8x1xi1> to vector<8x32xi1>
    %280 = arith.select %279, %277, %262 : vector<8x32xi1>, vector<8x32xf32>
    %c4_i32_186 = arith.constant 4 : i32
    %281 = vector.broadcast %c4_i32_186 : i32 to vector<8x1xi32>
    %282 = arith.cmpi sgt, %0, %281 : vector<8x1xi32>
    %283 = math.tanh %274 : vector<8x32xf32>
    %284 = vector.shape_cast %282 : vector<8x1xi1> to vector<8x1xi1>
    %285 = vector.broadcast %284 : vector<8x1xi1> to vector<8x32xi1>
    %286 = arith.select %285, %283, %268 : vector<8x32xi1>, vector<8x32xf32>
    %c32_187 = arith.constant 32 : index
    %c0_188 = arith.constant 0 : index
    %287 = vector.load %arg9[%c32_187, %c0_188] : memref<64x32xf32, #tpu.memory_space<vmem>>, vector<8x32xf32>
    %cst_189 = arith.constant dense<0.000000e+00> : vector<8x32xf32>
    %288 = tpu.matmul %280, %211, %cst_189 {dimension_numbers = #tpu.dot_dimension_numbers<[1], [0], [0], [1], [0, 0, 1, 1], [], []>} : vector<8x32xf32>, vector<32x32xf32>, vector<8x32xf32> -> vector<8x32xf32>
    %289 = arith.addf %287, %288 : vector<8x32xf32>
    %c24_190 = arith.constant 24 : index
    %c0_191 = arith.constant 0 : index
    %290 = vector.load %arg10[%c24_190, %c0_191] : memref<64x32xf32, #tpu.memory_space<vmem>>, vector<8x32xf32>
    %cst_192 = arith.constant dense<0.000000e+00> : vector<8x32xf32>
    %291 = tpu.matmul %286, %213, %cst_192 {dimension_numbers = #tpu.dot_dimension_numbers<[1], [0], [0], [1], [0, 0, 1, 1], [], []>} : vector<8x32xf32>, vector<32x32xf32>, vector<8x32xf32> -> vector<8x32xf32>
    %292 = arith.addf %290, %291 : vector<8x32xf32>
    %c4_i32_193 = arith.constant 4 : i32
    %293 = vector.broadcast %c4_i32_193 : i32 to vector<8x1xi32>
    %294 = arith.cmpi sgt, %0, %293 : vector<8x1xi32>
    %295 = math.tanh %289 : vector<8x32xf32>
    %296 = vector.shape_cast %294 : vector<8x1xi1> to vector<8x1xi1>
    %297 = vector.broadcast %296 : vector<8x1xi1> to vector<8x32xi1>
    %298 = arith.select %297, %295, %280 : vector<8x32xi1>, vector<8x32xf32>
    %c3_i32_194 = arith.constant 3 : i32
    %299 = vector.broadcast %c3_i32_194 : i32 to vector<8x1xi32>
    %300 = arith.cmpi sgt, %0, %299 : vector<8x1xi32>
    %301 = math.tanh %292 : vector<8x32xf32>
    %302 = vector.shape_cast %300 : vector<8x1xi1> to vector<8x1xi1>
    %303 = vector.broadcast %302 : vector<8x1xi1> to vector<8x32xi1>
    %304 = arith.select %303, %301, %286 : vector<8x32xi1>, vector<8x32xf32>
    %c40_195 = arith.constant 40 : index
    %c0_196 = arith.constant 0 : index
    %305 = vector.load %arg9[%c40_195, %c0_196] : memref<64x32xf32, #tpu.memory_space<vmem>>, vector<8x32xf32>
    %cst_197 = arith.constant dense<0.000000e+00> : vector<8x32xf32>
    %306 = tpu.matmul %298, %211, %cst_197 {dimension_numbers = #tpu.dot_dimension_numbers<[1], [0], [0], [1], [0, 0, 1, 1], [], []>} : vector<8x32xf32>, vector<32x32xf32>, vector<8x32xf32> -> vector<8x32xf32>
    %307 = arith.addf %305, %306 : vector<8x32xf32>
    %c16_198 = arith.constant 16 : index
    %c0_199 = arith.constant 0 : index
    %308 = vector.load %arg10[%c16_198, %c0_199] : memref<64x32xf32, #tpu.memory_space<vmem>>, vector<8x32xf32>
    %cst_200 = arith.constant dense<0.000000e+00> : vector<8x32xf32>
    %309 = tpu.matmul %304, %213, %cst_200 {dimension_numbers = #tpu.dot_dimension_numbers<[1], [0], [0], [1], [0, 0, 1, 1], [], []>} : vector<8x32xf32>, vector<32x32xf32>, vector<8x32xf32> -> vector<8x32xf32>
    %310 = arith.addf %308, %309 : vector<8x32xf32>
    %c5_i32_201 = arith.constant 5 : i32
    %311 = vector.broadcast %c5_i32_201 : i32 to vector<8x1xi32>
    %312 = arith.cmpi sgt, %0, %311 : vector<8x1xi32>
    %313 = math.tanh %307 : vector<8x32xf32>
    %314 = vector.shape_cast %312 : vector<8x1xi1> to vector<8x1xi1>
    %315 = vector.broadcast %314 : vector<8x1xi1> to vector<8x32xi1>
    %316 = arith.select %315, %313, %298 : vector<8x32xi1>, vector<8x32xf32>
    %c2_i32_202 = arith.constant 2 : i32
    %317 = vector.broadcast %c2_i32_202 : i32 to vector<8x1xi32>
    %318 = arith.cmpi sgt, %0, %317 : vector<8x1xi32>
    %319 = math.tanh %310 : vector<8x32xf32>
    %320 = vector.shape_cast %318 : vector<8x1xi1> to vector<8x1xi1>
    %321 = vector.broadcast %320 : vector<8x1xi1> to vector<8x32xi1>
    %322 = arith.select %321, %319, %304 : vector<8x32xi1>, vector<8x32xf32>
    %c48_203 = arith.constant 48 : index
    %c0_204 = arith.constant 0 : index
    %323 = vector.load %arg9[%c48_203, %c0_204] : memref<64x32xf32, #tpu.memory_space<vmem>>, vector<8x32xf32>
    %cst_205 = arith.constant dense<0.000000e+00> : vector<8x32xf32>
    %324 = tpu.matmul %316, %211, %cst_205 {dimension_numbers = #tpu.dot_dimension_numbers<[1], [0], [0], [1], [0, 0, 1, 1], [], []>} : vector<8x32xf32>, vector<32x32xf32>, vector<8x32xf32> -> vector<8x32xf32>
    %325 = arith.addf %323, %324 : vector<8x32xf32>
    %c8_206 = arith.constant 8 : index
    %c0_207 = arith.constant 0 : index
    %326 = vector.load %arg10[%c8_206, %c0_207] : memref<64x32xf32, #tpu.memory_space<vmem>>, vector<8x32xf32>
    %cst_208 = arith.constant dense<0.000000e+00> : vector<8x32xf32>
    %327 = tpu.matmul %322, %213, %cst_208 {dimension_numbers = #tpu.dot_dimension_numbers<[1], [0], [0], [1], [0, 0, 1, 1], [], []>} : vector<8x32xf32>, vector<32x32xf32>, vector<8x32xf32> -> vector<8x32xf32>
    %328 = arith.addf %326, %327 : vector<8x32xf32>
    %c6_i32_209 = arith.constant 6 : i32
    %329 = vector.broadcast %c6_i32_209 : i32 to vector<8x1xi32>
    %330 = arith.cmpi sgt, %0, %329 : vector<8x1xi32>
    %331 = math.tanh %325 : vector<8x32xf32>
    %332 = vector.shape_cast %330 : vector<8x1xi1> to vector<8x1xi1>
    %333 = vector.broadcast %332 : vector<8x1xi1> to vector<8x32xi1>
    %334 = arith.select %333, %331, %316 : vector<8x32xi1>, vector<8x32xf32>
    %c1_i32_210 = arith.constant 1 : i32
    %335 = vector.broadcast %c1_i32_210 : i32 to vector<8x1xi32>
    %336 = arith.cmpi sgt, %0, %335 : vector<8x1xi32>
    %337 = math.tanh %328 : vector<8x32xf32>
    %338 = vector.shape_cast %336 : vector<8x1xi1> to vector<8x1xi1>
    %339 = vector.broadcast %338 : vector<8x1xi1> to vector<8x32xi1>
    %340 = arith.select %339, %337, %322 : vector<8x32xi1>, vector<8x32xf32>
    %c56_211 = arith.constant 56 : index
    %c0_212 = arith.constant 0 : index
    %341 = vector.load %arg9[%c56_211, %c0_212] : memref<64x32xf32, #tpu.memory_space<vmem>>, vector<8x32xf32>
    %cst_213 = arith.constant dense<0.000000e+00> : vector<8x32xf32>
    %342 = tpu.matmul %334, %211, %cst_213 {dimension_numbers = #tpu.dot_dimension_numbers<[1], [0], [0], [1], [0, 0, 1, 1], [], []>} : vector<8x32xf32>, vector<32x32xf32>, vector<8x32xf32> -> vector<8x32xf32>
    %343 = arith.addf %341, %342 : vector<8x32xf32>
    %c0_214 = arith.constant 0 : index
    %c0_215 = arith.constant 0 : index
    %344 = vector.load %arg10[%c0_214, %c0_215] : memref<64x32xf32, #tpu.memory_space<vmem>>, vector<8x32xf32>
    %cst_216 = arith.constant dense<0.000000e+00> : vector<8x32xf32>
    %345 = tpu.matmul %340, %213, %cst_216 {dimension_numbers = #tpu.dot_dimension_numbers<[1], [0], [0], [1], [0, 0, 1, 1], [], []>} : vector<8x32xf32>, vector<32x32xf32>, vector<8x32xf32> -> vector<8x32xf32>
    %346 = arith.addf %344, %345 : vector<8x32xf32>
    %c7_i32_217 = arith.constant 7 : i32
    %347 = vector.broadcast %c7_i32_217 : i32 to vector<8x1xi32>
    %348 = arith.cmpi sgt, %0, %347 : vector<8x1xi32>
    %349 = math.tanh %343 : vector<8x32xf32>
    %350 = vector.shape_cast %348 : vector<8x1xi1> to vector<8x1xi1>
    %351 = vector.broadcast %350 : vector<8x1xi1> to vector<8x32xi1>
    %352 = arith.select %351, %349, %334 : vector<8x32xi1>, vector<8x32xf32>
    %c0_i32_218 = arith.constant 0 : i32
    %353 = vector.broadcast %c0_i32_218 : i32 to vector<8x1xi32>
    %354 = arith.cmpi sgt, %0, %353 : vector<8x1xi32>
    %355 = math.tanh %346 : vector<8x32xf32>
    %356 = vector.shape_cast %354 : vector<8x1xi1> to vector<8x1xi1>
    %357 = vector.broadcast %356 : vector<8x1xi1> to vector<8x32xi1>
    %358 = arith.select %357, %355, %340 : vector<8x32xi1>, vector<8x32xf32>
    %c0_219 = arith.constant 0 : index
    %c0_220 = arith.constant 0 : index
    %359 = vector.load %arg8[%c0_219, %c0_220] : memref<8x64xf32, #tpu.memory_space<vmem>>, vector<8x32xf32>
    tpu.vector_store %arg8[%c0_219, %c0_220], %352 {strides = array<i32>} : memref<8x64xf32, #tpu.memory_space<vmem>>, vector<8x32xf32>,
    %c0_221 = arith.constant 0 : index
    %c32_222 = arith.constant 32 : index
    %360 = vector.load %arg8[%c0_221, %c32_222] : memref<8x64xf32, #tpu.memory_space<vmem>>, vector<8x32xf32>
    tpu.vector_store %arg8[%c0_221, %c32_222], %358 {strides = array<i32>} : memref<8x64xf32, #tpu.memory_space<vmem>>, vector<8x32xf32>,
    return
  }
  func.func @transform_0(%arg0: i32, %arg1: memref<1xi32, #tpu.memory_space<smem>>) -> (i32, i32, i32) {
    %c0_i32 = arith.constant 0 : i32
    %c0_i32_0 = arith.constant 0 : i32
    %c0_i32_1 = arith.constant 0 : i32
    return %arg0, %c0_i32, %c0_i32_0 : i32, i32, i32
  }
  func.func @transform_1(%arg0: i32, %arg1: memref<1xi32, #tpu.memory_space<smem>>) -> (i32, i32) {
    %c0_i32 = arith.constant 0 : i32
    %c0_i32_0 = arith.constant 0 : i32
    return %arg0, %c0_i32 : i32, i32
  }
  func.func @transform_2(%arg0: i32, %arg1: memref<1xi32, #tpu.memory_space<smem>>) -> (i32, i32, i32) {
    %c0_i32 = arith.constant 0 : i32
    %c0_i32_0 = arith.constant 0 : i32
    %c0_i32_1 = arith.constant 0 : i32
    %c0_i32_2 = arith.constant 0 : i32
    return %c0_i32, %c0_i32_0, %c0_i32_1 : i32, i32, i32
  }
  func.func @transform_3(%arg0: i32, %arg1: memref<1xi32, #tpu.memory_space<smem>>) -> (i32, i32, i32, i32) {
    %c0_i32 = arith.constant 0 : i32
    %c0_i32_0 = arith.constant 0 : i32
    %c0_i32_1 = arith.constant 0 : i32
    %c0_i32_2 = arith.constant 0 : i32
    %c0_i32_3 = arith.constant 0 : i32
    return %c0_i32, %c0_i32_0, %c0_i32_1, %c0_i32_2 : i32, i32, i32, i32
  }
  func.func @transform_4(%arg0: i32, %arg1: memref<1xi32, #tpu.memory_space<smem>>) -> (i32, i32, i32, i32) {
    %c0_i32 = arith.constant 0 : i32
    %c0_i32_0 = arith.constant 0 : i32
    %c0_i32_1 = arith.constant 0 : i32
    %c0_i32_2 = arith.constant 0 : i32
    %c0_i32_3 = arith.constant 0 : i32
    return %c0_i32, %c0_i32_0, %c0_i32_1, %c0_i32_2 : i32, i32, i32, i32
  }
  func.func @transform_5(%arg0: i32, %arg1: memref<1xi32, #tpu.memory_space<smem>>) -> (i32, i32, i32, i32) {
    %c0_i32 = arith.constant 0 : i32
    %c0_i32_0 = arith.constant 0 : i32
    %c0_i32_1 = arith.constant 0 : i32
    %c0_i32_2 = arith.constant 0 : i32
    %c0_i32_3 = arith.constant 0 : i32
    return %c0_i32, %c0_i32_0, %c0_i32_1, %c0_i32_2 : i32, i32, i32, i32
  }
  func.func @transform_6(%arg0: i32, %arg1: memref<1xi32, #tpu.memory_space<smem>>) -> (i32, i32) {
    %c0_i32 = arith.constant 0 : i32
    %c0_i32_0 = arith.constant 0 : i32
    return %arg0, %c0_i32 : i32, i32
  }
}

</mosaic_0001>

<llo_original>
// kernel: tpu_custom_call.1
$region0: #{tpu_custom_call.1}
  #allocation0 [shape = 'u32[]', space=smem, size = 0x4, offset = 0x4, fixed_abs, tag = 'smem constant byte address 0x4 - core index']
  #allocation1 [shape = 'u32[144,128]{1,0:T(1,128)}', space=vmem, size = 0x12000, scoped, tag = 'internal scratch']
  #allocation2 [shape = 'f32[64,32]{1,0:T(8,128)}', space=vmem, size = 0x8000, scoped, tag = 'scratch operand']
  #allocation3 [shape = 'f32[64,32]{1,0:T(8,128)}', space=vmem, size = 0x8000, scoped, tag = 'scratch operand']
  #allocation4 [shape = 'f32[64,32]{1,0:T(8,128)}', space=vmem, size = 0x8000, scoped, tag = 'scratch operand']
  #allocation5 [shape = 'f32[64,32]{1,0:T(8,128)}', space=vmem, size = 0x8000, scoped, tag = 'scratch operand']
  #allocation6 [shape = 's32[1]{0}', space=sflag, size = 0x4, scoped, tag = 'scoped memory for tpu_custom_call.1']
  #allocation7 [shape = 's32[1]{0:T(128)S(6)}', space=smem, size = 0x200, scoped, tag = 'prefetched SMEM operand 0']
  %s0 = inlined_call_operand.<no memory space> [shape: s32[1], index: 0, kind: input, shape index: {}]
  %s1 = inlined_call_operand.vmem [shape: f32[1,64,32], index: 1, kind: input, shape index: {}]
  %s2 = inlined_call_operand.vmem [shape: s32[8,1], index: 2, kind: input, shape index: {}]
  %s3 = inlined_call_operand.vmem [shape: f32[2,32,32], index: 3, kind: input, shape index: {}]
  %s4 = inlined_call_operand.hbm [shape: f32[1,4,32,32], index: 4, kind: input, shape index: {}]
  %s5 = inlined_call_operand.hbm [shape: f32[2,2,32,32], index: 5, kind: input, shape index: {}]
  %s6 = inlined_call_operand.vmem [shape: f32[2,2,1,32], index: 6, kind: input, shape index: {}]
  %s7 = inlined_call_operand.hbm [shape: f32[8,64], index: 7, kind: output, shape index: {}]
  %s8 = sld [smem:[#allocation0]]
  $region42: #{tpu_custom_call.1} parent=0
    _
  %s10 = ssub.s32 1, %s8
  %s11 = scalar_select 0, %s10, %s8
  %12 = sst [smem:[#allocation7]] %s0
  $region1: #{tpu_custom_call.1} parent=0
    #allocation8 [shape = 'u8[65536]{0}', space=vmem, size = 0x10000, scoped, tag = 'input window, operand 4, single buffered']
    #allocation9 [shape = 's32[1]{0}', space=sflag, size = 0x4, scoped, tag = 'scoped memory for tpu_custom_call.1']
    #allocation10 [shape = 's32[1]{0}', space=sflag, size = 0x4, scoped, tag = 'scoped memory for tpu_custom_call.1']
    #allocation11 [shape = 'u8[65536]{0}', space=vmem, size = 0x10000, scoped, tag = 'input window, operand 5, single buffered']
    #allocation12 [shape = 's32[1]{0}', space=sflag, size = 0x4, scoped, tag = 'scoped memory for tpu_custom_call.1']
    #allocation13 [shape = 'u8[4096]{0}', space=vmem, size = 0x1000, scoped, tag = 'output window, operand 0, single buffered']
    %13 = vsyncpa [#allocation9], 0
    %14 = vsyncpa [#allocation12], 0
    %15 = vsyncpa [#allocation10], 0
    // Predicated region
    $region2: #{tpu_custom_call.1} parent=1 // pred_check
      _
    $region3: #{tpu_custom_call.1} parent=1 // pred_check_branch
      %17 = sbr.rel (0) target = $region5
    $region4: #{tpu_custom_call.1} parent=1 // pred_region
      _
    $region5: #{tpu_custom_call.1} parent=1 // pred_fallthru
      _
    // Predicated region
    $region6: #{tpu_custom_call.1} parent=1 // pred_check
      _
    $region7: #{tpu_custom_call.1} parent=1 // pred_check_branch
      %19 = sbr.rel (0) target = $region9
    $region8: #{tpu_custom_call.1} parent=1 // pred_region
      _
    $region9: #{tpu_custom_call.1} parent=1 // pred_fallthru
      _
    // Predicated region
    $region10: #{tpu_custom_call.1} parent=1 // pred_check
      _
    $region11: #{tpu_custom_call.1} parent=1 // pred_check_branch
      %21 = sbr.rel (0) target = $region13
    $region12: #{tpu_custom_call.1} parent=1 // pred_region
      _
    $region13: #{tpu_custom_call.1} parent=1 // pred_fallthru
      _
    // Predicated region
    $region14: #{tpu_custom_call.1} parent=1 // pred_check
      _
    $region15: #{tpu_custom_call.1} parent=1 // pred_check_branch
      %23 = sbr.rel (0) target = $region17
    $region16: #{tpu_custom_call.1} parent=1 // pred_region
      %s25 = ssub.s32 2048, 2048
      %26 = vsyncadd [#allocation9], %s25
      %s27 = sshll.u32 [#allocation8], 4
      %s28 = int_to_ptr.vmem [resolvable:$true] %s27
      %33 = dma.hbm_to_vmem [thread:$0]  %s4, 2048, %s28, [#allocation9], 128, 128, 8
    $region17: #{tpu_custom_call.1} parent=1 // pred_fallthru
      _
    // Predicated region
    $region18: #{tpu_custom_call.1} parent=1 // pred_check
      _
    $region19: #{tpu_custom_call.1} parent=1 // pred_check_branch
      %35 = sbr.rel (0) target = $region21
    $region20: #{tpu_custom_call.1} parent=1 // pred_region
      %s37 = ssub.s32 2048, 2048
      %38 = vsyncadd [#allocation12], %s37
      %s39 = sshll.u32 [#allocation11], 4
      %s40 = int_to_ptr.vmem [resolvable:$true] %s39
      %45 = dma.hbm_to_vmem [thread:$0]  %s5, 2048, %s40, [#allocation12], 128, 128, 8
    $region21: #{tpu_custom_call.1} parent=1 // pred_fallthru
      _
    // Predicated region
    $region22: #{tpu_custom_call.1} parent=1 // pred_check
      _
    $region23: #{tpu_custom_call.1} parent=1 // pred_check_branch
      %47 = sbr.rel (0) target = $region25
    $region24: #{tpu_custom_call.1} parent=1 // pred_region
      _
    $region25: #{tpu_custom_call.1} parent=1 // pred_fallthru
      _
    // Predicated region
    $region26: #{tpu_custom_call.1} parent=1 // pred_check
      _
    $region27: #{tpu_custom_call.1} parent=1 // pred_check_branch
      %49 = sbr.rel (0) target = $region29
    $region28: #{tpu_custom_call.1} parent=1 // pred_region
      %50 = dma.done [#allocation9], 2048
    $region29: #{tpu_custom_call.1} parent=1 // pred_fallthru
      _
    // Predicated region
    $region30: #{tpu_custom_call.1} parent=1 // pred_check
      _
    $region31: #{tpu_custom_call.1} parent=1 // pred_check_branch
      %52 = sbr.rel (0) target = $region33
    $region32: #{tpu_custom_call.1} parent=1 // pred_region
      %53 = dma.done [#allocation12], 2048
    $region33: #{tpu_custom_call.1} parent=1 // pred_fallthru
      _
    %v54 = vld [vmem:[%s2] sm:$0xff]
    %v55 = vld [vmem:[%s1] sm:$0xff]
    %v56 = vld [vmem:[%s1 + $0x8] sm:$0xff]
    %v57 = vld [vmem:[%s1 + $0x10] sm:$0xff]
    %v58 = vld [vmem:[%s1 + $0x18] sm:$0xff]
    %v59 = vld [vmem:[%s1 + $0x20] sm:$0xff]
    %v60 = vld [vmem:[%s1 + $0x28] sm:$0xff]
    %v61 = vld [vmem:[%s1 + $0x30] sm:$0xff]
    %v62 = vld [vmem:[%s1 + $0x38] sm:$0xff]
    %v63 = vld [vmem:[%s3] sm:$0xff]
    %v64 = vld [vmem:[%s3 + $0x8] sm:$0xff]
    %v65 = vld [vmem:[%s3 + $0x10] sm:$0xff]
    %v66 = vld [vmem:[%s3 + $0x18] sm:$0xff]
    %s67 = scalar_lea.vmem %s3, 32
    %v68 = vld [vmem:[%s67] sm:$0xff]
    %v69 = vld [vmem:[%s67 + $0x8] sm:$0xff]
    %v70 = vld [vmem:[%s67 + $0x10] sm:$0xff]
    %v71 = vld [vmem:[%s67 + $0x18] sm:$0xff]
    %v72 = vld [vmem:[%s6] sm:$0x1]
    %v74 = vlaneseq
    %v75 = vshrl.u32 %v74, 7
    %v76 = vsub.s32 0, %v75
    %v77 = vrot.slane %v72, %v76
    %vm79 = vcmask 261120
    %v81 = vsel %vm79, %v55, 0
    %v84 = vsel %vm79, %v56, 0
    %v87 = vsel %vm79, %v57, 0
    %v90 = vsel %vm79, %v58, 0
    %v93 = vsel %vm79, %v59, 0
    %v96 = vsel %vm79, %v60, 0
    %v99 = vsel %vm79, %v61, 0
    %v102 = vsel %vm79, %v62, 0
    %104 = vmatprep.subr.mxu0 0.0
    %105 = vmatpush1.msra.mxu0 0.0
    %106 = vmatprep.subr.mxu0 0.0
    %107 = vmatpush1.msra.mxu0 0.0
    %108 = vmatprep.subr.mxu0 0.0
    %109 = vmatpush1.msra.mxu0 0.0
    %110 = vmatprep.subr.mxu0 0.0
    %111 = vmatpush1.msra.mxu0 0.0
    %112 = vmatprep.subr.mxu0 0.0
    %113 = vmatpush1.msra.mxu0 0.0
    %114 = vmatprep.subr.mxu0 0.0
    %115 = vmatpush1.msra.mxu0 0.0
    %116 = vmatprep.subr.mxu0 0.0
    %117 = vmatpush1.msra.mxu0 0.0
    %118 = vmatprep.subr.mxu0 0.0
    %119 = vmatpush1.msra.mxu0 0.0
    %120 = vmatprep.subr.mxu0 0.0
    %121 = vmatpush1.msra.mxu0 0.0
    %122 = vmatprep.subr.mxu0 0.0
    %123 = vmatpush1.msra.mxu0 0.0
    %124 = vmatprep.subr.mxu0 0.0
    %125 = vmatpush1.msra.mxu0 0.0
    %126 = vmatprep.subr.mxu0 0.0
    %127 = vmatpush1.msra.mxu0 0.0
    %128 = vmatprep.subr.mxu0 0.0
    %129 = vmatpush1.msra.mxu0 %v66
    %130 = vmatprep.subr.mxu0 0.0
    %131 = vmatpush1.msra.mxu0 %v65
    %132 = vmatprep.subr.mxu0 0.0
    %133 = vmatpush1.msra.mxu0 %v64
    %134 = vmatprep.subr.mxu0 0.0
    %135 = vmatpush1.msra.mxu0 %v63
    %136 = vmatprep.subr.mxu0 0.0
    %137 = vmatpush2.msra.mxu0 0.0
    %138 = vmatprep.subr.mxu0 0.0
    %139 = vmatpush2.msra.mxu0 0.0
    %140 = vmatprep.subr.mxu0 0.0
    %141 = vmatpush2.msra.mxu0 0.0
    %142 = vmatprep.subr.mxu0 0.0
    %143 = vmatpush2.msra.mxu0 0.0
    %144 = vmatprep.subr.mxu0 0.0
    %145 = vmatpush2.msra.mxu0 0.0
    %146 = vmatprep.subr.mxu0 0.0
    %147 = vmatpush2.msra.mxu0 0.0
    %148 = vmatprep.subr.mxu0 0.0
    %149 = vmatpush2.msra.mxu0 0.0
    %150 = vmatprep.subr.mxu0 0.0
    %151 = vmatpush2.msra.mxu0 0.0
    %152 = vmatprep.subr.mxu0 0.0
    %153 = vmatpush2.msra.mxu0 0.0
    %154 = vmatprep.subr.mxu0 0.0
    %155 = vmatpush2.msra.mxu0 0.0
    %156 = vmatprep.subr.mxu0 0.0
    %157 = vmatpush2.msra.mxu0 0.0
    %158 = vmatprep.subr.mxu0 0.0
    %159 = vmatpush2.msra.mxu0 0.0
    %160 = vmatprep.subr.mxu0 0.0
    %161 = vmatpush2.msra.mxu0 0.0
    %162 = vmatprep.subr.mxu0 0.0
    %163 = vmatpush2.msra.mxu0 0.0
    %164 = vmatprep.subr.mxu0 0.0
    %165 = vmatpush2.msra.mxu0 0.0
    %166 = vmatprep.subr.mxu0 0.0
    %167 = vmatpush2.msra.mxu0 0.0
    %168 = vmatprep.mubr.f32.mxu0 0.0
    %169 = vmatmul.mubr.f32.gmra.mxu0 %v81
    %v170 = vpop.f32.mrf.mxu0
    %v171 = vadd.f32 %v77, %v170
    %v172 = vpop.f32.mrf.mxu0
    %173 = vmatprep.mubr.f32.mxu0 0.0
    %174 = vmatmul.mubr.f32.gmra.mxu0 %v84
    %v175 = vpop.f32.mrf.mxu0
    %v176 = vadd.f32 %v77, %v175
    %v177 = vpop.f32.mrf.mxu0
    %178 = vmatprep.mubr.f32.mxu0 0.0
    %179 = vmatmul.mubr.f32.gmra.mxu0 %v87
    %v180 = vpop.f32.mrf.mxu0
    %v181 = vadd.f32 %v77, %v180
    %v182 = vpop.f32.mrf.mxu0
    %183 = vmatprep.mubr.f32.mxu0 0.0
    %184 = vmatmul.mubr.f32.gmra.mxu0 %v90
    %v185 = vpop.f32.mrf.mxu0
    %v186 = vadd.f32 %v77, %v185
    %v187 = vpop.f32.mrf.mxu0
    %188 = vmatprep.mubr.f32.mxu0 0.0
    %189 = vmatmul.mubr.f32.gmra.mxu0 %v93
    %v190 = vpop.f32.mrf.mxu0
    %v191 = vadd.f32 %v77, %v190
    %v192 = vpop.f32.mrf.mxu0
    %193 = vmatprep.mubr.f32.mxu0 0.0
    %194 = vmatmul.mubr.f32.gmra.mxu0 %v96
    %v195 = vpop.f32.mrf.mxu0
    %v196 = vadd.f32 %v77, %v195
    %v197 = vpop.f32.mrf.mxu0
    %198 = vmatprep.mubr.f32.mxu0 0.0
    %199 = vmatmul.mubr.f32.gmra.mxu0 %v99
    %v200 = vpop.f32.mrf.mxu0
    %v201 = vadd.f32 %v77, %v200
    %v202 = vpop.f32.mrf.mxu0
    %203 = vmatprep.mubr.f32.mxu0 0.0
    %204 = vmatmul.mubr.f32.gmra.mxu0 %v102
    %v205 = vpop.f32.mrf.mxu0
    %v206 = vadd.f32 %v77, %v205
    %v207 = vpop.f32.mrf.mxu0
    %208 = vdwg.mxu0
    %209 = vst.msk [vmem:[#allocation2] sm:$0xff] %vm79, %v171
    %210 = vst.msk [vmem:[#allocation2 + $0x8] sm:$0xff] %vm79, %v176
    %211 = vst.msk [vmem:[#allocation2 + $0x10] sm:$0xff] %vm79, %v181
    %212 = vst.msk [vmem:[#allocation2 + $0x18] sm:$0xff] %vm79, %v186
    %213 = vst.msk [vmem:[#allocation2 + $0x20] sm:$0xff] %vm79, %v191
    %214 = vst.msk [vmem:[#allocation2 + $0x28] sm:$0xff] %vm79, %v196
    %215 = vst.msk [vmem:[#allocation2 + $0x30] sm:$0xff] %vm79, %v201
    %216 = vst.msk [vmem:[#allocation2 + $0x38] sm:$0xff] %vm79, %v206
    %s217 = scalar_lea.vmem %s6, 1
    %v218 = vld [vmem:[%s217] sm:$0x1]
    %v220 = vlaneseq
    %v221 = vshrl.u32 %v220, 7
    %v222 = vsub.s32 0, %v221
    %v223 = vrot.slane %v218, %v222
    %225 = vmatprep.subr.mxu0 0.0
    %226 = vmatpush1.msra.mxu0 0.0
    %227 = vmatprep.subr.mxu0 0.0
    %228 = vmatpush1.msra.mxu0 0.0
    %229 = vmatprep.subr.mxu0 0.0
    %230 = vmatpush1.msra.mxu0 0.0
    %231 = vmatprep.subr.mxu0 0.0
    %232 = vmatpush1.msra.mxu0 0.0
    %233 = vmatprep.subr.mxu0 0.0
    %234 = vmatpush1.msra.mxu0 0.0
    %235 = vmatprep.subr.mxu0 0.0
    %236 = vmatpush1.msra.mxu0 0.0
    %237 = vmatprep.subr.mxu0 0.0
    %238 = vmatpush1.msra.mxu0 0.0
    %239 = vmatprep.subr.mxu0 0.0
    %240 = vmatpush1.msra.mxu0 0.0
    %241 = vmatprep.subr.mxu0 0.0
    %242 = vmatpush1.msra.mxu0 0.0
    %243 = vmatprep.subr.mxu0 0.0
    %244 = vmatpush1.msra.mxu0 0.0
    %245 = vmatprep.subr.mxu0 0.0
    %246 = vmatpush1.msra.mxu0 0.0
    %247 = vmatprep.subr.mxu0 0.0
    %248 = vmatpush1.msra.mxu0 0.0
    %249 = vmatprep.subr.mxu0 0.0
    %250 = vmatpush1.msra.mxu0 %v71
    %251 = vmatprep.subr.mxu0 0.0
    %252 = vmatpush1.msra.mxu0 %v70
    %253 = vmatprep.subr.mxu0 0.0
    %254 = vmatpush1.msra.mxu0 %v69
    %255 = vmatprep.subr.mxu0 0.0
    %256 = vmatpush1.msra.mxu0 %v68
    %257 = vmatprep.subr.mxu0 0.0
    %258 = vmatpush2.msra.mxu0 0.0
    %259 = vmatprep.subr.mxu0 0.0
    %260 = vmatpush2.msra.mxu0 0.0
    %261 = vmatprep.subr.mxu0 0.0
    %262 = vmatpush2.msra.mxu0 0.0
    %263 = vmatprep.subr.mxu0 0.0
    %264 = vmatpush2.msra.mxu0 0.0
    %265 = vmatprep.subr.mxu0 0.0
    %266 = vmatpush2.msra.mxu0 0.0
    %267 = vmatprep.subr.mxu0 0.0
    %268 = vmatpush2.msra.mxu0 0.0
    %269 = vmatprep.subr.mxu0 0.0
    %270 = vmatpush2.msra.mxu0 0.0
    %271 = vmatprep.subr.mxu0 0.0
    %272 = vmatpush2.msra.mxu0 0.0
    %273 = vmatprep.subr.mxu0 0.0
    %274 = vmatpush2.msra.mxu0 0.0
    %275 = vmatprep.subr.mxu0 0.0
    %276 = vmatpush2.msra.mxu0 0.0
    %277 = vmatprep.subr.mxu0 0.0
    %278 = vmatpush2.msra.mxu0 0.0
    %279 = vmatprep.subr.mxu0 0.0
    %280 = vmatpush2.msra.mxu0 0.0
    %281 = vmatprep.subr.mxu0 0.0
    %282 = vmatpush2.msra.mxu0 0.0
    %283 = vmatprep.subr.mxu0 0.0
    %284 = vmatpush2.msra.mxu0 0.0
    %285 = vmatprep.subr.mxu0 0.0
    %286 = vmatpush2.msra.mxu0 0.0
    %287 = vmatprep.subr.mxu0 0.0
    %288 = vmatpush2.msra.mxu0 0.0
    %289 = vmatprep.mubr.f32.mxu0 0.0
    %290 = vmatmul.mubr.f32.gmra.mxu0 %v81
    %v291 = vpop.f32.mrf.mxu0
    %v292 = vadd.f32 %v223, %v291
    %v293 = vpop.f32.mrf.mxu0
    %294 = vmatprep.mubr.f32.mxu0 0.0
    %295 = vmatmul.mubr.f32.gmra.mxu0 %v84
    %v296 = vpop.f32.mrf.mxu0
    %v297 = vadd.f32 %v223, %v296
    %v298 = vpop.f32.mrf.mxu0
    %299 = vmatprep.mubr.f32.mxu0 0.0
    %300 = vmatmul.mubr.f32.gmra.mxu0 %v87
    %v301 = vpop.f32.mrf.mxu0
    %v302 = vadd.f32 %v223, %v301
    %v303 = vpop.f32.mrf.mxu0
    %304 = vmatprep.mubr.f32.mxu0 0.0
    %305 = vmatmul.mubr.f32.gmra.mxu0 %v90
    %v306 = vpop.f32.mrf.mxu0
    %v307 = vadd.f32 %v223, %v306
    %v308 = vpop.f32.mrf.mxu0
    %309 = vmatprep.mubr.f32.mxu0 0.0
    %310 = vmatmul.mubr.f32.gmra.mxu0 %v93
    %v311 = vpop.f32.mrf.mxu0
    %v312 = vadd.f32 %v223, %v311
    %v313 = vpop.f32.mrf.mxu0
    %314 = vmatprep.mubr.f32.mxu0 0.0
    %315 = vmatmul.mubr.f32.gmra.mxu0 %v96
    %v316 = vpop.f32.mrf.mxu0
    %v317 = vadd.f32 %v223, %v316
    %v318 = vpop.f32.mrf.mxu0
    %319 = vmatprep.mubr.f32.mxu0 0.0
    %320 = vmatmul.mubr.f32.gmra.mxu0 %v99
    %v321 = vpop.f32.mrf.mxu0
    %v322 = vadd.f32 %v223, %v321
    %v323 = vpop.f32.mrf.mxu0
    %324 = vmatprep.mubr.f32.mxu0 0.0
    %325 = vmatmul.mubr.f32.gmra.mxu0 %v102
    %v326 = vpop.f32.mrf.mxu0
    %v327 = vadd.f32 %v223, %v326
    %v328 = vpop.f32.mrf.mxu0
    %329 = vdwg.mxu0
    %330 = vst.msk [vmem:[#allocation3] sm:$0xff] %vm79, %v292
    %331 = vst.msk [vmem:[#allocation3 + $0x8] sm:$0xff] %vm79, %v297
    %332 = vst.msk [vmem:[#allocation3 + $0x10] sm:$0xff] %vm79, %v302
    %333 = vst.msk [vmem:[#allocation3 + $0x18] sm:$0xff] %vm79, %v307
    %334 = vst.msk [vmem:[#allocation3 + $0x20] sm:$0xff] %vm79, %v312
    %335 = vst.msk [vmem:[#allocation3 + $0x28] sm:$0xff] %vm79, %v317
    %336 = vst.msk [vmem:[#allocation3 + $0x30] sm:$0xff] %vm79, %v322
    %337 = vst.msk [vmem:[#allocation3 + $0x38] sm:$0xff] %vm79, %v327
    %v338 = vld [vmem:[#allocation11] sm:$0xff]
    %v339 = vld [vmem:[#allocation11 + $0x8] sm:$0xff]
    %v340 = vld [vmem:[#allocation11 + $0x10] sm:$0xff]
    %v341 = vld [vmem:[#allocation11 + $0x18] sm:$0xff]
    %s342 = scalar_lea.vmem [#allocation11], 32
    %v343 = vld [vmem:[%s342] sm:$0xff]
    %v344 = vld [vmem:[%s342 + $0x8] sm:$0xff]
    %v345 = vld [vmem:[%s342 + $0x10] sm:$0xff]
    %v346 = vld [vmem:[%s342 + $0x18] sm:$0xff]
    %v347 = vld [vmem:[#allocation2] sm:$0xff]
    %v349 = vsel %vm79, 0.0, 0
    %351 = vmatprep.subr.mxu0 0.0
    %352 = vmatpush1.msra.mxu0 0.0
    %353 = vmatprep.subr.mxu0 0.0
    %354 = vmatpush1.msra.mxu0 0.0
    %355 = vmatprep.subr.mxu0 0.0
    %356 = vmatpush1.msra.mxu0 0.0
    %357 = vmatprep.subr.mxu0 0.0
    %358 = vmatpush1.msra.mxu0 0.0
    %359 = vmatprep.subr.mxu0 0.0
    %360 = vmatpush1.msra.mxu0 0.0
    %361 = vmatprep.subr.mxu0 0.0
    %362 = vmatpush1.msra.mxu0 0.0
    %363 = vmatprep.subr.mxu0 0.0
    %364 = vmatpush1.msra.mxu0 0.0
    %365 = vmatprep.subr.mxu0 0.0
    %366 = vmatpush1.msra.mxu0 0.0
    %367 = vmatprep.subr.mxu0 0.0
    %368 = vmatpush1.msra.mxu0 0.0
    %369 = vmatprep.subr.mxu0 0.0
    %370 = vmatpush1.msra.mxu0 0.0
    %371 = vmatprep.subr.mxu0 0.0
    %372 = vmatpush1.msra.mxu0 0.0
    %373 = vmatprep.subr.mxu0 0.0
    %374 = vmatpush1.msra.mxu0 0.0
    %375 = vmatprep.subr.mxu0 0.0
    %376 = vmatpush1.msra.mxu0 %v341
    %377 = vmatprep.subr.mxu0 0.0
    %378 = vmatpush1.msra.mxu0 %v340
    %379 = vmatprep.subr.mxu0 0.0
    %380 = vmatpush1.msra.mxu0 %v339
    %381 = vmatprep.subr.mxu0 0.0
    %382 = vmatpush1.msra.mxu0 %v338
    %383 = vmatprep.subr.mxu0 0.0
    %384 = vmatpush2.msra.mxu0 0.0
    %385 = vmatprep.subr.mxu0 0.0
    %386 = vmatpush2.msra.mxu0 0.0
    %387 = vmatprep.subr.mxu0 0.0
    %388 = vmatpush2.msra.mxu0 0.0
    %389 = vmatprep.subr.mxu0 0.0
    %390 = vmatpush2.msra.mxu0 0.0
    %391 = vmatprep.subr.mxu0 0.0
    %392 = vmatpush2.msra.mxu0 0.0
    %393 = vmatprep.subr.mxu0 0.0
    %394 = vmatpush2.msra.mxu0 0.0
    %395 = vmatprep.subr.mxu0 0.0
    %396 = vmatpush2.msra.mxu0 0.0
    %397 = vmatprep.subr.mxu0 0.0
    %398 = vmatpush2.msra.mxu0 0.0
    %399 = vmatprep.subr.mxu0 0.0
    %400 = vmatpush2.msra.mxu0 0.0
    %401 = vmatprep.subr.mxu0 0.0
    %402 = vmatpush2.msra.mxu0 0.0
    %403 = vmatprep.subr.mxu0 0.0
    %404 = vmatpush2.msra.mxu0 0.0
    %405 = vmatprep.subr.mxu0 0.0
    %406 = vmatpush2.msra.mxu0 0.0
    %407 = vmatprep.subr.mxu0 0.0
    %408 = vmatpush2.msra.mxu0 0.0
    %409 = vmatprep.subr.mxu0 0.0
    %410 = vmatpush2.msra.mxu0 0.0
    %411 = vmatprep.subr.mxu0 0.0
    %412 = vmatpush2.msra.mxu0 0.0
    %413 = vmatprep.subr.mxu0 0.0
    %414 = vmatpush2.msra.mxu0 0.0
    %415 = vmatprep.mubr.f32.mxu0 0.0
    %416 = vmatmul.mubr.f32.gmra.mxu0 %v349
    %v417 = vpop.f32.mrf.mxu0
    %v418 = vadd.f32 0.0, %v417
    %v419 = vpop.f32.mrf.mxu0
    %420 = vdwg.mxu0
    %v421 = vadd.f32 %v347, %v418
    %v422 = vld [vmem:[#allocation3 + $0x38] sm:$0xff]
    %423 = vmatprep.subr.mxu0 0.0
    %424 = vmatpush1.msra.mxu0 0.0
    %425 = vmatprep.subr.mxu0 0.0
    %426 = vmatpush1.msra.mxu0 0.0
    %427 = vmatprep.subr.mxu0 0.0
    %428 = vmatpush1.msra.mxu0 0.0
    %429 = vmatprep.subr.mxu0 0.0
    %430 = vmatpush1.msra.mxu0 0.0
    %431 = vmatprep.subr.mxu0 0.0
    %432 = vmatpush1.msra.mxu0 0.0
    %433 = vmatprep.subr.mxu0 0.0
    %434 = vmatpush1.msra.mxu0 0.0
    %435 = vmatprep.subr.mxu0 0.0
    %436 = vmatpush1.msra.mxu0 0.0
    %437 = vmatprep.subr.mxu0 0.0
    %438 = vmatpush1.msra.mxu0 0.0
    %439 = vmatprep.subr.mxu0 0.0
    %440 = vmatpush1.msra.mxu0 0.0
    %441 = vmatprep.subr.mxu0 0.0
    %442 = vmatpush1.msra.mxu0 0.0
    %443 = vmatprep.subr.mxu0 0.0
    %444 = vmatpush1.msra.mxu0 0.0
    %445 = vmatprep.subr.mxu0 0.0
    %446 = vmatpush1.msra.mxu0 0.0
    %447 = vmatprep.subr.mxu0 0.0
    %448 = vmatpush1.msra.mxu0 %v346
    %449 = vmatprep.subr.mxu0 0.0
    %450 = vmatpush1.msra.mxu0 %v345
    %451 = vmatprep.subr.mxu0 0.0
    %452 = vmatpush1.msra.mxu0 %v344
    %453 = vmatprep.subr.mxu0 0.0
    %454 = vmatpush1.msra.mxu0 %v343
    %455 = vmatprep.subr.mxu0 0.0
    %456 = vmatpush2.msra.mxu0 0.0
    %457 = vmatprep.subr.mxu0 0.0
    %458 = vmatpush2.msra.mxu0 0.0
    %459 = vmatprep.subr.mxu0 0.0
    %460 = vmatpush2.msra.mxu0 0.0
    %461 = vmatprep.subr.mxu0 0.0
    %462 = vmatpush2.msra.mxu0 0.0
    %463 = vmatprep.subr.mxu0 0.0
    %464 = vmatpush2.msra.mxu0 0.0
    %465 = vmatprep.subr.mxu0 0.0
    %466 = vmatpush2.msra.mxu0 0.0
    %467 = vmatprep.subr.mxu0 0.0
    %468 = vmatpush2.msra.mxu0 0.0
    %469 = vmatprep.subr.mxu0 0.0
    %470 = vmatpush2.msra.mxu0 0.0
    %471 = vmatprep.subr.mxu0 0.0
    %472 = vmatpush2.msra.mxu0 0.0
    %473 = vmatprep.subr.mxu0 0.0
    %474 = vmatpush2.msra.mxu0 0.0
    %475 = vmatprep.subr.mxu0 0.0
    %476 = vmatpush2.msra.mxu0 0.0
    %477 = vmatprep.subr.mxu0 0.0
    %478 = vmatpush2.msra.mxu0 0.0
    %479 = vmatprep.subr.mxu0 0.0
    %480 = vmatpush2.msra.mxu0 0.0
    %481 = vmatprep.subr.mxu0 0.0
    %482 = vmatpush2.msra.mxu0 0.0
    %483 = vmatprep.subr.mxu0 0.0
    %484 = vmatpush2.msra.mxu0 0.0
    %485 = vmatprep.subr.mxu0 0.0
    %486 = vmatpush2.msra.mxu0 0.0
    %487 = vmatprep.mubr.f32.mxu0 0.0
    %488 = vmatmul.mubr.f32.gmra.mxu0 %v349
    %v489 = vpop.f32.mrf.mxu0
    %v490 = vadd.f32 0.0, %v489
    %v491 = vpop.f32.mrf.mxu0
    %492 = vdwg.mxu0
    %v493 = vadd.f32 %v422, %v490
    %vm494 = vcmp.gt.s32.totalorder %v54, 0
    %v495 = vtanh.pop %v421
    %v496 = vsel %vm494, 1, 0
    %497 = vset.pattern.permute.xlu0 0
    %498 = vperm.xlu0 %497, %v496
    %v499 = vpop.permute.xlu0 %498
    %vm500 = vcmp.eq.s32.totalorder %v499, 1
    %v501 = vsel %vm500, %v495, 0.0
    %vm502 = vcmp.gt.s32.totalorder %v54, 7
    %v503 = vtanh.pop %v493
    %v504 = vsel %vm502, 1, 0
    %505 = vset.pattern.permute.xlu0 0
    %506 = vperm.xlu0 %505, %v504
    %v507 = vpop.permute.xlu0 %506
    %vm508 = vcmp.eq.s32.totalorder %v507, 1
    %v509 = vsel %vm508, %v503, 0.0
    %510 = vst.msk [vmem:[#allocation4] sm:$0xff] %vm79, %v501
    %511 = vst.msk [vmem:[#allocation5 + $0x38] sm:$0xff] %vm79, %v509
    %v512 = vld [vmem:[#allocation2 + $0x8] sm:$0xff]
    %v514 = vsel %vm79, %v501, 0
    %516 = vmatprep.subr.mxu0 0.0
    %517 = vmatpush1.msra.mxu0 0.0
    %518 = vmatprep.subr.mxu0 0.0
    %519 = vmatpush1.msra.mxu0 0.0
    %520 = vmatprep.subr.mxu0 0.0
    %521 = vmatpush1.msra.mxu0 0.0
    %522 = vmatprep.subr.mxu0 0.0
    %523 = vmatpush1.msra.mxu0 0.0
    %524 = vmatprep.subr.mxu0 0.0
    %525 = vmatpush1.msra.mxu0 0.0
    %526 = vmatprep.subr.mxu0 0.0
    %527 = vmatpush1.msra.mxu0 0.0
    %528 = vmatprep.subr.mxu0 0.0
    %529 = vmatpush1.msra.mxu0 0.0
    %530 = vmatprep.subr.mxu0 0.0
    %531 = vmatpush1.msra.mxu0 0.0
    %532 = vmatprep.subr.mxu0 0.0
    %533 = vmatpush1.msra.mxu0 0.0
    %534 = vmatprep.subr.mxu0 0.0
    %535 = vmatpush1.msra.mxu0 0.0
    %536 = vmatprep.subr.mxu0 0.0
    %537 = vmatpush1.msra.mxu0 0.0
    %538 = vmatprep.subr.mxu0 0.0
    %539 = vmatpush1.msra.mxu0 0.0
    %540 = vmatprep.subr.mxu0 0.0
    %541 = vmatpush1.msra.mxu0 %v341
    %542 = vmatprep.subr.mxu0 0.0
    %543 = vmatpush1.msra.mxu0 %v340
    %544 = vmatprep.subr.mxu0 0.0
    %545 = vmatpush1.msra.mxu0 %v339
    %546 = vmatprep.subr.mxu0 0.0
    %547 = vmatpush1.msra.mxu0 %v338
    %548 = vmatprep.subr.mxu0 0.0
    %549 = vmatpush2.msra.mxu0 0.0
    %550 = vmatprep.subr.mxu0 0.0
    %551 = vmatpush2.msra.mxu0 0.0
    %552 = vmatprep.subr.mxu0 0.0
    %553 = vmatpush2.msra.mxu0 0.0
    %554 = vmatprep.subr.mxu0 0.0
    %555 = vmatpush2.msra.mxu0 0.0
    %556 = vmatprep.subr.mxu0 0.0
    %557 = vmatpush2.msra.mxu0 0.0
    %558 = vmatprep.subr.mxu0 0.0
    %559 = vmatpush2.msra.mxu0 0.0
    %560 = vmatprep.subr.mxu0 0.0
    %561 = vmatpush2.msra.mxu0 0.0
    %562 = vmatprep.subr.mxu0 0.0
    %563 = vmatpush2.msra.mxu0 0.0
    %564 = vmatprep.subr.mxu0 0.0
    %565 = vmatpush2.msra.mxu0 0.0
    %566 = vmatprep.subr.mxu0 0.0
    %567 = vmatpush2.msra.mxu0 0.0
    %568 = vmatprep.subr.mxu0 0.0
    %569 = vmatpush2.msra.mxu0 0.0
    %570 = vmatprep.subr.mxu0 0.0
    %571 = vmatpush2.msra.mxu0 0.0
    %572 = vmatprep.subr.mxu0 0.0
    %573 = vmatpush2.msra.mxu0 0.0
    %574 = vmatprep.subr.mxu0 0.0
    %575 = vmatpush2.msra.mxu0 0.0
    %576 = vmatprep.subr.mxu0 0.0
    %577 = vmatpush2.msra.mxu0 0.0
    %578 = vmatprep.subr.mxu0 0.0
    %579 = vmatpush2.msra.mxu0 0.0
    %580 = vmatprep.mubr.f32.mxu0 0.0
    %581 = vmatmul.mubr.f32.gmra.mxu0 %v514
    %v582 = vpop.f32.mrf.mxu0
    %v583 = vadd.f32 0.0, %v582
    %v584 = vpop.f32.mrf.mxu0
    %585 = vdwg.mxu0
    %v586 = vadd.f32 %v512, %v583
    %v587 = vld [vmem:[#allocation3 + $0x30] sm:$0xff]
    %v589 = vsel %vm79, %v509, 0
    %591 = vmatprep.subr.mxu0 0.0
    %592 = vmatpush1.msra.mxu0 0.0
    %593 = vmatprep.subr.mxu0 0.0
    %594 = vmatpush1.msra.mxu0 0.0
    %595 = vmatprep.subr.mxu0 0.0
    %596 = vmatpush1.msra.mxu0 0.0
    %597 = vmatprep.subr.mxu0 0.0
    %598 = vmatpush1.msra.mxu0 0.0
    %599 = vmatprep.subr.mxu0 0.0
    %600 = vmatpush1.msra.mxu0 0.0
    %601 = vmatprep.subr.mxu0 0.0
    %602 = vmatpush1.msra.mxu0 0.0
    %603 = vmatprep.subr.mxu0 0.0
    %604 = vmatpush1.msra.mxu0 0.0
    %605 = vmatprep.subr.mxu0 0.0
    %606 = vmatpush1.msra.mxu0 0.0
    %607 = vmatprep.subr.mxu0 0.0
    %608 = vmatpush1.msra.mxu0 0.0
    %609 = vmatprep.subr.mxu0 0.0
    %610 = vmatpush1.msra.mxu0 0.0
    %611 = vmatprep.subr.mxu0 0.0
    %612 = vmatpush1.msra.mxu0 0.0
    %613 = vmatprep.subr.mxu0 0.0
    %614 = vmatpush1.msra.mxu0 0.0
    %615 = vmatprep.subr.mxu0 0.0
    %616 = vmatpush1.msra.mxu0 %v346
    %617 = vmatprep.subr.mxu0 0.0
    %618 = vmatpush1.msra.mxu0 %v345
    %619 = vmatprep.subr.mxu0 0.0
    %620 = vmatpush1.msra.mxu0 %v344
    %621 = vmatprep.subr.mxu0 0.0
    %622 = vmatpush1.msra.mxu0 %v343
    %623 = vmatprep.subr.mxu0 0.0
    %624 = vmatpush2.msra.mxu0 0.0
    %625 = vmatprep.subr.mxu0 0.0
    %626 = vmatpush2.msra.mxu0 0.0
    %627 = vmatprep.subr.mxu0 0.0
    %628 = vmatpush2.msra.mxu0 0.0
    %629 = vmatprep.subr.mxu0 0.0
    %630 = vmatpush2.msra.mxu0 0.0
    %631 = vmatprep.subr.mxu0 0.0
    %632 = vmatpush2.msra.mxu0 0.0
    %633 = vmatprep.subr.mxu0 0.0
    %634 = vmatpush2.msra.mxu0 0.0
    %635 = vmatprep.subr.mxu0 0.0
    %636 = vmatpush2.msra.mxu0 0.0
    %637 = vmatprep.subr.mxu0 0.0
    %638 = vmatpush2.msra.mxu0 0.0
    %639 = vmatprep.subr.mxu0 0.0
    %640 = vmatpush2.msra.mxu0 0.0
    %641 = vmatprep.subr.mxu0 0.0
    %642 = vmatpush2.msra.mxu0 0.0
    %643 = vmatprep.subr.mxu0 0.0
    %644 = vmatpush2.msra.mxu0 0.0
    %645 = vmatprep.subr.mxu0 0.0
    %646 = vmatpush2.msra.mxu0 0.0
    %647 = vmatprep.subr.mxu0 0.0
    %648 = vmatpush2.msra.mxu0 0.0
    %649 = vmatprep.subr.mxu0 0.0
    %650 = vmatpush2.msra.mxu0 0.0
    %651 = vmatprep.subr.mxu0 0.0
    %652 = vmatpush2.msra.mxu0 0.0
    %653 = vmatprep.subr.mxu0 0.0
    %654 = vmatpush2.msra.mxu0 0.0
    %655 = vmatprep.mubr.f32.mxu0 0.0
    %656 = vmatmul.mubr.f32.gmra.mxu0 %v589
    %v657 = vpop.f32.mrf.mxu0
    %v658 = vadd.f32 0.0, %v657
    %v659 = vpop.f32.mrf.mxu0
    %660 = vdwg.mxu0
    %v661 = vadd.f32 %v587, %v658
    %vm662 = vcmp.gt.s32.totalorder %v54, 1
    %v663 = vtanh.pop %v586
    %v664 = vsel %vm662, 1, 0
    %665 = vset.pattern.permute.xlu0 0
    %666 = vperm.xlu0 %665, %v664
    %v667 = vpop.permute.xlu0 %666
    %vm668 = vcmp.eq.s32.totalorder %v667, 1
    %v669 = vsel %vm668, %v663, %v501
    %vm670 = vcmp.gt.s32.totalorder %v54, 6
    %v671 = vtanh.pop %v661
    %v672 = vsel %vm670, 1, 0
    %673 = vset.pattern.permute.xlu0 0
    %674 = vperm.xlu0 %673, %v672
    %v675 = vpop.permute.xlu0 %674
    %vm676 = vcmp.eq.s32.totalorder %v675, 1
    %v677 = vsel %vm676, %v671, %v509
    %678 = vst.msk [vmem:[#allocation4 + $0x8] sm:$0xff] %vm79, %v669
    %679 = vst.msk [vmem:[#allocation5 + $0x30] sm:$0xff] %vm79, %v677
    %v680 = vld [vmem:[#allocation2 + $0x10] sm:$0xff]
    %v682 = vsel %vm79, %v669, 0
    %684 = vmatprep.subr.mxu0 0.0
    %685 = vmatpush1.msra.mxu0 0.0
    %686 = vmatprep.subr.mxu0 0.0
    %687 = vmatpush1.msra.mxu0 0.0
    %688 = vmatprep.subr.mxu0 0.0
    %689 = vmatpush1.msra.mxu0 0.0
    %690 = vmatprep.subr.mxu0 0.0
    %691 = vmatpush1.msra.mxu0 0.0
    %692 = vmatprep.subr.mxu0 0.0
    %693 = vmatpush1.msra.mxu0 0.0
    %694 = vmatprep.subr.mxu0 0.0
    %695 = vmatpush1.msra.mxu0 0.0
    %696 = vmatprep.subr.mxu0 0.0
    %697 = vmatpush1.msra.mxu0 0.0
    %698 = vmatprep.subr.mxu0 0.0
    %699 = vmatpush1.msra.mxu0 0.0
    %700 = vmatprep.subr.mxu0 0.0
    %701 = vmatpush1.msra.mxu0 0.0
    %702 = vmatprep.subr.mxu0 0.0
    %703 = vmatpush1.msra.mxu0 0.0
    %704 = vmatprep.subr.mxu0 0.0
    %705 = vmatpush1.msra.mxu0 0.0
    %706 = vmatprep.subr.mxu0 0.0
    %707 = vmatpush1.msra.mxu0 0.0
    %708 = vmatprep.subr.mxu0 0.0
    %709 = vmatpush1.msra.mxu0 %v341
    %710 = vmatprep.subr.mxu0 0.0
    %711 = vmatpush1.msra.mxu0 %v340
    %712 = vmatprep.subr.mxu0 0.0
    %713 = vmatpush1.msra.mxu0 %v339
    %714 = vmatprep.subr.mxu0 0.0
    %715 = vmatpush1.msra.mxu0 %v338
    %716 = vmatprep.subr.mxu0 0.0
    %717 = vmatpush2.msra.mxu0 0.0
    %718 = vmatprep.subr.mxu0 0.0
    %719 = vmatpush2.msra.mxu0 0.0
    %720 = vmatprep.subr.mxu0 0.0
    %721 = vmatpush2.msra.mxu0 0.0
    %722 = vmatprep.subr.mxu0 0.0
    %723 = vmatpush2.msra.mxu0 0.0
    %724 = vmatprep.subr.mxu0 0.0
    %725 = vmatpush2.msra.mxu0 0.0
    %726 = vmatprep.subr.mxu0 0.0
    %727 = vmatpush2.msra.mxu0 0.0
    %728 = vmatprep.subr.mxu0 0.0
    %729 = vmatpush2.msra.mxu0 0.0
    %730 = vmatprep.subr.mxu0 0.0
    %731 = vmatpush2.msra.mxu0 0.0
    %732 = vmatprep.subr.mxu0 0.0
    %733 = vmatpush2.msra.mxu0 0.0
    %734 = vmatprep.subr.mxu0 0.0
    %735 = vmatpush2.msra.mxu0 0.0
    %736 = vmatprep.subr.mxu0 0.0
    %737 = vmatpush2.msra.mxu0 0.0
    %738 = vmatprep.subr.mxu0 0.0
    %739 = vmatpush2.msra.mxu0 0.0
    %740 = vmatprep.subr.mxu0 0.0
    %741 = vmatpush2.msra.mxu0 0.0
    %742 = vmatprep.subr.mxu0 0.0
    %743 = vmatpush2.msra.mxu0 0.0
    %744 = vmatprep.subr.mxu0 0.0
    %745 = vmatpush2.msra.mxu0 0.0
    %746 = vmatprep.subr.mxu0 0.0
    %747 = vmatpush2.msra.mxu0 0.0
    %748 = vmatprep.mubr.f32.mxu0 0.0
    %749 = vmatmul.mubr.f32.gmra.mxu0 %v682
    %v750 = vpop.f32.mrf.mxu0
    %v751 = vadd.f32 0.0, %v750
    %v752 = vpop.f32.mrf.mxu0
    %753 = vdwg.mxu0
    %v754 = vadd.f32 %v680, %v751
    %v755 = vld [vmem:[#allocation3 + $0x28] sm:$0xff]
    %v757 = vsel %vm79, %v677, 0
    %759 = vmatprep.subr.mxu0 0.0
    %760 = vmatpush1.msra.mxu0 0.0
    %761 = vmatprep.subr.mxu0 0.0
    %762 = vmatpush1.msra.mxu0 0.0
    %763 = vmatprep.subr.mxu0 0.0
    %764 = vmatpush1.msra.mxu0 0.0
    %765 = vmatprep.subr.mxu0 0.0
    %766 = vmatpush1.msra.mxu0 0.0
    %767 = vmatprep.subr.mxu0 0.0
    %768 = vmatpush1.msra.mxu0 0.0
    %769 = vmatprep.subr.mxu0 0.0
    %770 = vmatpush1.msra.mxu0 0.0
    %771 = vmatprep.subr.mxu0 0.0
    %772 = vmatpush1.msra.mxu0 0.0
    %773 = vmatprep.subr.mxu0 0.0
    %774 = vmatpush1.msra.mxu0 0.0
    %775 = vmatprep.subr.mxu0 0.0
    %776 = vmatpush1.msra.mxu0 0.0
    %777 = vmatprep.subr.mxu0 0.0
    %778 = vmatpush1.msra.mxu0 0.0
    %779 = vmatprep.subr.mxu0 0.0
    %780 = vmatpush1.msra.mxu0 0.0
    %781 = vmatprep.subr.mxu0 0.0
    %782 = vmatpush1.msra.mxu0 0.0
    %783 = vmatprep.subr.mxu0 0.0
    %784 = vmatpush1.msra.mxu0 %v346
    %785 = vmatprep.subr.mxu0 0.0
    %786 = vmatpush1.msra.mxu0 %v345
    %787 = vmatprep.subr.mxu0 0.0
    %788 = vmatpush1.msra.mxu0 %v344
    %789 = vmatprep.subr.mxu0 0.0
    %790 = vmatpush1.msra.mxu0 %v343
    %791 = vmatprep.subr.mxu0 0.0
    %792 = vmatpush2.msra.mxu0 0.0
    %793 = vmatprep.subr.mxu0 0.0
    %794 = vmatpush2.msra.mxu0 0.0
    %795 = vmatprep.subr.mxu0 0.0
    %796 = vmatpush2.msra.mxu0 0.0
    %797 = vmatprep.subr.mxu0 0.0
    %798 = vmatpush2.msra.mxu0 0.0
    %799 = vmatprep.subr.mxu0 0.0
    %800 = vmatpush2.msra.mxu0 0.0
    %801 = vmatprep.subr.mxu0 0.0
    %802 = vmatpush2.msra.mxu0 0.0
    %803 = vmatprep.subr.mxu0 0.0
    %804 = vmatpush2.msra.mxu0 0.0
    %805 = vmatprep.subr.mxu0 0.0
    %806 = vmatpush2.msra.mxu0 0.0
    %807 = vmatprep.subr.mxu0 0.0
    %808 = vmatpush2.msra.mxu0 0.0
    %809 = vmatprep.subr.mxu0 0.0
    %810 = vmatpush2.msra.mxu0 0.0
    %811 = vmatprep.subr.mxu0 0.0
    %812 = vmatpush2.msra.mxu0 0.0
    %813 = vmatprep.subr.mxu0 0.0
    %814 = vmatpush2.msra.mxu0 0.0
    %815 = vmatprep.subr.mxu0 0.0
    %816 = vmatpush2.msra.mxu0 0.0
    %817 = vmatprep.subr.mxu0 0.0
    %818 = vmatpush2.msra.mxu0 0.0
    %819 = vmatprep.subr.mxu0 0.0
    %820 = vmatpush2.msra.mxu0 0.0
    %821 = vmatprep.subr.mxu0 0.0
    %822 = vmatpush2.msra.mxu0 0.0
    %823 = vmatprep.mubr.f32.mxu0 0.0
    %824 = vmatmul.mubr.f32.gmra.mxu0 %v757
    %v825 = vpop.f32.mrf.mxu0
    %v826 = vadd.f32 0.0, %v825
    %v827 = vpop.f32.mrf.mxu0
    %828 = vdwg.mxu0
    %v829 = vadd.f32 %v755, %v826
    %vm830 = vcmp.gt.s32.totalorder %v54, 2
    %v831 = vtanh.pop %v754
    %v832 = vsel %vm830, 1, 0
    %833 = vset.pattern.permute.xlu0 0
    %834 = vperm.xlu0 %833, %v832
    %v835 = vpop.permute.xlu0 %834
    %vm836 = vcmp.eq.s32.totalorder %v835, 1
    %v837 = vsel %vm836, %v831, %v669
    %vm838 = vcmp.gt.s32.totalorder %v54, 5
    %v839 = vtanh.pop %v829
    %v840 = vsel %vm838, 1, 0
    %841 = vset.pattern.permute.xlu0 0
    %842 = vperm.xlu0 %841, %v840
    %v843 = vpop.permute.xlu0 %842
    %vm844 = vcmp.eq.s32.totalorder %v843, 1
    %v845 = vsel %vm844, %v839, %v677
    %846 = vst.msk [vmem:[#allocation4 + $0x10] sm:$0xff] %vm79, %v837
    %847 = vst.msk [vmem:[#allocation5 + $0x28] sm:$0xff] %vm79, %v845
    %v848 = vld [vmem:[#allocation2 + $0x18] sm:$0xff]
    %v850 = vsel %vm79, %v837, 0
    %852 = vmatprep.subr.mxu0 0.0
    %853 = vmatpush1.msra.mxu0 0.0
    %854 = vmatprep.subr.mxu0 0.0
    %855 = vmatpush1.msra.mxu0 0.0
    %856 = vmatprep.subr.mxu0 0.0
    %857 = vmatpush1.msra.mxu0 0.0
    %858 = vmatprep.subr.mxu0 0.0
    %859 = vmatpush1.msra.mxu0 0.0
    %860 = vmatprep.subr.mxu0 0.0
    %861 = vmatpush1.msra.mxu0 0.0
    %862 = vmatprep.subr.mxu0 0.0
    %863 = vmatpush1.msra.mxu0 0.0
    %864 = vmatprep.subr.mxu0 0.0
    %865 = vmatpush1.msra.mxu0 0.0
    %866 = vmatprep.subr.mxu0 0.0
    %867 = vmatpush1.msra.mxu0 0.0
    %868 = vmatprep.subr.mxu0 0.0
    %869 = vmatpush1.msra.mxu0 0.0
    %870 = vmatprep.subr.mxu0 0.0
    %871 = vmatpush1.msra.mxu0 0.0
    %872 = vmatprep.subr.mxu0 0.0
    %873 = vmatpush1.msra.mxu0 0.0
    %874 = vmatprep.subr.mxu0 0.0
    %875 = vmatpush1.msra.mxu0 0.0
    %876 = vmatprep.subr.mxu0 0.0
    %877 = vmatpush1.msra.mxu0 %v341
    %878 = vmatprep.subr.mxu0 0.0
    %879 = vmatpush1.msra.mxu0 %v340
    %880 = vmatprep.subr.mxu0 0.0
    %881 = vmatpush1.msra.mxu0 %v339
    %882 = vmatprep.subr.mxu0 0.0
    %883 = vmatpush1.msra.mxu0 %v338
    %884 = vmatprep.subr.mxu0 0.0
    %885 = vmatpush2.msra.mxu0 0.0
    %886 = vmatprep.subr.mxu0 0.0
    %887 = vmatpush2.msra.mxu0 0.0
    %888 = vmatprep.subr.mxu0 0.0
    %889 = vmatpush2.msra.mxu0 0.0
    %890 = vmatprep.subr.mxu0 0.0
    %891 = vmatpush2.msra.mxu0 0.0
    %892 = vmatprep.subr.mxu0 0.0
    %893 = vmatpush2.msra.mxu0 0.0
    %894 = vmatprep.subr.mxu0 0.0
    %895 = vmatpush2.msra.mxu0 0.0
    %896 = vmatprep.subr.mxu0 0.0
    %897 = vmatpush2.msra.mxu0 0.0
    %898 = vmatprep.subr.mxu0 0.0
    %899 = vmatpush2.msra.mxu0 0.0
    %900 = vmatprep.subr.mxu0 0.0
    %901 = vmatpush2.msra.mxu0 0.0
    %902 = vmatprep.subr.mxu0 0.0
    %903 = vmatpush2.msra.mxu0 0.0
    %904 = vmatprep.subr.mxu0 0.0
    %905 = vmatpush2.msra.mxu0 0.0
    %906 = vmatprep.subr.mxu0 0.0
    %907 = vmatpush2.msra.mxu0 0.0
    %908 = vmatprep.subr.mxu0 0.0
    %909 = vmatpush2.msra.mxu0 0.0
    %910 = vmatprep.subr.mxu0 0.0
    %911 = vmatpush2.msra.mxu0 0.0
    %912 = vmatprep.subr.mxu0 0.0
    %913 = vmatpush2.msra.mxu0 0.0
    %914 = vmatprep.subr.mxu0 0.0
    %915 = vmatpush2.msra.mxu0 0.0
    %916 = vmatprep.mubr.f32.mxu0 0.0
    %917 = vmatmul.mubr.f32.gmra.mxu0 %v850
    %v918 = vpop.f32.mrf.mxu0
    %v919 = vadd.f32 0.0, %v918
    %v920 = vpop.f32.mrf.mxu0
    %921 = vdwg.mxu0
    %v922 = vadd.f32 %v848, %v919
    %v923 = vld [vmem:[#allocation3 + $0x20] sm:$0xff]
    %v925 = vsel %vm79, %v845, 0
    %927 = vmatprep.subr.mxu0 0.0
    %928 = vmatpush1.msra.mxu0 0.0
    %929 = vmatprep.subr.mxu0 0.0
    %930 = vmatpush1.msra.mxu0 0.0
    %931 = vmatprep.subr.mxu0 0.0
    %932 = vmatpush1.msra.mxu0 0.0
    %933 = vmatprep.subr.mxu0 0.0
    %934 = vmatpush1.msra.mxu0 0.0
    %935 = vmatprep.subr.mxu0 0.0
    %936 = vmatpush1.msra.mxu0 0.0
    %937 = vmatprep.subr.mxu0 0.0
    %938 = vmatpush1.msra.mxu0 0.0
    %939 = vmatprep.subr.mxu0 0.0
    %940 = vmatpush1.msra.mxu0 0.0
    %941 = vmatprep.subr.mxu0 0.0
    %942 = vmatpush1.msra.mxu0 0.0
    %943 = vmatprep.subr.mxu0 0.0
    %944 = vmatpush1.msra.mxu0 0.0
    %945 = vmatprep.subr.mxu0 0.0
    %946 = vmatpush1.msra.mxu0 0.0
    %947 = vmatprep.subr.mxu0 0.0
    %948 = vmatpush1.msra.mxu0 0.0
    %949 = vmatprep.subr.mxu0 0.0
    %950 = vmatpush1.msra.mxu0 0.0
    %951 = vmatprep.subr.mxu0 0.0
    %952 = vmatpush1.msra.mxu0 %v346
    %953 = vmatprep.subr.mxu0 0.0
    %954 = vmatpush1.msra.mxu0 %v345
    %955 = vmatprep.subr.mxu0 0.0
    %956 = vmatpush1.msra.mxu0 %v344
    %957 = vmatprep.subr.mxu0 0.0
    %958 = vmatpush1.msra.mxu0 %v343
    %959 = vmatprep.subr.mxu0 0.0
    %960 = vmatpush2.msra.mxu0 0.0
    %961 = vmatprep.subr.mxu0 0.0
    %962 = vmatpush2.msra.mxu0 0.0
    %963 = vmatprep.subr.mxu0 0.0
    %964 = vmatpush2.msra.mxu0 0.0
    %965 = vmatprep.subr.mxu0 0.0
    %966 = vmatpush2.msra.mxu0 0.0
    %967 = vmatprep.subr.mxu0 0.0
    %968 = vmatpush2.msra.mxu0 0.0
    %969 = vmatprep.subr.mxu0 0.0
    %970 = vmatpush2.msra.mxu0 0.0
    %971 = vmatprep.subr.mxu0 0.0
    %972 = vmatpush2.msra.mxu0 0.0
    %973 = vmatprep.subr.mxu0 0.0
    %974 = vmatpush2.msra.mxu0 0.0
    %975 = vmatprep.subr.mxu0 0.0
    %976 = vmatpush2.msra.mxu0 0.0
    %977 = vmatprep.subr.mxu0 0.0
    %978 = vmatpush2.msra.mxu0 0.0
    %979 = vmatprep.subr.mxu0 0.0
    %980 = vmatpush2.msra.mxu0 0.0
    %981 = vmatprep.subr.mxu0 0.0
    %982 = vmatpush2.msra.mxu0 0.0
    %983 = vmatprep.subr.mxu0 0.0
    %984 = vmatpush2.msra.mxu0 0.0
    %985 = vmatprep.subr.mxu0 0.0
    %986 = vmatpush2.msra.mxu0 0.0
    %987 = vmatprep.subr.mxu0 0.0
    %988 = vmatpush2.msra.mxu0 0.0
    %989 = vmatprep.subr.mxu0 0.0
    %990 = vmatpush2.msra.mxu0 0.0
    %991 = vmatprep.mubr.f32.mxu0 0.0
    %992 = vmatmul.mubr.f32.gmra.mxu0 %v925
    %v993 = vpop.f32.mrf.mxu0
    %v994 = vadd.f32 0.0, %v993
    %v995 = vpop.f32.mrf.mxu0
    %996 = vdwg.mxu0
    %v997 = vadd.f32 %v923, %v994
    %vm998 = vcmp.gt.s32.totalorder %v54, 3
    %v999 = vtanh.pop %v922
    %v1000 = vsel %vm998, 1, 0
    %1001 = vset.pattern.permute.xlu0 0
    %1002 = vperm.xlu0 %1001, %v1000
    %v1003 = vpop.permute.xlu0 %1002
    %vm1004 = vcmp.eq.s32.totalorder %v1003, 1
    %v1005 = vsel %vm1004, %v999, %v837
    %vm1006 = vcmp.gt.s32.totalorder %v54, 4
    %v1007 = vtanh.pop %v997
    %v1008 = vsel %vm1006, 1, 0
    %1009 = vset.pattern.permute.xlu0 0
    %1010 = vperm.xlu0 %1009, %v1008
    %v1011 = vpop.permute.xlu0 %1010
    %vm1012 = vcmp.eq.s32.totalorder %v1011, 1
    %v1013 = vsel %vm1012, %v1007, %v845
    %1014 = vst.msk [vmem:[#allocation4 + $0x18] sm:$0xff] %vm79, %v1005
    %1015 = vst.msk [vmem:[#allocation5 + $0x20] sm:$0xff] %vm79, %v1013
    %v1016 = vld [vmem:[#allocation2 + $0x20] sm:$0xff]
    %v1018 = vsel %vm79, %v1005, 0
    %1020 = vmatprep.subr.mxu0 0.0
    %1021 = vmatpush1.msra.mxu0 0.0
    %1022 = vmatprep.subr.mxu0 0.0
    %1023 = vmatpush1.msra.mxu0 0.0
    %1024 = vmatprep.subr.mxu0 0.0
    %1025 = vmatpush1.msra.mxu0 0.0
    %1026 = vmatprep.subr.mxu0 0.0
    %1027 = vmatpush1.msra.mxu0 0.0
    %1028 = vmatprep.subr.mxu0 0.0
    %1029 = vmatpush1.msra.mxu0 0.0
    %1030 = vmatprep.subr.mxu0 0.0
    %1031 = vmatpush1.msra.mxu0 0.0
    %1032 = vmatprep.subr.mxu0 0.0
    %1033 = vmatpush1.msra.mxu0 0.0
    %1034 = vmatprep.subr.mxu0 0.0
    %1035 = vmatpush1.msra.mxu0 0.0
    %1036 = vmatprep.subr.mxu0 0.0
    %1037 = vmatpush1.msra.mxu0 0.0
    %1038 = vmatprep.subr.mxu0 0.0
    %1039 = vmatpush1.msra.mxu0 0.0
    %1040 = vmatprep.subr.mxu0 0.0
    %1041 = vmatpush1.msra.mxu0 0.0
    %1042 = vmatprep.subr.mxu0 0.0
    %1043 = vmatpush1.msra.mxu0 0.0
    %1044 = vmatprep.subr.mxu0 0.0
    %1045 = vmatpush1.msra.mxu0 %v341
    %1046 = vmatprep.subr.mxu0 0.0
    %1047 = vmatpush1.msra.mxu0 %v340
    %1048 = vmatprep.subr.mxu0 0.0
    %1049 = vmatpush1.msra.mxu0 %v339
    %1050 = vmatprep.subr.mxu0 0.0
    %1051 = vmatpush1.msra.mxu0 %v338
    %1052 = vmatprep.subr.mxu0 0.0
    %1053 = vmatpush2.msra.mxu0 0.0
    %1054 = vmatprep.subr.mxu0 0.0
    %1055 = vmatpush2.msra.mxu0 0.0
    %1056 = vmatprep.subr.mxu0 0.0
    %1057 = vmatpush2.msra.mxu0 0.0
    %1058 = vmatprep.subr.mxu0 0.0
    %1059 = vmatpush2.msra.mxu0 0.0
    %1060 = vmatprep.subr.mxu0 0.0
    %1061 = vmatpush2.msra.mxu0 0.0
    %1062 = vmatprep.subr.mxu0 0.0
    %1063 = vmatpush2.msra.mxu0 0.0
    %1064 = vmatprep.subr.mxu0 0.0
    %1065 = vmatpush2.msra.mxu0 0.0
    %1066 = vmatprep.subr.mxu0 0.0
    %1067 = vmatpush2.msra.mxu0 0.0
    %1068 = vmatprep.subr.mxu0 0.0
    %1069 = vmatpush2.msra.mxu0 0.0
    %1070 = vmatprep.subr.mxu0 0.0
    %1071 = vmatpush2.msra.mxu0 0.0
    %1072 = vmatprep.subr.mxu0 0.0
    %1073 = vmatpush2.msra.mxu0 0.0
    %1074 = vmatprep.subr.mxu0 0.0
    %1075 = vmatpush2.msra.mxu0 0.0
    %1076 = vmatprep.subr.mxu0 0.0
    %1077 = vmatpush2.msra.mxu0 0.0
    %1078 = vmatprep.subr.mxu0 0.0
    %1079 = vmatpush2.msra.mxu0 0.0
    %1080 = vmatprep.subr.mxu0 0.0
    %1081 = vmatpush2.msra.mxu0 0.0
    %1082 = vmatprep.subr.mxu0 0.0
    %1083 = vmatpush2.msra.mxu0 0.0
    %1084 = vmatprep.mubr.f32.mxu0 0.0
    %1085 = vmatmul.mubr.f32.gmra.mxu0 %v1018
    %v1086 = vpop.f32.mrf.mxu0
    %v1087 = vadd.f32 0.0, %v1086
    %v1088 = vpop.f32.mrf.mxu0
    %1089 = vdwg.mxu0
    %v1090 = vadd.f32 %v1016, %v1087
    %v1091 = vld [vmem:[#allocation3 + $0x18] sm:$0xff]
    %v1093 = vsel %vm79, %v1013, 0
    %1095 = vmatprep.subr.mxu0 0.0
    %1096 = vmatpush1.msra.mxu0 0.0
    %1097 = vmatprep.subr.mxu0 0.0
    %1098 = vmatpush1.msra.mxu0 0.0
    %1099 = vmatprep.subr.mxu0 0.0
    %1100 = vmatpush1.msra.mxu0 0.0
    %1101 = vmatprep.subr.mxu0 0.0
    %1102 = vmatpush1.msra.mxu0 0.0
    %1103 = vmatprep.subr.mxu0 0.0
    %1104 = vmatpush1.msra.mxu0 0.0
    %1105 = vmatprep.subr.mxu0 0.0
    %1106 = vmatpush1.msra.mxu0 0.0
    %1107 = vmatprep.subr.mxu0 0.0
    %1108 = vmatpush1.msra.mxu0 0.0
    %1109 = vmatprep.subr.mxu0 0.0
    %1110 = vmatpush1.msra.mxu0 0.0
    %1111 = vmatprep.subr.mxu0 0.0
    %1112 = vmatpush1.msra.mxu0 0.0
    %1113 = vmatprep.subr.mxu0 0.0
    %1114 = vmatpush1.msra.mxu0 0.0
    %1115 = vmatprep.subr.mxu0 0.0
    %1116 = vmatpush1.msra.mxu0 0.0
    %1117 = vmatprep.subr.mxu0 0.0
    %1118 = vmatpush1.msra.mxu0 0.0
    %1119 = vmatprep.subr.mxu0 0.0
    %1120 = vmatpush1.msra.mxu0 %v346
    %1121 = vmatprep.subr.mxu0 0.0
    %1122 = vmatpush1.msra.mxu0 %v345
    %1123 = vmatprep.subr.mxu0 0.0
    %1124 = vmatpush1.msra.mxu0 %v344
    %1125 = vmatprep.subr.mxu0 0.0
    %1126 = vmatpush1.msra.mxu0 %v343
    %1127 = vmatprep.subr.mxu0 0.0
    %1128 = vmatpush2.msra.mxu0 0.0
    %1129 = vmatprep.subr.mxu0 0.0
    %1130 = vmatpush2.msra.mxu0 0.0
    %1131 = vmatprep.subr.mxu0 0.0
    %1132 = vmatpush2.msra.mxu0 0.0
    %1133 = vmatprep.subr.mxu0 0.0
    %1134 = vmatpush2.msra.mxu0 0.0
    %1135 = vmatprep.subr.mxu0 0.0
    %1136 = vmatpush2.msra.mxu0 0.0
    %1137 = vmatprep.subr.mxu0 0.0
    %1138 = vmatpush2.msra.mxu0 0.0
    %1139 = vmatprep.subr.mxu0 0.0
    %1140 = vmatpush2.msra.mxu0 0.0
    %1141 = vmatprep.subr.mxu0 0.0
    %1142 = vmatpush2.msra.mxu0 0.0
    %1143 = vmatprep.subr.mxu0 0.0
    %1144 = vmatpush2.msra.mxu0 0.0
    %1145 = vmatprep.subr.mxu0 0.0
    %1146 = vmatpush2.msra.mxu0 0.0
    %1147 = vmatprep.subr.mxu0 0.0
    %1148 = vmatpush2.msra.mxu0 0.0
    %1149 = vmatprep.subr.mxu0 0.0
    %1150 = vmatpush2.msra.mxu0 0.0
    %1151 = vmatprep.subr.mxu0 0.0
    %1152 = vmatpush2.msra.mxu0 0.0
    %1153 = vmatprep.subr.mxu0 0.0
    %1154 = vmatpush2.msra.mxu0 0.0
    %1155 = vmatprep.subr.mxu0 0.0
    %1156 = vmatpush2.msra.mxu0 0.0
    %1157 = vmatprep.subr.mxu0 0.0
    %1158 = vmatpush2.msra.mxu0 0.0
    %1159 = vmatprep.mubr.f32.mxu0 0.0
    %1160 = vmatmul.mubr.f32.gmra.mxu0 %v1093
    %v1161 = vpop.f32.mrf.mxu0
    %v1162 = vadd.f32 0.0, %v1161
    %v1163 = vpop.f32.mrf.mxu0
    %1164 = vdwg.mxu0
    %v1165 = vadd.f32 %v1091, %v1162
    %v1166 = vtanh.pop %v1090
    %v1167 = vsel %vm1012, %v1166, %v1005
    %v1168 = vtanh.pop %v1165
    %v1169 = vsel %vm1004, %v1168, %v1013
    %1170 = vst.msk [vmem:[#allocation4 + $0x20] sm:$0xff] %vm79, %v1167
    %1171 = vst.msk [vmem:[#allocation5 + $0x18] sm:$0xff] %vm79, %v1169
    %v1172 = vld [vmem:[#allocation2 + $0x28] sm:$0xff]
    %v1174 = vsel %vm79, %v1167, 0
    %1176 = vmatprep.subr.mxu0 0.0
    %1177 = vmatpush1.msra.mxu0 0.0
    %1178 = vmatprep.subr.mxu0 0.0
    %1179 = vmatpush1.msra.mxu0 0.0
    %1180 = vmatprep.subr.mxu0 0.0
    %1181 = vmatpush1.msra.mxu0 0.0
    %1182 = vmatprep.subr.mxu0 0.0
    %1183 = vmatpush1.msra.mxu0 0.0
    %1184 = vmatprep.subr.mxu0 0.0
    %1185 = vmatpush1.msra.mxu0 0.0
    %1186 = vmatprep.subr.mxu0 0.0
    %1187 = vmatpush1.msra.mxu0 0.0
    %1188 = vmatprep.subr.mxu0 0.0
    %1189 = vmatpush1.msra.mxu0 0.0
    %1190 = vmatprep.subr.mxu0 0.0
    %1191 = vmatpush1.msra.mxu0 0.0
    %1192 = vmatprep.subr.mxu0 0.0
    %1193 = vmatpush1.msra.mxu0 0.0
    %1194 = vmatprep.subr.mxu0 0.0
    %1195 = vmatpush1.msra.mxu0 0.0
    %1196 = vmatprep.subr.mxu0 0.0
    %1197 = vmatpush1.msra.mxu0 0.0
    %1198 = vmatprep.subr.mxu0 0.0
    %1199 = vmatpush1.msra.mxu0 0.0
    %1200 = vmatprep.subr.mxu0 0.0
    %1201 = vmatpush1.msra.mxu0 %v341
    %1202 = vmatprep.subr.mxu0 0.0
    %1203 = vmatpush1.msra.mxu0 %v340
    %1204 = vmatprep.subr.mxu0 0.0
    %1205 = vmatpush1.msra.mxu0 %v339
    %1206 = vmatprep.subr.mxu0 0.0
    %1207 = vmatpush1.msra.mxu0 %v338
    %1208 = vmatprep.subr.mxu0 0.0
    %1209 = vmatpush2.msra.mxu0 0.0
    %1210 = vmatprep.subr.mxu0 0.0
    %1211 = vmatpush2.msra.mxu0 0.0
    %1212 = vmatprep.subr.mxu0 0.0
    %1213 = vmatpush2.msra.mxu0 0.0
    %1214 = vmatprep.subr.mxu0 0.0
    %1215 = vmatpush2.msra.mxu0 0.0
    %1216 = vmatprep.subr.mxu0 0.0
    %1217 = vmatpush2.msra.mxu0 0.0
    %1218 = vmatprep.subr.mxu0 0.0
    %1219 = vmatpush2.msra.mxu0 0.0
    %1220 = vmatprep.subr.mxu0 0.0
    %1221 = vmatpush2.msra.mxu0 0.0
    %1222 = vmatprep.subr.mxu0 0.0
    %1223 = vmatpush2.msra.mxu0 0.0
    %1224 = vmatprep.subr.mxu0 0.0
    %1225 = vmatpush2.msra.mxu0 0.0
    %1226 = vmatprep.subr.mxu0 0.0
    %1227 = vmatpush2.msra.mxu0 0.0
    %1228 = vmatprep.subr.mxu0 0.0
    %1229 = vmatpush2.msra.mxu0 0.0
    %1230 = vmatprep.subr.mxu0 0.0
    %1231 = vmatpush2.msra.mxu0 0.0
    %1232 = vmatprep.subr.mxu0 0.0
    %1233 = vmatpush2.msra.mxu0 0.0
    %1234 = vmatprep.subr.mxu0 0.0
    %1235 = vmatpush2.msra.mxu0 0.0
    %1236 = vmatprep.subr.mxu0 0.0
    %1237 = vmatpush2.msra.mxu0 0.0
    %1238 = vmatprep.subr.mxu0 0.0
    %1239 = vmatpush2.msra.mxu0 0.0
    %1240 = vmatprep.mubr.f32.mxu0 0.0
    %1241 = vmatmul.mubr.f32.gmra.mxu0 %v1174
    %v1242 = vpop.f32.mrf.mxu0
    %v1243 = vadd.f32 0.0, %v1242
    %v1244 = vpop.f32.mrf.mxu0
    %1245 = vdwg.mxu0
    %v1246 = vadd.f32 %v1172, %v1243
    %v1247 = vld [vmem:[#allocation3 + $0x10] sm:$0xff]
    %v1249 = vsel %vm79, %v1169, 0
    %1251 = vmatprep.subr.mxu0 0.0
    %1252 = vmatpush1.msra.mxu0 0.0
    %1253 = vmatprep.subr.mxu0 0.0
    %1254 = vmatpush1.msra.mxu0 0.0
    %1255 = vmatprep.subr.mxu0 0.0
    %1256 = vmatpush1.msra.mxu0 0.0
    %1257 = vmatprep.subr.mxu0 0.0
    %1258 = vmatpush1.msra.mxu0 0.0
    %1259 = vmatprep.subr.mxu0 0.0
    %1260 = vmatpush1.msra.mxu0 0.0
    %1261 = vmatprep.subr.mxu0 0.0
    %1262 = vmatpush1.msra.mxu0 0.0
    %1263 = vmatprep.subr.mxu0 0.0
    %1264 = vmatpush1.msra.mxu0 0.0
    %1265 = vmatprep.subr.mxu0 0.0
    %1266 = vmatpush1.msra.mxu0 0.0
    %1267 = vmatprep.subr.mxu0 0.0
    %1268 = vmatpush1.msra.mxu0 0.0
    %1269 = vmatprep.subr.mxu0 0.0
    %1270 = vmatpush1.msra.mxu0 0.0
    %1271 = vmatprep.subr.mxu0 0.0
    %1272 = vmatpush1.msra.mxu0 0.0
    %1273 = vmatprep.subr.mxu0 0.0
    %1274 = vmatpush1.msra.mxu0 0.0
    %1275 = vmatprep.subr.mxu0 0.0
    %1276 = vmatpush1.msra.mxu0 %v346
    %1277 = vmatprep.subr.mxu0 0.0
    %1278 = vmatpush1.msra.mxu0 %v345
    %1279 = vmatprep.subr.mxu0 0.0
    %1280 = vmatpush1.msra.mxu0 %v344
    %1281 = vmatprep.subr.mxu0 0.0
    %1282 = vmatpush1.msra.mxu0 %v343
    %1283 = vmatprep.subr.mxu0 0.0
    %1284 = vmatpush2.msra.mxu0 0.0
    %1285 = vmatprep.subr.mxu0 0.0
    %1286 = vmatpush2.msra.mxu0 0.0
    %1287 = vmatprep.subr.mxu0 0.0
    %1288 = vmatpush2.msra.mxu0 0.0
    %1289 = vmatprep.subr.mxu0 0.0
    %1290 = vmatpush2.msra.mxu0 0.0
    %1291 = vmatprep.subr.mxu0 0.0
    %1292 = vmatpush2.msra.mxu0 0.0
    %1293 = vmatprep.subr.mxu0 0.0
    %1294 = vmatpush2.msra.mxu0 0.0
    %1295 = vmatprep.subr.mxu0 0.0
    %1296 = vmatpush2.msra.mxu0 0.0
    %1297 = vmatprep.subr.mxu0 0.0
    %1298 = vmatpush2.msra.mxu0 0.0
    %1299 = vmatprep.subr.mxu0 0.0
    %1300 = vmatpush2.msra.mxu0 0.0
    %1301 = vmatprep.subr.mxu0 0.0
    %1302 = vmatpush2.msra.mxu0 0.0
    %1303 = vmatprep.subr.mxu0 0.0
    %1304 = vmatpush2.msra.mxu0 0.0
    %1305 = vmatprep.subr.mxu0 0.0
    %1306 = vmatpush2.msra.mxu0 0.0
    %1307 = vmatprep.subr.mxu0 0.0
    %1308 = vmatpush2.msra.mxu0 0.0
    %1309 = vmatprep.subr.mxu0 0.0
    %1310 = vmatpush2.msra.mxu0 0.0
    %1311 = vmatprep.subr.mxu0 0.0
    %1312 = vmatpush2.msra.mxu0 0.0
    %1313 = vmatprep.subr.mxu0 0.0
    %1314 = vmatpush2.msra.mxu0 0.0
    %1315 = vmatprep.mubr.f32.mxu0 0.0
    %1316 = vmatmul.mubr.f32.gmra.mxu0 %v1249
    %v1317 = vpop.f32.mrf.mxu0
    %v1318 = vadd.f32 0.0, %v1317
    %v1319 = vpop.f32.mrf.mxu0
    %1320 = vdwg.mxu0
    %v1321 = vadd.f32 %v1247, %v1318
    %v1322 = vtanh.pop %v1246
    %v1323 = vsel %vm844, %v1322, %v1167
    %v1324 = vtanh.pop %v1321
    %v1325 = vsel %vm836, %v1324, %v1169
    %1326 = vst.msk [vmem:[#allocation4 + $0x28] sm:$0xff] %vm79, %v1323
    %1327 = vst.msk [vmem:[#allocation5 + $0x10] sm:$0xff] %vm79, %v1325
    %v1328 = vld [vmem:[#allocation2 + $0x30] sm:$0xff]
    %v1330 = vsel %vm79, %v1323, 0
    %1332 = vmatprep.subr.mxu0 0.0
    %1333 = vmatpush1.msra.mxu0 0.0
    %1334 = vmatprep.subr.mxu0 0.0
    %1335 = vmatpush1.msra.mxu0 0.0
    %1336 = vmatprep.subr.mxu0 0.0
    %1337 = vmatpush1.msra.mxu0 0.0
    %1338 = vmatprep.subr.mxu0 0.0
    %1339 = vmatpush1.msra.mxu0 0.0
    %1340 = vmatprep.subr.mxu0 0.0
    %1341 = vmatpush1.msra.mxu0 0.0
    %1342 = vmatprep.subr.mxu0 0.0
    %1343 = vmatpush1.msra.mxu0 0.0
    %1344 = vmatprep.subr.mxu0 0.0
    %1345 = vmatpush1.msra.mxu0 0.0
    %1346 = vmatprep.subr.mxu0 0.0
    %1347 = vmatpush1.msra.mxu0 0.0
    %1348 = vmatprep.subr.mxu0 0.0
    %1349 = vmatpush1.msra.mxu0 0.0
    %1350 = vmatprep.subr.mxu0 0.0
    %1351 = vmatpush1.msra.mxu0 0.0
    %1352 = vmatprep.subr.mxu0 0.0
    %1353 = vmatpush1.msra.mxu0 0.0
    %1354 = vmatprep.subr.mxu0 0.0
    %1355 = vmatpush1.msra.mxu0 0.0
    %1356 = vmatprep.subr.mxu0 0.0
    %1357 = vmatpush1.msra.mxu0 %v341
    %1358 = vmatprep.subr.mxu0 0.0
    %1359 = vmatpush1.msra.mxu0 %v340
    %1360 = vmatprep.subr.mxu0 0.0
    %1361 = vmatpush1.msra.mxu0 %v339
    %1362 = vmatprep.subr.mxu0 0.0
    %1363 = vmatpush1.msra.mxu0 %v338
    %1364 = vmatprep.subr.mxu0 0.0
    %1365 = vmatpush2.msra.mxu0 0.0
    %1366 = vmatprep.subr.mxu0 0.0
    %1367 = vmatpush2.msra.mxu0 0.0
    %1368 = vmatprep.subr.mxu0 0.0
    %1369 = vmatpush2.msra.mxu0 0.0
    %1370 = vmatprep.subr.mxu0 0.0
    %1371 = vmatpush2.msra.mxu0 0.0
    %1372 = vmatprep.subr.mxu0 0.0
    %1373 = vmatpush2.msra.mxu0 0.0
    %1374 = vmatprep.subr.mxu0 0.0
    %1375 = vmatpush2.msra.mxu0 0.0
    %1376 = vmatprep.subr.mxu0 0.0
    %1377 = vmatpush2.msra.mxu0 0.0
    %1378 = vmatprep.subr.mxu0 0.0
    %1379 = vmatpush2.msra.mxu0 0.0
    %1380 = vmatprep.subr.mxu0 0.0
    %1381 = vmatpush2.msra.mxu0 0.0
    %1382 = vmatprep.subr.mxu0 0.0
    %1383 = vmatpush2.msra.mxu0 0.0
    %1384 = vmatprep.subr.mxu0 0.0
    %1385 = vmatpush2.msra.mxu0 0.0
    %1386 = vmatprep.subr.mxu0 0.0
    %1387 = vmatpush2.msra.mxu0 0.0
    %1388 = vmatprep.subr.mxu0 0.0
    %1389 = vmatpush2.msra.mxu0 0.0
    %1390 = vmatprep.subr.mxu0 0.0
    %1391 = vmatpush2.msra.mxu0 0.0
    %1392 = vmatprep.subr.mxu0 0.0
    %1393 = vmatpush2.msra.mxu0 0.0
    %1394 = vmatprep.subr.mxu0 0.0
    %1395 = vmatpush2.msra.mxu0 0.0
    %1396 = vmatprep.mubr.f32.mxu0 0.0
    %1397 = vmatmul.mubr.f32.gmra.mxu0 %v1330
    %v1398 = vpop.f32.mrf.mxu0
    %v1399 = vadd.f32 0.0, %v1398
    %v1400 = vpop.f32.mrf.mxu0
    %1401 = vdwg.mxu0
    %v1402 = vadd.f32 %v1328, %v1399
    %v1403 = vld [vmem:[#allocation3 + $0x8] sm:$0xff]
    %v1405 = vsel %vm79, %v1325, 0
    %1407 = vmatprep.subr.mxu0 0.0
    %1408 = vmatpush1.msra.mxu0 0.0
    %1409 = vmatprep.subr.mxu0 0.0
    %1410 = vmatpush1.msra.mxu0 0.0
    %1411 = vmatprep.subr.mxu0 0.0
    %1412 = vmatpush1.msra.mxu0 0.0
    %1413 = vmatprep.subr.mxu0 0.0
    %1414 = vmatpush1.msra.mxu0 0.0
    %1415 = vmatprep.subr.mxu0 0.0
    %1416 = vmatpush1.msra.mxu0 0.0
    %1417 = vmatprep.subr.mxu0 0.0
    %1418 = vmatpush1.msra.mxu0 0.0
    %1419 = vmatprep.subr.mxu0 0.0
    %1420 = vmatpush1.msra.mxu0 0.0
    %1421 = vmatprep.subr.mxu0 0.0
    %1422 = vmatpush1.msra.mxu0 0.0
    %1423 = vmatprep.subr.mxu0 0.0
    %1424 = vmatpush1.msra.mxu0 0.0
    %1425 = vmatprep.subr.mxu0 0.0
    %1426 = vmatpush1.msra.mxu0 0.0
    %1427 = vmatprep.subr.mxu0 0.0
    %1428 = vmatpush1.msra.mxu0 0.0
    %1429 = vmatprep.subr.mxu0 0.0
    %1430 = vmatpush1.msra.mxu0 0.0
    %1431 = vmatprep.subr.mxu0 0.0
    %1432 = vmatpush1.msra.mxu0 %v346
    %1433 = vmatprep.subr.mxu0 0.0
    %1434 = vmatpush1.msra.mxu0 %v345
    %1435 = vmatprep.subr.mxu0 0.0
    %1436 = vmatpush1.msra.mxu0 %v344
    %1437 = vmatprep.subr.mxu0 0.0
    %1438 = vmatpush1.msra.mxu0 %v343
    %1439 = vmatprep.subr.mxu0 0.0
    %1440 = vmatpush2.msra.mxu0 0.0
    %1441 = vmatprep.subr.mxu0 0.0
    %1442 = vmatpush2.msra.mxu0 0.0
    %1443 = vmatprep.subr.mxu0 0.0
    %1444 = vmatpush2.msra.mxu0 0.0
    %1445 = vmatprep.subr.mxu0 0.0
    %1446 = vmatpush2.msra.mxu0 0.0
    %1447 = vmatprep.subr.mxu0 0.0
    %1448 = vmatpush2.msra.mxu0 0.0
    %1449 = vmatprep.subr.mxu0 0.0
    %1450 = vmatpush2.msra.mxu0 0.0
    %1451 = vmatprep.subr.mxu0 0.0
    %1452 = vmatpush2.msra.mxu0 0.0
    %1453 = vmatprep.subr.mxu0 0.0
    %1454 = vmatpush2.msra.mxu0 0.0
    %1455 = vmatprep.subr.mxu0 0.0
    %1456 = vmatpush2.msra.mxu0 0.0
    %1457 = vmatprep.subr.mxu0 0.0
    %1458 = vmatpush2.msra.mxu0 0.0
    %1459 = vmatprep.subr.mxu0 0.0
    %1460 = vmatpush2.msra.mxu0 0.0
    %1461 = vmatprep.subr.mxu0 0.0
    %1462 = vmatpush2.msra.mxu0 0.0
    %1463 = vmatprep.subr.mxu0 0.0
    %1464 = vmatpush2.msra.mxu0 0.0
    %1465 = vmatprep.subr.mxu0 0.0
    %1466 = vmatpush2.msra.mxu0 0.0
    %1467 = vmatprep.subr.mxu0 0.0
    %1468 = vmatpush2.msra.mxu0 0.0
    %1469 = vmatprep.subr.mxu0 0.0
    %1470 = vmatpush2.msra.mxu0 0.0
    %1471 = vmatprep.mubr.f32.mxu0 0.0
    %1472 = vmatmul.mubr.f32.gmra.mxu0 %v1405
    %v1473 = vpop.f32.mrf.mxu0
    %v1474 = vadd.f32 0.0, %v1473
    %v1475 = vpop.f32.mrf.mxu0
    %1476 = vdwg.mxu0
    %v1477 = vadd.f32 %v1403, %v1474
    %v1478 = vtanh.pop %v1402
    %v1479 = vsel %vm676, %v1478, %v1323
    %v1480 = vtanh.pop %v1477
    %v1481 = vsel %vm668, %v1480, %v1325
    %1482 = vst.msk [vmem:[#allocation4 + $0x30] sm:$0xff] %vm79, %v1479
    %1483 = vst.msk [vmem:[#allocation5 + $0x8] sm:$0xff] %vm79, %v1481
    %v1484 = vld [vmem:[#allocation2 + $0x38] sm:$0xff]
    %v1486 = vsel %vm79, %v1479, 0
    %1488 = vmatprep.subr.mxu0 0.0
    %1489 = vmatpush1.msra.mxu0 0.0
    %1490 = vmatprep.subr.mxu0 0.0
    %1491 = vmatpush1.msra.mxu0 0.0
    %1492 = vmatprep.subr.mxu0 0.0
    %1493 = vmatpush1.msra.mxu0 0.0
    %1494 = vmatprep.subr.mxu0 0.0
    %1495 = vmatpush1.msra.mxu0 0.0
    %1496 = vmatprep.subr.mxu0 0.0
    %1497 = vmatpush1.msra.mxu0 0.0
    %1498 = vmatprep.subr.mxu0 0.0
    %1499 = vmatpush1.msra.mxu0 0.0
    %1500 = vmatprep.subr.mxu0 0.0
    %1501 = vmatpush1.msra.mxu0 0.0
    %1502 = vmatprep.subr.mxu0 0.0
    %1503 = vmatpush1.msra.mxu0 0.0
    %1504 = vmatprep.subr.mxu0 0.0
    %1505 = vmatpush1.msra.mxu0 0.0
    %1506 = vmatprep.subr.mxu0 0.0
    %1507 = vmatpush1.msra.mxu0 0.0
    %1508 = vmatprep.subr.mxu0 0.0
    %1509 = vmatpush1.msra.mxu0 0.0
    %1510 = vmatprep.subr.mxu0 0.0
    %1511 = vmatpush1.msra.mxu0 0.0
    %1512 = vmatprep.subr.mxu0 0.0
    %1513 = vmatpush1.msra.mxu0 %v341
    %1514 = vmatprep.subr.mxu0 0.0
    %1515 = vmatpush1.msra.mxu0 %v340
    %1516 = vmatprep.subr.mxu0 0.0
    %1517 = vmatpush1.msra.mxu0 %v339
    %1518 = vmatprep.subr.mxu0 0.0
    %1519 = vmatpush1.msra.mxu0 %v338
    %1520 = vmatprep.subr.mxu0 0.0
    %1521 = vmatpush2.msra.mxu0 0.0
    %1522 = vmatprep.subr.mxu0 0.0
    %1523 = vmatpush2.msra.mxu0 0.0
    %1524 = vmatprep.subr.mxu0 0.0
    %1525 = vmatpush2.msra.mxu0 0.0
    %1526 = vmatprep.subr.mxu0 0.0
    %1527 = vmatpush2.msra.mxu0 0.0
    %1528 = vmatprep.subr.mxu0 0.0
    %1529 = vmatpush2.msra.mxu0 0.0
    %1530 = vmatprep.subr.mxu0 0.0
    %1531 = vmatpush2.msra.mxu0 0.0
    %1532 = vmatprep.subr.mxu0 0.0
    %1533 = vmatpush2.msra.mxu0 0.0
    %1534 = vmatprep.subr.mxu0 0.0
    %1535 = vmatpush2.msra.mxu0 0.0
    %1536 = vmatprep.subr.mxu0 0.0
    %1537 = vmatpush2.msra.mxu0 0.0
    %1538 = vmatprep.subr.mxu0 0.0
    %1539 = vmatpush2.msra.mxu0 0.0
    %1540 = vmatprep.subr.mxu0 0.0
    %1541 = vmatpush2.msra.mxu0 0.0
    %1542 = vmatprep.subr.mxu0 0.0
    %1543 = vmatpush2.msra.mxu0 0.0
    %1544 = vmatprep.subr.mxu0 0.0
    %1545 = vmatpush2.msra.mxu0 0.0
    %1546 = vmatprep.subr.mxu0 0.0
    %1547 = vmatpush2.msra.mxu0 0.0
    %1548 = vmatprep.subr.mxu0 0.0
    %1549 = vmatpush2.msra.mxu0 0.0
    %1550 = vmatprep.subr.mxu0 0.0
    %1551 = vmatpush2.msra.mxu0 0.0
    %1552 = vmatprep.mubr.f32.mxu0 0.0
    %1553 = vmatmul.mubr.f32.gmra.mxu0 %v1486
    %v1554 = vpop.f32.mrf.mxu0
    %v1555 = vadd.f32 0.0, %v1554
    %v1556 = vpop.f32.mrf.mxu0
    %1557 = vdwg.mxu0
    %v1558 = vadd.f32 %v1484, %v1555
    %v1559 = vld [vmem:[#allocation3] sm:$0xff]
    %v1561 = vsel %vm79, %v1481, 0
    %1563 = vmatprep.subr.mxu0 0.0
    %1564 = vmatpush1.msra.mxu0 0.0
    %1565 = vmatprep.subr.mxu0 0.0
    %1566 = vmatpush1.msra.mxu0 0.0
    %1567 = vmatprep.subr.mxu0 0.0
    %1568 = vmatpush1.msra.mxu0 0.0
    %1569 = vmatprep.subr.mxu0 0.0
    %1570 = vmatpush1.msra.mxu0 0.0
    %1571 = vmatprep.subr.mxu0 0.0
    %1572 = vmatpush1.msra.mxu0 0.0
    %1573 = vmatprep.subr.mxu0 0.0
    %1574 = vmatpush1.msra.mxu0 0.0
    %1575 = vmatprep.subr.mxu0 0.0
    %1576 = vmatpush1.msra.mxu0 0.0
    %1577 = vmatprep.subr.mxu0 0.0
    %1578 = vmatpush1.msra.mxu0 0.0
    %1579 = vmatprep.subr.mxu0 0.0
    %1580 = vmatpush1.msra.mxu0 0.0
    %1581 = vmatprep.subr.mxu0 0.0
    %1582 = vmatpush1.msra.mxu0 0.0
    %1583 = vmatprep.subr.mxu0 0.0
    %1584 = vmatpush1.msra.mxu0 0.0
    %1585 = vmatprep.subr.mxu0 0.0
    %1586 = vmatpush1.msra.mxu0 0.0
    %1587 = vmatprep.subr.mxu0 0.0
    %1588 = vmatpush1.msra.mxu0 %v346
    %1589 = vmatprep.subr.mxu0 0.0
    %1590 = vmatpush1.msra.mxu0 %v345
    %1591 = vmatprep.subr.mxu0 0.0
    %1592 = vmatpush1.msra.mxu0 %v344
    %1593 = vmatprep.subr.mxu0 0.0
    %1594 = vmatpush1.msra.mxu0 %v343
    %1595 = vmatprep.subr.mxu0 0.0
    %1596 = vmatpush2.msra.mxu0 0.0
    %1597 = vmatprep.subr.mxu0 0.0
    %1598 = vmatpush2.msra.mxu0 0.0
    %1599 = vmatprep.subr.mxu0 0.0
    %1600 = vmatpush2.msra.mxu0 0.0
    %1601 = vmatprep.subr.mxu0 0.0
    %1602 = vmatpush2.msra.mxu0 0.0
    %1603 = vmatprep.subr.mxu0 0.0
    %1604 = vmatpush2.msra.mxu0 0.0
    %1605 = vmatprep.subr.mxu0 0.0
    %1606 = vmatpush2.msra.mxu0 0.0
    %1607 = vmatprep.subr.mxu0 0.0
    %1608 = vmatpush2.msra.mxu0 0.0
    %1609 = vmatprep.subr.mxu0 0.0
    %1610 = vmatpush2.msra.mxu0 0.0
    %1611 = vmatprep.subr.mxu0 0.0
    %1612 = vmatpush2.msra.mxu0 0.0
    %1613 = vmatprep.subr.mxu0 0.0
    %1614 = vmatpush2.msra.mxu0 0.0
    %1615 = vmatprep.subr.mxu0 0.0
    %1616 = vmatpush2.msra.mxu0 0.0
    %1617 = vmatprep.subr.mxu0 0.0
    %1618 = vmatpush2.msra.mxu0 0.0
    %1619 = vmatprep.subr.mxu0 0.0
    %1620 = vmatpush2.msra.mxu0 0.0
    %1621 = vmatprep.subr.mxu0 0.0
    %1622 = vmatpush2.msra.mxu0 0.0
    %1623 = vmatprep.subr.mxu0 0.0
    %1624 = vmatpush2.msra.mxu0 0.0
    %1625 = vmatprep.subr.mxu0 0.0
    %1626 = vmatpush2.msra.mxu0 0.0
    %1627 = vmatprep.mubr.f32.mxu0 0.0
    %1628 = vmatmul.mubr.f32.gmra.mxu0 %v1561
    %v1629 = vpop.f32.mrf.mxu0
    %v1630 = vadd.f32 0.0, %v1629
    %v1631 = vpop.f32.mrf.mxu0
    %1632 = vdwg.mxu0
    %v1633 = vadd.f32 %v1559, %v1630
    %v1634 = vtanh.pop %v1558
    %v1635 = vsel %vm508, %v1634, %v1479
    %v1636 = vtanh.pop %v1633
    %v1637 = vsel %vm500, %v1636, %v1481
    %1638 = vst.msk [vmem:[#allocation4 + $0x38] sm:$0xff] %vm79, %v1635
    %1639 = vst.msk [vmem:[#allocation5] sm:$0xff] %vm79, %v1637
    %v1640 = vld [vmem:[#allocation4] sm:$0xff]
    %v1641 = vld [vmem:[#allocation4 + $0x8] sm:$0xff]
    %v1642 = vld [vmem:[#allocation4 + $0x10] sm:$0xff]
    %v1643 = vld [vmem:[#allocation4 + $0x18] sm:$0xff]
    %v1644 = vld [vmem:[#allocation4 + $0x20] sm:$0xff]
    %v1645 = vld [vmem:[#allocation4 + $0x28] sm:$0xff]
    %v1646 = vld [vmem:[#allocation4 + $0x30] sm:$0xff]
    %v1647 = vld [vmem:[#allocation4 + $0x38] sm:$0xff]
    %v1648 = vld [vmem:[#allocation5] sm:$0xff]
    %v1649 = vld [vmem:[#allocation5 + $0x8] sm:$0xff]
    %v1650 = vld [vmem:[#allocation5 + $0x10] sm:$0xff]
    %v1651 = vld [vmem:[#allocation5 + $0x18] sm:$0xff]
    %v1652 = vld [vmem:[#allocation5 + $0x20] sm:$0xff]
    %v1653 = vld [vmem:[#allocation5 + $0x28] sm:$0xff]
    %v1654 = vld [vmem:[#allocation5 + $0x30] sm:$0xff]
    %v1655 = vld [vmem:[#allocation5 + $0x38] sm:$0xff]
    %v1656 = vld [vmem:[#allocation8] sm:$0xff]
    %v1657 = vld [vmem:[#allocation8 + $0x8] sm:$0xff]
    %v1658 = vld [vmem:[#allocation8 + $0x10] sm:$0xff]
    %v1659 = vld [vmem:[#allocation8 + $0x18] sm:$0xff]
    %s1660 = scalar_lea.vmem [#allocation8], 64
    %v1661 = vld [vmem:[%s1660] sm:$0xff]
    %v1662 = vld [vmem:[%s1660 + $0x8] sm:$0xff]
    %v1663 = vld [vmem:[%s1660 + $0x10] sm:$0xff]
    %v1664 = vld [vmem:[%s1660 + $0x18] sm:$0xff]
    %v1666 = vsel %vm79, %v1648, 0
    %v1669 = vsel %vm79, %v1649, 0
    %v1672 = vsel %vm79, %v1650, 0
    %v1675 = vsel %vm79, %v1651, 0
    %v1678 = vsel %vm79, %v1652, 0
    %v1681 = vsel %vm79, %v1653, 0
    %v1684 = vsel %vm79, %v1654, 0
    %v1687 = vsel %vm79, %v1655, 0
    %1689 = vmatprep.subr.mxu0 0.0
    %1690 = vmatpush1.msra.mxu0 0.0
    %1691 = vmatprep.subr.mxu0 0.0
    %1692 = vmatpush1.msra.mxu0 0.0
    %1693 = vmatprep.subr.mxu0 0.0
    %1694 = vmatpush1.msra.mxu0 0.0
    %1695 = vmatprep.subr.mxu0 0.0
    %1696 = vmatpush1.msra.mxu0 0.0
    %1697 = vmatprep.subr.mxu0 0.0
    %1698 = vmatpush1.msra.mxu0 0.0
    %1699 = vmatprep.subr.mxu0 0.0
    %1700 = vmatpush1.msra.mxu0 0.0
    %1701 = vmatprep.subr.mxu0 0.0
    %1702 = vmatpush1.msra.mxu0 0.0
    %1703 = vmatprep.subr.mxu0 0.0
    %1704 = vmatpush1.msra.mxu0 0.0
    %1705 = vmatprep.subr.mxu0 0.0
    %1706 = vmatpush1.msra.mxu0 0.0
    %1707 = vmatprep.subr.mxu0 0.0
    %1708 = vmatpush1.msra.mxu0 0.0
    %1709 = vmatprep.subr.mxu0 0.0
    %1710 = vmatpush1.msra.mxu0 0.0
    %1711 = vmatprep.subr.mxu0 0.0
    %1712 = vmatpush1.msra.mxu0 0.0
    %1713 = vmatprep.subr.mxu0 0.0
    %1714 = vmatpush1.msra.mxu0 %v1664
    %1715 = vmatprep.subr.mxu0 0.0
    %1716 = vmatpush1.msra.mxu0 %v1663
    %1717 = vmatprep.subr.mxu0 0.0
    %1718 = vmatpush1.msra.mxu0 %v1662
    %1719 = vmatprep.subr.mxu0 0.0
    %1720 = vmatpush1.msra.mxu0 %v1661
    %1721 = vmatprep.subr.mxu0 0.0
    %1722 = vmatpush2.msra.mxu0 0.0
    %1723 = vmatprep.subr.mxu0 0.0
    %1724 = vmatpush2.msra.mxu0 0.0
    %1725 = vmatprep.subr.mxu0 0.0
    %1726 = vmatpush2.msra.mxu0 0.0
    %1727 = vmatprep.subr.mxu0 0.0
    %1728 = vmatpush2.msra.mxu0 0.0
    %1729 = vmatprep.subr.mxu0 0.0
    %1730 = vmatpush2.msra.mxu0 0.0
    %1731 = vmatprep.subr.mxu0 0.0
    %1732 = vmatpush2.msra.mxu0 0.0
    %1733 = vmatprep.subr.mxu0 0.0
    %1734 = vmatpush2.msra.mxu0 0.0
    %1735 = vmatprep.subr.mxu0 0.0
    %1736 = vmatpush2.msra.mxu0 0.0
    %1737 = vmatprep.subr.mxu0 0.0
    %1738 = vmatpush2.msra.mxu0 0.0
    %1739 = vmatprep.subr.mxu0 0.0
    %1740 = vmatpush2.msra.mxu0 0.0
    %1741 = vmatprep.subr.mxu0 0.0
    %1742 = vmatpush2.msra.mxu0 0.0
    %1743 = vmatprep.subr.mxu0 0.0
    %1744 = vmatpush2.msra.mxu0 0.0
    %1745 = vmatprep.subr.mxu0 0.0
    %1746 = vmatpush2.msra.mxu0 0.0
    %1747 = vmatprep.subr.mxu0 0.0
    %1748 = vmatpush2.msra.mxu0 0.0
    %1749 = vmatprep.subr.mxu0 0.0
    %1750 = vmatpush2.msra.mxu0 0.0
    %1751 = vmatprep.subr.mxu0 0.0
    %1752 = vmatpush2.msra.mxu0 0.0
    %1753 = vmatprep.mubr.f32.mxu0 0.0
    %1754 = vmatmul.mubr.f32.gmra.mxu0 %v1666
    %v1755 = vpop.f32.mrf.mxu0
    %v1756 = vadd.f32 0.0, %v1755
    %v1757 = vpop.f32.mrf.mxu0
    %1758 = vmatprep.mubr.f32.mxu0 0.0
    %1759 = vmatmul.mubr.f32.gmra.mxu0 %v1669
    %v1760 = vpop.f32.mrf.mxu0
    %v1761 = vadd.f32 0.0, %v1760
    %v1762 = vpop.f32.mrf.mxu0
    %1763 = vmatprep.mubr.f32.mxu0 0.0
    %1764 = vmatmul.mubr.f32.gmra.mxu0 %v1672
    %v1765 = vpop.f32.mrf.mxu0
    %v1766 = vadd.f32 0.0, %v1765
    %v1767 = vpop.f32.mrf.mxu0
    %1768 = vmatprep.mubr.f32.mxu0 0.0
    %1769 = vmatmul.mubr.f32.gmra.mxu0 %v1675
    %v1770 = vpop.f32.mrf.mxu0
    %v1771 = vadd.f32 0.0, %v1770
    %v1772 = vpop.f32.mrf.mxu0
    %1773 = vmatprep.mubr.f32.mxu0 0.0
    %1774 = vmatmul.mubr.f32.gmra.mxu0 %v1678
    %v1775 = vpop.f32.mrf.mxu0
    %v1776 = vadd.f32 0.0, %v1775
    %v1777 = vpop.f32.mrf.mxu0
    %1778 = vmatprep.mubr.f32.mxu0 0.0
    %1779 = vmatmul.mubr.f32.gmra.mxu0 %v1681
    %v1780 = vpop.f32.mrf.mxu0
    %v1781 = vadd.f32 0.0, %v1780
    %v1782 = vpop.f32.mrf.mxu0
    %1783 = vmatprep.mubr.f32.mxu0 0.0
    %1784 = vmatmul.mubr.f32.gmra.mxu0 %v1684
    %v1785 = vpop.f32.mrf.mxu0
    %v1786 = vadd.f32 0.0, %v1785
    %v1787 = vpop.f32.mrf.mxu0
    %1788 = vmatprep.mubr.f32.mxu0 0.0
    %1789 = vmatmul.mubr.f32.gmra.mxu0 %v1687
    %v1790 = vpop.f32.mrf.mxu0
    %v1791 = vadd.f32 0.0, %v1790
    %v1792 = vpop.f32.mrf.mxu0
    %1793 = vdwg.mxu0
    %v1795 = vsel %vm79, %v1640, 0
    %v1798 = vsel %vm79, %v1641, 0
    %v1801 = vsel %vm79, %v1642, 0
    %v1804 = vsel %vm79, %v1643, 0
    %v1807 = vsel %vm79, %v1644, 0
    %v1810 = vsel %vm79, %v1645, 0
    %v1813 = vsel %vm79, %v1646, 0
    %v1816 = vsel %vm79, %v1647, 0
    %1818 = vmatprep.subr.mxu0 0.0
    %1819 = vmatpush1.msra.mxu0 0.0
    %1820 = vmatprep.subr.mxu0 0.0
    %1821 = vmatpush1.msra.mxu0 0.0
    %1822 = vmatprep.subr.mxu0 0.0
    %1823 = vmatpush1.msra.mxu0 0.0
    %1824 = vmatprep.subr.mxu0 0.0
    %1825 = vmatpush1.msra.mxu0 0.0
    %1826 = vmatprep.subr.mxu0 0.0
    %1827 = vmatpush1.msra.mxu0 0.0
    %1828 = vmatprep.subr.mxu0 0.0
    %1829 = vmatpush1.msra.mxu0 0.0
    %1830 = vmatprep.subr.mxu0 0.0
    %1831 = vmatpush1.msra.mxu0 0.0
    %1832 = vmatprep.subr.mxu0 0.0
    %1833 = vmatpush1.msra.mxu0 0.0
    %1834 = vmatprep.subr.mxu0 0.0
    %1835 = vmatpush1.msra.mxu0 0.0
    %1836 = vmatprep.subr.mxu0 0.0
    %1837 = vmatpush1.msra.mxu0 0.0
    %1838 = vmatprep.subr.mxu0 0.0
    %1839 = vmatpush1.msra.mxu0 0.0
    %1840 = vmatprep.subr.mxu0 0.0
    %1841 = vmatpush1.msra.mxu0 0.0
    %1842 = vmatprep.subr.mxu0 0.0
    %1843 = vmatpush1.msra.mxu0 %v1659
    %1844 = vmatprep.subr.mxu0 0.0
    %1845 = vmatpush1.msra.mxu0 %v1658
    %1846 = vmatprep.subr.mxu0 0.0
    %1847 = vmatpush1.msra.mxu0 %v1657
    %1848 = vmatprep.subr.mxu0 0.0
    %1849 = vmatpush1.msra.mxu0 %v1656
    %1850 = vmatprep.subr.mxu0 0.0
    %1851 = vmatpush2.msra.mxu0 0.0
    %1852 = vmatprep.subr.mxu0 0.0
    %1853 = vmatpush2.msra.mxu0 0.0
    %1854 = vmatprep.subr.mxu0 0.0
    %1855 = vmatpush2.msra.mxu0 0.0
    %1856 = vmatprep.subr.mxu0 0.0
    %1857 = vmatpush2.msra.mxu0 0.0
    %1858 = vmatprep.subr.mxu0 0.0
    %1859 = vmatpush2.msra.mxu0 0.0
    %1860 = vmatprep.subr.mxu0 0.0
    %1861 = vmatpush2.msra.mxu0 0.0
    %1862 = vmatprep.subr.mxu0 0.0
    %1863 = vmatpush2.msra.mxu0 0.0
    %1864 = vmatprep.subr.mxu0 0.0
    %1865 = vmatpush2.msra.mxu0 0.0
    %1866 = vmatprep.subr.mxu0 0.0
    %1867 = vmatpush2.msra.mxu0 0.0
    %1868 = vmatprep.subr.mxu0 0.0
    %1869 = vmatpush2.msra.mxu0 0.0
    %1870 = vmatprep.subr.mxu0 0.0
    %1871 = vmatpush2.msra.mxu0 0.0
    %1872 = vmatprep.subr.mxu0 0.0
    %1873 = vmatpush2.msra.mxu0 0.0
    %1874 = vmatprep.subr.mxu0 0.0
    %1875 = vmatpush2.msra.mxu0 0.0
    %1876 = vmatprep.subr.mxu0 0.0
    %1877 = vmatpush2.msra.mxu0 0.0
    %1878 = vmatprep.subr.mxu0 0.0
    %1879 = vmatpush2.msra.mxu0 0.0
    %1880 = vmatprep.subr.mxu0 0.0
    %1881 = vmatpush2.msra.mxu0 0.0
    %1882 = vmatprep.mubr.f32.mxu0 0.0
    %1883 = vmatmul.mubr.f32.gmra.mxu0 %v1795
    %v1884 = vpop.f32.mrf.mxu0
    %v1885 = vadd.f32 %v1756, %v1884
    %v1886 = vpop.f32.mrf.mxu0
    %1887 = vmatprep.mubr.f32.mxu0 0.0
    %1888 = vmatmul.mubr.f32.gmra.mxu0 %v1798
    %v1889 = vpop.f32.mrf.mxu0
    %v1890 = vadd.f32 %v1761, %v1889
    %v1891 = vpop.f32.mrf.mxu0
    %1892 = vmatprep.mubr.f32.mxu0 0.0
    %1893 = vmatmul.mubr.f32.gmra.mxu0 %v1801
    %v1894 = vpop.f32.mrf.mxu0
    %v1895 = vadd.f32 %v1766, %v1894
    %v1896 = vpop.f32.mrf.mxu0
    %1897 = vmatprep.mubr.f32.mxu0 0.0
    %1898 = vmatmul.mubr.f32.gmra.mxu0 %v1804
    %v1899 = vpop.f32.mrf.mxu0
    %v1900 = vadd.f32 %v1771, %v1899
    %v1901 = vpop.f32.mrf.mxu0
    %1902 = vmatprep.mubr.f32.mxu0 0.0
    %1903 = vmatmul.mubr.f32.gmra.mxu0 %v1807
    %v1904 = vpop.f32.mrf.mxu0
    %v1905 = vadd.f32 %v1776, %v1904
    %v1906 = vpop.f32.mrf.mxu0
    %1907 = vmatprep.mubr.f32.mxu0 0.0
    %1908 = vmatmul.mubr.f32.gmra.mxu0 %v1810
    %v1909 = vpop.f32.mrf.mxu0
    %v1910 = vadd.f32 %v1781, %v1909
    %v1911 = vpop.f32.mrf.mxu0
    %1912 = vmatprep.mubr.f32.mxu0 0.0
    %1913 = vmatmul.mubr.f32.gmra.mxu0 %v1813
    %v1914 = vpop.f32.mrf.mxu0
    %v1915 = vadd.f32 %v1786, %v1914
    %v1916 = vpop.f32.mrf.mxu0
    %1917 = vmatprep.mubr.f32.mxu0 0.0
    %1918 = vmatmul.mubr.f32.gmra.mxu0 %v1816
    %v1919 = vpop.f32.mrf.mxu0
    %v1920 = vadd.f32 %v1791, %v1919
    %v1921 = vpop.f32.mrf.mxu0
    %1922 = vdwg.mxu0
    %s1923 = scalar_lea.vmem [#allocation8], 32
    %v1924 = vld [vmem:[%s1923] sm:$0xff]
    %v1925 = vld [vmem:[%s1923 + $0x8] sm:$0xff]
    %v1926 = vld [vmem:[%s1923 + $0x10] sm:$0xff]
    %v1927 = vld [vmem:[%s1923 + $0x18] sm:$0xff]
    %s1928 = scalar_lea.vmem [#allocation8], 96
    %v1929 = vld [vmem:[%s1928] sm:$0xff]
    %v1930 = vld [vmem:[%s1928 + $0x8] sm:$0xff]
    %v1931 = vld [vmem:[%s1928 + $0x10] sm:$0xff]
    %v1932 = vld [vmem:[%s1928 + $0x18] sm:$0xff]
    %1933 = vmatprep.subr.mxu0 0.0
    %1934 = vmatpush1.msra.mxu0 0.0
    %1935 = vmatprep.subr.mxu0 0.0
    %1936 = vmatpush1.msra.mxu0 0.0
    %1937 = vmatprep.subr.mxu0 0.0
    %1938 = vmatpush1.msra.mxu0 0.0
    %1939 = vmatprep.subr.mxu0 0.0
    %1940 = vmatpush1.msra.mxu0 0.0
    %1941 = vmatprep.subr.mxu0 0.0
    %1942 = vmatpush1.msra.mxu0 0.0
    %1943 = vmatprep.subr.mxu0 0.0
    %1944 = vmatpush1.msra.mxu0 0.0
    %1945 = vmatprep.subr.mxu0 0.0
    %1946 = vmatpush1.msra.mxu0 0.0
    %1947 = vmatprep.subr.mxu0 0.0
    %1948 = vmatpush1.msra.mxu0 0.0
    %1949 = vmatprep.subr.mxu0 0.0
    %1950 = vmatpush1.msra.mxu0 0.0
    %1951 = vmatprep.subr.mxu0 0.0
    %1952 = vmatpush1.msra.mxu0 0.0
    %1953 = vmatprep.subr.mxu0 0.0
    %1954 = vmatpush1.msra.mxu0 0.0
    %1955 = vmatprep.subr.mxu0 0.0
    %1956 = vmatpush1.msra.mxu0 0.0
    %1957 = vmatprep.subr.mxu0 0.0
    %1958 = vmatpush1.msra.mxu0 %v1932
    %1959 = vmatprep.subr.mxu0 0.0
    %1960 = vmatpush1.msra.mxu0 %v1931
    %1961 = vmatprep.subr.mxu0 0.0
    %1962 = vmatpush1.msra.mxu0 %v1930
    %1963 = vmatprep.subr.mxu0 0.0
    %1964 = vmatpush1.msra.mxu0 %v1929
    %1965 = vmatprep.subr.mxu0 0.0
    %1966 = vmatpush2.msra.mxu0 0.0
    %1967 = vmatprep.subr.mxu0 0.0
    %1968 = vmatpush2.msra.mxu0 0.0
    %1969 = vmatprep.subr.mxu0 0.0
    %1970 = vmatpush2.msra.mxu0 0.0
    %1971 = vmatprep.subr.mxu0 0.0
    %1972 = vmatpush2.msra.mxu0 0.0
    %1973 = vmatprep.subr.mxu0 0.0
    %1974 = vmatpush2.msra.mxu0 0.0
    %1975 = vmatprep.subr.mxu0 0.0
    %1976 = vmatpush2.msra.mxu0 0.0
    %1977 = vmatprep.subr.mxu0 0.0
    %1978 = vmatpush2.msra.mxu0 0.0
    %1979 = vmatprep.subr.mxu0 0.0
    %1980 = vmatpush2.msra.mxu0 0.0
    %1981 = vmatprep.subr.mxu0 0.0
    %1982 = vmatpush2.msra.mxu0 0.0
    %1983 = vmatprep.subr.mxu0 0.0
    %1984 = vmatpush2.msra.mxu0 0.0
    %1985 = vmatprep.subr.mxu0 0.0
    %1986 = vmatpush2.msra.mxu0 0.0
    %1987 = vmatprep.subr.mxu0 0.0
    %1988 = vmatpush2.msra.mxu0 0.0
    %1989 = vmatprep.subr.mxu0 0.0
    %1990 = vmatpush2.msra.mxu0 0.0
    %1991 = vmatprep.subr.mxu0 0.0
    %1992 = vmatpush2.msra.mxu0 0.0
    %1993 = vmatprep.subr.mxu0 0.0
    %1994 = vmatpush2.msra.mxu0 0.0
    %1995 = vmatprep.subr.mxu0 0.0
    %1996 = vmatpush2.msra.mxu0 0.0
    %1997 = vmatprep.mubr.f32.mxu0 0.0
    %1998 = vmatmul.mubr.f32.gmra.mxu0 %v1666
    %v1999 = vpop.f32.mrf.mxu0
    %v2000 = vadd.f32 0.0, %v1999
    %v2001 = vpop.f32.mrf.mxu0
    %2002 = vmatprep.mubr.f32.mxu0 0.0
    %2003 = vmatmul.mubr.f32.gmra.mxu0 %v1669
    %v2004 = vpop.f32.mrf.mxu0
    %v2005 = vadd.f32 0.0, %v2004
    %v2006 = vpop.f32.mrf.mxu0
    %2007 = vmatprep.mubr.f32.mxu0 0.0
    %2008 = vmatmul.mubr.f32.gmra.mxu0 %v1672
    %v2009 = vpop.f32.mrf.mxu0
    %v2010 = vadd.f32 0.0, %v2009
    %v2011 = vpop.f32.mrf.mxu0
    %2012 = vmatprep.mubr.f32.mxu0 0.0
    %2013 = vmatmul.mubr.f32.gmra.mxu0 %v1675
    %v2014 = vpop.f32.mrf.mxu0
    %v2015 = vadd.f32 0.0, %v2014
    %v2016 = vpop.f32.mrf.mxu0
    %2017 = vmatprep.mubr.f32.mxu0 0.0
    %2018 = vmatmul.mubr.f32.gmra.mxu0 %v1678
    %v2019 = vpop.f32.mrf.mxu0
    %v2020 = vadd.f32 0.0, %v2019
    %v2021 = vpop.f32.mrf.mxu0
    %2022 = vmatprep.mubr.f32.mxu0 0.0
    %2023 = vmatmul.mubr.f32.gmra.mxu0 %v1681
    %v2024 = vpop.f32.mrf.mxu0
    %v2025 = vadd.f32 0.0, %v2024
    %v2026 = vpop.f32.mrf.mxu0
    %2027 = vmatprep.mubr.f32.mxu0 0.0
    %2028 = vmatmul.mubr.f32.gmra.mxu0 %v1684
    %v2029 = vpop.f32.mrf.mxu0
    %v2030 = vadd.f32 0.0, %v2029
    %v2031 = vpop.f32.mrf.mxu0
    %2032 = vmatprep.mubr.f32.mxu0 0.0
    %2033 = vmatmul.mubr.f32.gmra.mxu0 %v1687
    %v2034 = vpop.f32.mrf.mxu0
    %v2035 = vadd.f32 0.0, %v2034
    %v2036 = vpop.f32.mrf.mxu0
    %2037 = vdwg.mxu0
    %2038 = vmatprep.subr.mxu0 0.0
    %2039 = vmatpush1.msra.mxu0 0.0
    %2040 = vmatprep.subr.mxu0 0.0
    %2041 = vmatpush1.msra.mxu0 0.0
    %2042 = vmatprep.subr.mxu0 0.0
    %2043 = vmatpush1.msra.mxu0 0.0
    %2044 = vmatprep.subr.mxu0 0.0
    %2045 = vmatpush1.msra.mxu0 0.0
    %2046 = vmatprep.subr.mxu0 0.0
    %2047 = vmatpush1.msra.mxu0 0.0
    %2048 = vmatprep.subr.mxu0 0.0
    %2049 = vmatpush1.msra.mxu0 0.0
    %2050 = vmatprep.subr.mxu0 0.0
    %2051 = vmatpush1.msra.mxu0 0.0
    %2052 = vmatprep.subr.mxu0 0.0
    %2053 = vmatpush1.msra.mxu0 0.0
    %2054 = vmatprep.subr.mxu0 0.0
    %2055 = vmatpush1.msra.mxu0 0.0
    %2056 = vmatprep.subr.mxu0 0.0
    %2057 = vmatpush1.msra.mxu0 0.0
    %2058 = vmatprep.subr.mxu0 0.0
    %2059 = vmatpush1.msra.mxu0 0.0
    %2060 = vmatprep.subr.mxu0 0.0
    %2061 = vmatpush1.msra.mxu0 0.0
    %2062 = vmatprep.subr.mxu0 0.0
    %2063 = vmatpush1.msra.mxu0 %v1927
    %2064 = vmatprep.subr.mxu0 0.0
    %2065 = vmatpush1.msra.mxu0 %v1926
    %2066 = vmatprep.subr.mxu0 0.0
    %2067 = vmatpush1.msra.mxu0 %v1925
    %2068 = vmatprep.subr.mxu0 0.0
    %2069 = vmatpush1.msra.mxu0 %v1924
    %2070 = vmatprep.subr.mxu0 0.0
    %2071 = vmatpush2.msra.mxu0 0.0
    %2072 = vmatprep.subr.mxu0 0.0
    %2073 = vmatpush2.msra.mxu0 0.0
    %2074 = vmatprep.subr.mxu0 0.0
    %2075 = vmatpush2.msra.mxu0 0.0
    %2076 = vmatprep.subr.mxu0 0.0
    %2077 = vmatpush2.msra.mxu0 0.0
    %2078 = vmatprep.subr.mxu0 0.0
    %2079 = vmatpush2.msra.mxu0 0.0
    %2080 = vmatprep.subr.mxu0 0.0
    %2081 = vmatpush2.msra.mxu0 0.0
    %2082 = vmatprep.subr.mxu0 0.0
    %2083 = vmatpush2.msra.mxu0 0.0
    %2084 = vmatprep.subr.mxu0 0.0
    %2085 = vmatpush2.msra.mxu0 0.0
    %2086 = vmatprep.subr.mxu0 0.0
    %2087 = vmatpush2.msra.mxu0 0.0
    %2088 = vmatprep.subr.mxu0 0.0
    %2089 = vmatpush2.msra.mxu0 0.0
    %2090 = vmatprep.subr.mxu0 0.0
    %2091 = vmatpush2.msra.mxu0 0.0
    %2092 = vmatprep.subr.mxu0 0.0
    %2093 = vmatpush2.msra.mxu0 0.0
    %2094 = vmatprep.subr.mxu0 0.0
    %2095 = vmatpush2.msra.mxu0 0.0
    %2096 = vmatprep.subr.mxu0 0.0
    %2097 = vmatpush2.msra.mxu0 0.0
    %2098 = vmatprep.subr.mxu0 0.0
    %2099 = vmatpush2.msra.mxu0 0.0
    %2100 = vmatprep.subr.mxu0 0.0
    %2101 = vmatpush2.msra.mxu0 0.0
    %2102 = vmatprep.mubr.f32.mxu0 0.0
    %2103 = vmatmul.mubr.f32.gmra.mxu0 %v1795
    %v2104 = vpop.f32.mrf.mxu0
    %v2105 = vadd.f32 %v2000, %v2104
    %v2106 = vpop.f32.mrf.mxu0
    %2107 = vmatprep.mubr.f32.mxu0 0.0
    %2108 = vmatmul.mubr.f32.gmra.mxu0 %v1798
    %v2109 = vpop.f32.mrf.mxu0
    %v2110 = vadd.f32 %v2005, %v2109
    %v2111 = vpop.f32.mrf.mxu0
    %2112 = vmatprep.mubr.f32.mxu0 0.0
    %2113 = vmatmul.mubr.f32.gmra.mxu0 %v1801
    %v2114 = vpop.f32.mrf.mxu0
    %v2115 = vadd.f32 %v2010, %v2114
    %v2116 = vpop.f32.mrf.mxu0
    %2117 = vmatprep.mubr.f32.mxu0 0.0
    %2118 = vmatmul.mubr.f32.gmra.mxu0 %v1804
    %v2119 = vpop.f32.mrf.mxu0
    %v2120 = vadd.f32 %v2015, %v2119
    %v2121 = vpop.f32.mrf.mxu0
    %2122 = vmatprep.mubr.f32.mxu0 0.0
    %2123 = vmatmul.mubr.f32.gmra.mxu0 %v1807
    %v2124 = vpop.f32.mrf.mxu0
    %v2125 = vadd.f32 %v2020, %v2124
    %v2126 = vpop.f32.mrf.mxu0
    %2127 = vmatprep.mubr.f32.mxu0 0.0
    %2128 = vmatmul.mubr.f32.gmra.mxu0 %v1810
    %v2129 = vpop.f32.mrf.mxu0
    %v2130 = vadd.f32 %v2025, %v2129
    %v2131 = vpop.f32.mrf.mxu0
    %2132 = vmatprep.mubr.f32.mxu0 0.0
    %2133 = vmatmul.mubr.f32.gmra.mxu0 %v1813
    %v2134 = vpop.f32.mrf.mxu0
    %v2135 = vadd.f32 %v2030, %v2134
    %v2136 = vpop.f32.mrf.mxu0
    %2137 = vmatprep.mubr.f32.mxu0 0.0
    %2138 = vmatmul.mubr.f32.gmra.mxu0 %v1816
    %v2139 = vpop.f32.mrf.mxu0
    %v2140 = vadd.f32 %v2035, %v2139
    %v2141 = vpop.f32.mrf.mxu0
    %2142 = vdwg.mxu0
    %s2143 = scalar_lea.vmem %s6, 2
    %v2144 = vld [vmem:[%s2143] sm:$0x1]
    %v2146 = vlaneseq
    %v2147 = vshrl.u32 %v2146, 7
    %v2148 = vsub.s32 0, %v2147
    %v2149 = vrot.slane %v2144, %v2148
    %v2151 = vadd.f32 %v1885, %v2149
    %v2152 = vadd.f32 %v1890, %v2149
    %v2153 = vadd.f32 %v1895, %v2149
    %v2154 = vadd.f32 %v1900, %v2149
    %v2155 = vadd.f32 %v1905, %v2149
    %v2156 = vadd.f32 %v1910, %v2149
    %v2157 = vadd.f32 %v1915, %v2149
    %v2158 = vadd.f32 %v1920, %v2149
    %2159 = vst.msk [vmem:[#allocation2] sm:$0xff] %vm79, %v2151
    %2160 = vst.msk [vmem:[#allocation2 + $0x8] sm:$0xff] %vm79, %v2152
    %2161 = vst.msk [vmem:[#allocation2 + $0x10] sm:$0xff] %vm79, %v2153
    %2162 = vst.msk [vmem:[#allocation2 + $0x18] sm:$0xff] %vm79, %v2154
    %2163 = vst.msk [vmem:[#allocation2 + $0x20] sm:$0xff] %vm79, %v2155
    %2164 = vst.msk [vmem:[#allocation2 + $0x28] sm:$0xff] %vm79, %v2156
    %2165 = vst.msk [vmem:[#allocation2 + $0x30] sm:$0xff] %vm79, %v2157
    %2166 = vst.msk [vmem:[#allocation2 + $0x38] sm:$0xff] %vm79, %v2158
    %s2167 = scalar_lea.vmem %s6, 3
    %v2168 = vld [vmem:[%s2167] sm:$0x1]
    %v2170 = vlaneseq
    %v2171 = vshrl.u32 %v2170, 7
    %v2172 = vsub.s32 0, %v2171
    %v2173 = vrot.slane %v2168, %v2172
    %v2175 = vadd.f32 %v2105, %v2173
    %v2176 = vadd.f32 %v2110, %v2173
    %v2177 = vadd.f32 %v2115, %v2173
    %v2178 = vadd.f32 %v2120, %v2173
    %v2179 = vadd.f32 %v2125, %v2173
    %v2180 = vadd.f32 %v2130, %v2173
    %v2181 = vadd.f32 %v2135, %v2173
    %v2182 = vadd.f32 %v2140, %v2173
    %2183 = vst.msk [vmem:[#allocation3] sm:$0xff] %vm79, %v2175
    %2184 = vst.msk [vmem:[#allocation3 + $0x8] sm:$0xff] %vm79, %v2176
    %2185 = vst.msk [vmem:[#allocation3 + $0x10] sm:$0xff] %vm79, %v2177
    %2186 = vst.msk [vmem:[#allocation3 + $0x18] sm:$0xff] %vm79, %v2178
    %2187 = vst.msk [vmem:[#allocation3 + $0x20] sm:$0xff] %vm79, %v2179
    %2188 = vst.msk [vmem:[#allocation3 + $0x28] sm:$0xff] %vm79, %v2180
    %2189 = vst.msk [vmem:[#allocation3 + $0x30] sm:$0xff] %vm79, %v2181
    %2190 = vst.msk [vmem:[#allocation3 + $0x38] sm:$0xff] %vm79, %v2182
    %s2191 = scalar_lea.vmem [#allocation11], 64
    %v2192 = vld [vmem:[%s2191] sm:$0xff]
    %v2193 = vld [vmem:[%s2191 + $0x8] sm:$0xff]
    %v2194 = vld [vmem:[%s2191 + $0x10] sm:$0xff]
    %v2195 = vld [vmem:[%s2191 + $0x18] sm:$0xff]
    %s2196 = scalar_lea.vmem [#allocation11], 96
    %v2197 = vld [vmem:[%s2196] sm:$0xff]
    %v2198 = vld [vmem:[%s2196 + $0x8] sm:$0xff]
    %v2199 = vld [vmem:[%s2196 + $0x10] sm:$0xff]
    %v2200 = vld [vmem:[%s2196 + $0x18] sm:$0xff]
    %v2201 = vld [vmem:[#allocation2] sm:$0xff]
    %2202 = vmatprep.subr.mxu0 0.0
    %2203 = vmatpush1.msra.mxu0 0.0
    %2204 = vmatprep.subr.mxu0 0.0
    %2205 = vmatpush1.msra.mxu0 0.0
    %2206 = vmatprep.subr.mxu0 0.0
    %2207 = vmatpush1.msra.mxu0 0.0
    %2208 = vmatprep.subr.mxu0 0.0
    %2209 = vmatpush1.msra.mxu0 0.0
    %2210 = vmatprep.subr.mxu0 0.0
    %2211 = vmatpush1.msra.mxu0 0.0
    %2212 = vmatprep.subr.mxu0 0.0
    %2213 = vmatpush1.msra.mxu0 0.0
    %2214 = vmatprep.subr.mxu0 0.0
    %2215 = vmatpush1.msra.mxu0 0.0
    %2216 = vmatprep.subr.mxu0 0.0
    %2217 = vmatpush1.msra.mxu0 0.0
    %2218 = vmatprep.subr.mxu0 0.0
    %2219 = vmatpush1.msra.mxu0 0.0
    %2220 = vmatprep.subr.mxu0 0.0
    %2221 = vmatpush1.msra.mxu0 0.0
    %2222 = vmatprep.subr.mxu0 0.0
    %2223 = vmatpush1.msra.mxu0 0.0
    %2224 = vmatprep.subr.mxu0 0.0
    %2225 = vmatpush1.msra.mxu0 0.0
    %2226 = vmatprep.subr.mxu0 0.0
    %2227 = vmatpush1.msra.mxu0 %v2195
    %2228 = vmatprep.subr.mxu0 0.0
    %2229 = vmatpush1.msra.mxu0 %v2194
    %2230 = vmatprep.subr.mxu0 0.0
    %2231 = vmatpush1.msra.mxu0 %v2193
    %2232 = vmatprep.subr.mxu0 0.0
    %2233 = vmatpush1.msra.mxu0 %v2192
    %2234 = vmatprep.subr.mxu0 0.0
    %2235 = vmatpush2.msra.mxu0 0.0
    %2236 = vmatprep.subr.mxu0 0.0
    %2237 = vmatpush2.msra.mxu0 0.0
    %2238 = vmatprep.subr.mxu0 0.0
    %2239 = vmatpush2.msra.mxu0 0.0
    %2240 = vmatprep.subr.mxu0 0.0
    %2241 = vmatpush2.msra.mxu0 0.0
    %2242 = vmatprep.subr.mxu0 0.0
    %2243 = vmatpush2.msra.mxu0 0.0
    %2244 = vmatprep.subr.mxu0 0.0
    %2245 = vmatpush2.msra.mxu0 0.0
    %2246 = vmatprep.subr.mxu0 0.0
    %2247 = vmatpush2.msra.mxu0 0.0
    %2248 = vmatprep.subr.mxu0 0.0
    %2249 = vmatpush2.msra.mxu0 0.0
    %2250 = vmatprep.subr.mxu0 0.0
    %2251 = vmatpush2.msra.mxu0 0.0
    %2252 = vmatprep.subr.mxu0 0.0
    %2253 = vmatpush2.msra.mxu0 0.0
    %2254 = vmatprep.subr.mxu0 0.0
    %2255 = vmatpush2.msra.mxu0 0.0
    %2256 = vmatprep.subr.mxu0 0.0
    %2257 = vmatpush2.msra.mxu0 0.0
    %2258 = vmatprep.subr.mxu0 0.0
    %2259 = vmatpush2.msra.mxu0 0.0
    %2260 = vmatprep.subr.mxu0 0.0
    %2261 = vmatpush2.msra.mxu0 0.0
    %2262 = vmatprep.subr.mxu0 0.0
    %2263 = vmatpush2.msra.mxu0 0.0
    %2264 = vmatprep.subr.mxu0 0.0
    %2265 = vmatpush2.msra.mxu0 0.0
    %2266 = vmatprep.mubr.f32.mxu0 0.0
    %2267 = vmatmul.mubr.f32.gmra.mxu0 %v349
    %v2268 = vpop.f32.mrf.mxu0
    %v2269 = vadd.f32 0.0, %v2268
    %v2270 = vpop.f32.mrf.mxu0
    %2271 = vdwg.mxu0
    %v2272 = vadd.f32 %v2201, %v2269
    %v2273 = vld [vmem:[#allocation3 + $0x38] sm:$0xff]
    %2274 = vmatprep.subr.mxu0 0.0
    %2275 = vmatpush1.msra.mxu0 0.0
    %2276 = vmatprep.subr.mxu0 0.0
    %2277 = vmatpush1.msra.mxu0 0.0
    %2278 = vmatprep.subr.mxu0 0.0
    %2279 = vmatpush1.msra.mxu0 0.0
    %2280 = vmatprep.subr.mxu0 0.0
    %2281 = vmatpush1.msra.mxu0 0.0
    %2282 = vmatprep.subr.mxu0 0.0
    %2283 = vmatpush1.msra.mxu0 0.0
    %2284 = vmatprep.subr.mxu0 0.0
    %2285 = vmatpush1.msra.mxu0 0.0
    %2286 = vmatprep.subr.mxu0 0.0
    %2287 = vmatpush1.msra.mxu0 0.0
    %2288 = vmatprep.subr.mxu0 0.0
    %2289 = vmatpush1.msra.mxu0 0.0
    %2290 = vmatprep.subr.mxu0 0.0
    %2291 = vmatpush1.msra.mxu0 0.0
    %2292 = vmatprep.subr.mxu0 0.0
    %2293 = vmatpush1.msra.mxu0 0.0
    %2294 = vmatprep.subr.mxu0 0.0
    %2295 = vmatpush1.msra.mxu0 0.0
    %2296 = vmatprep.subr.mxu0 0.0
    %2297 = vmatpush1.msra.mxu0 0.0
    %2298 = vmatprep.subr.mxu0 0.0
    %2299 = vmatpush1.msra.mxu0 %v2200
    %2300 = vmatprep.subr.mxu0 0.0
    %2301 = vmatpush1.msra.mxu0 %v2199
    %2302 = vmatprep.subr.mxu0 0.0
    %2303 = vmatpush1.msra.mxu0 %v2198
    %2304 = vmatprep.subr.mxu0 0.0
    %2305 = vmatpush1.msra.mxu0 %v2197
    %2306 = vmatprep.subr.mxu0 0.0
    %2307 = vmatpush2.msra.mxu0 0.0
    %2308 = vmatprep.subr.mxu0 0.0
    %2309 = vmatpush2.msra.mxu0 0.0
    %2310 = vmatprep.subr.mxu0 0.0
    %2311 = vmatpush2.msra.mxu0 0.0
    %2312 = vmatprep.subr.mxu0 0.0
    %2313 = vmatpush2.msra.mxu0 0.0
    %2314 = vmatprep.subr.mxu0 0.0
    %2315 = vmatpush2.msra.mxu0 0.0
    %2316 = vmatprep.subr.mxu0 0.0
    %2317 = vmatpush2.msra.mxu0 0.0
    %2318 = vmatprep.subr.mxu0 0.0
    %2319 = vmatpush2.msra.mxu0 0.0
    %2320 = vmatprep.subr.mxu0 0.0
    %2321 = vmatpush2.msra.mxu0 0.0
    %2322 = vmatprep.subr.mxu0 0.0
    %2323 = vmatpush2.msra.mxu0 0.0
    %2324 = vmatprep.subr.mxu0 0.0
    %2325 = vmatpush2.msra.mxu0 0.0
    %2326 = vmatprep.subr.mxu0 0.0
    %2327 = vmatpush2.msra.mxu0 0.0
    %2328 = vmatprep.subr.mxu0 0.0
    %2329 = vmatpush2.msra.mxu0 0.0
    %2330 = vmatprep.subr.mxu0 0.0
    %2331 = vmatpush2.msra.mxu0 0.0
    %2332 = vmatprep.subr.mxu0 0.0
    %2333 = vmatpush2.msra.mxu0 0.0
    %2334 = vmatprep.subr.mxu0 0.0
    %2335 = vmatpush2.msra.mxu0 0.0
    %2336 = vmatprep.subr.mxu0 0.0
    %2337 = vmatpush2.msra.mxu0 0.0
    %2338 = vmatprep.mubr.f32.mxu0 0.0
    %2339 = vmatmul.mubr.f32.gmra.mxu0 %v349
    %v2340 = vpop.f32.mrf.mxu0
    %v2341 = vadd.f32 0.0, %v2340
    %v2342 = vpop.f32.mrf.mxu0
    %2343 = vdwg.mxu0
    %v2344 = vadd.f32 %v2273, %v2341
    %v2345 = vtanh.pop %v2272
    %v2346 = vsel %vm500, %v2345, 0.0
    %v2347 = vtanh.pop %v2344
    %v2348 = vsel %vm508, %v2347, 0.0
    %v2349 = vld [vmem:[#allocation2 + $0x8] sm:$0xff]
    %v2351 = vsel %vm79, %v2346, 0
    %2353 = vmatprep.subr.mxu0 0.0
    %2354 = vmatpush1.msra.mxu0 0.0
    %2355 = vmatprep.subr.mxu0 0.0
    %2356 = vmatpush1.msra.mxu0 0.0
    %2357 = vmatprep.subr.mxu0 0.0
    %2358 = vmatpush1.msra.mxu0 0.0
    %2359 = vmatprep.subr.mxu0 0.0
    %2360 = vmatpush1.msra.mxu0 0.0
    %2361 = vmatprep.subr.mxu0 0.0
    %2362 = vmatpush1.msra.mxu0 0.0
    %2363 = vmatprep.subr.mxu0 0.0
    %2364 = vmatpush1.msra.mxu0 0.0
    %2365 = vmatprep.subr.mxu0 0.0
    %2366 = vmatpush1.msra.mxu0 0.0
    %2367 = vmatprep.subr.mxu0 0.0
    %2368 = vmatpush1.msra.mxu0 0.0
    %2369 = vmatprep.subr.mxu0 0.0
    %2370 = vmatpush1.msra.mxu0 0.0
    %2371 = vmatprep.subr.mxu0 0.0
    %2372 = vmatpush1.msra.mxu0 0.0
    %2373 = vmatprep.subr.mxu0 0.0
    %2374 = vmatpush1.msra.mxu0 0.0
    %2375 = vmatprep.subr.mxu0 0.0
    %2376 = vmatpush1.msra.mxu0 0.0
    %2377 = vmatprep.subr.mxu0 0.0
    %2378 = vmatpush1.msra.mxu0 %v2195
    %2379 = vmatprep.subr.mxu0 0.0
    %2380 = vmatpush1.msra.mxu0 %v2194
    %2381 = vmatprep.subr.mxu0 0.0
    %2382 = vmatpush1.msra.mxu0 %v2193
    %2383 = vmatprep.subr.mxu0 0.0
    %2384 = vmatpush1.msra.mxu0 %v2192
    %2385 = vmatprep.subr.mxu0 0.0
    %2386 = vmatpush2.msra.mxu0 0.0
    %2387 = vmatprep.subr.mxu0 0.0
    %2388 = vmatpush2.msra.mxu0 0.0
    %2389 = vmatprep.subr.mxu0 0.0
    %2390 = vmatpush2.msra.mxu0 0.0
    %2391 = vmatprep.subr.mxu0 0.0
    %2392 = vmatpush2.msra.mxu0 0.0
    %2393 = vmatprep.subr.mxu0 0.0
    %2394 = vmatpush2.msra.mxu0 0.0
    %2395 = vmatprep.subr.mxu0 0.0
    %2396 = vmatpush2.msra.mxu0 0.0
    %2397 = vmatprep.subr.mxu0 0.0
    %2398 = vmatpush2.msra.mxu0 0.0
    %2399 = vmatprep.subr.mxu0 0.0
    %2400 = vmatpush2.msra.mxu0 0.0
    %2401 = vmatprep.subr.mxu0 0.0
    %2402 = vmatpush2.msra.mxu0 0.0
    %2403 = vmatprep.subr.mxu0 0.0
    %2404 = vmatpush2.msra.mxu0 0.0
    %2405 = vmatprep.subr.mxu0 0.0
    %2406 = vmatpush2.msra.mxu0 0.0
    %2407 = vmatprep.subr.mxu0 0.0
    %2408 = vmatpush2.msra.mxu0 0.0
    %2409 = vmatprep.subr.mxu0 0.0
    %2410 = vmatpush2.msra.mxu0 0.0
    %2411 = vmatprep.subr.mxu0 0.0
    %2412 = vmatpush2.msra.mxu0 0.0
    %2413 = vmatprep.subr.mxu0 0.0
    %2414 = vmatpush2.msra.mxu0 0.0
    %2415 = vmatprep.subr.mxu0 0.0
    %2416 = vmatpush2.msra.mxu0 0.0
    %2417 = vmatprep.mubr.f32.mxu0 0.0
    %2418 = vmatmul.mubr.f32.gmra.mxu0 %v2351
    %v2419 = vpop.f32.mrf.mxu0
    %v2420 = vadd.f32 0.0, %v2419
    %v2421 = vpop.f32.mrf.mxu0
    %2422 = vdwg.mxu0
    %v2423 = vadd.f32 %v2349, %v2420
    %v2424 = vld [vmem:[#allocation3 + $0x30] sm:$0xff]
    %v2426 = vsel %vm79, %v2348, 0
    %2428 = vmatprep.subr.mxu0 0.0
    %2429 = vmatpush1.msra.mxu0 0.0
    %2430 = vmatprep.subr.mxu0 0.0
    %2431 = vmatpush1.msra.mxu0 0.0
    %2432 = vmatprep.subr.mxu0 0.0
    %2433 = vmatpush1.msra.mxu0 0.0
    %2434 = vmatprep.subr.mxu0 0.0
    %2435 = vmatpush1.msra.mxu0 0.0
    %2436 = vmatprep.subr.mxu0 0.0
    %2437 = vmatpush1.msra.mxu0 0.0
    %2438 = vmatprep.subr.mxu0 0.0
    %2439 = vmatpush1.msra.mxu0 0.0
    %2440 = vmatprep.subr.mxu0 0.0
    %2441 = vmatpush1.msra.mxu0 0.0
    %2442 = vmatprep.subr.mxu0 0.0
    %2443 = vmatpush1.msra.mxu0 0.0
    %2444 = vmatprep.subr.mxu0 0.0
    %2445 = vmatpush1.msra.mxu0 0.0
    %2446 = vmatprep.subr.mxu0 0.0
    %2447 = vmatpush1.msra.mxu0 0.0
    %2448 = vmatprep.subr.mxu0 0.0
    %2449 = vmatpush1.msra.mxu0 0.0
    %2450 = vmatprep.subr.mxu0 0.0
    %2451 = vmatpush1.msra.mxu0 0.0
    %2452 = vmatprep.subr.mxu0 0.0
    %2453 = vmatpush1.msra.mxu0 %v2200
    %2454 = vmatprep.subr.mxu0 0.0
    %2455 = vmatpush1.msra.mxu0 %v2199
    %2456 = vmatprep.subr.mxu0 0.0
    %2457 = vmatpush1.msra.mxu0 %v2198
    %2458 = vmatprep.subr.mxu0 0.0
    %2459 = vmatpush1.msra.mxu0 %v2197
    %2460 = vmatprep.subr.mxu0 0.0
    %2461 = vmatpush2.msra.mxu0 0.0
    %2462 = vmatprep.subr.mxu0 0.0
    %2463 = vmatpush2.msra.mxu0 0.0
    %2464 = vmatprep.subr.mxu0 0.0
    %2465 = vmatpush2.msra.mxu0 0.0
    %2466 = vmatprep.subr.mxu0 0.0
    %2467 = vmatpush2.msra.mxu0 0.0
    %2468 = vmatprep.subr.mxu0 0.0
    %2469 = vmatpush2.msra.mxu0 0.0
    %2470 = vmatprep.subr.mxu0 0.0
    %2471 = vmatpush2.msra.mxu0 0.0
    %2472 = vmatprep.subr.mxu0 0.0
    %2473 = vmatpush2.msra.mxu0 0.0
    %2474 = vmatprep.subr.mxu0 0.0
    %2475 = vmatpush2.msra.mxu0 0.0
    %2476 = vmatprep.subr.mxu0 0.0
    %2477 = vmatpush2.msra.mxu0 0.0
    %2478 = vmatprep.subr.mxu0 0.0
    %2479 = vmatpush2.msra.mxu0 0.0
    %2480 = vmatprep.subr.mxu0 0.0
    %2481 = vmatpush2.msra.mxu0 0.0
    %2482 = vmatprep.subr.mxu0 0.0
    %2483 = vmatpush2.msra.mxu0 0.0
    %2484 = vmatprep.subr.mxu0 0.0
    %2485 = vmatpush2.msra.mxu0 0.0
    %2486 = vmatprep.subr.mxu0 0.0
    %2487 = vmatpush2.msra.mxu0 0.0
    %2488 = vmatprep.subr.mxu0 0.0
    %2489 = vmatpush2.msra.mxu0 0.0
    %2490 = vmatprep.subr.mxu0 0.0
    %2491 = vmatpush2.msra.mxu0 0.0
    %2492 = vmatprep.mubr.f32.mxu0 0.0
    %2493 = vmatmul.mubr.f32.gmra.mxu0 %v2426
    %v2494 = vpop.f32.mrf.mxu0
    %v2495 = vadd.f32 0.0, %v2494
    %v2496 = vpop.f32.mrf.mxu0
    %2497 = vdwg.mxu0
    %v2498 = vadd.f32 %v2424, %v2495
    %v2499 = vtanh.pop %v2423
    %v2500 = vsel %vm668, %v2499, %v2346
    %v2501 = vtanh.pop %v2498
    %v2502 = vsel %vm676, %v2501, %v2348
    %v2503 = vld [vmem:[#allocation2 + $0x10] sm:$0xff]
    %v2505 = vsel %vm79, %v2500, 0
    %2507 = vmatprep.subr.mxu0 0.0
    %2508 = vmatpush1.msra.mxu0 0.0
    %2509 = vmatprep.subr.mxu0 0.0
    %2510 = vmatpush1.msra.mxu0 0.0
    %2511 = vmatprep.subr.mxu0 0.0
    %2512 = vmatpush1.msra.mxu0 0.0
    %2513 = vmatprep.subr.mxu0 0.0
    %2514 = vmatpush1.msra.mxu0 0.0
    %2515 = vmatprep.subr.mxu0 0.0
    %2516 = vmatpush1.msra.mxu0 0.0
    %2517 = vmatprep.subr.mxu0 0.0
    %2518 = vmatpush1.msra.mxu0 0.0
    %2519 = vmatprep.subr.mxu0 0.0
    %2520 = vmatpush1.msra.mxu0 0.0
    %2521 = vmatprep.subr.mxu0 0.0
    %2522 = vmatpush1.msra.mxu0 0.0
    %2523 = vmatprep.subr.mxu0 0.0
    %2524 = vmatpush1.msra.mxu0 0.0
    %2525 = vmatprep.subr.mxu0 0.0
    %2526 = vmatpush1.msra.mxu0 0.0
    %2527 = vmatprep.subr.mxu0 0.0
    %2528 = vmatpush1.msra.mxu0 0.0
    %2529 = vmatprep.subr.mxu0 0.0
    %2530 = vmatpush1.msra.mxu0 0.0
    %2531 = vmatprep.subr.mxu0 0.0
    %2532 = vmatpush1.msra.mxu0 %v2195
    %2533 = vmatprep.subr.mxu0 0.0
    %2534 = vmatpush1.msra.mxu0 %v2194
    %2535 = vmatprep.subr.mxu0 0.0
    %2536 = vmatpush1.msra.mxu0 %v2193
    %2537 = vmatprep.subr.mxu0 0.0
    %2538 = vmatpush1.msra.mxu0 %v2192
    %2539 = vmatprep.subr.mxu0 0.0
    %2540 = vmatpush2.msra.mxu0 0.0
    %2541 = vmatprep.subr.mxu0 0.0
    %2542 = vmatpush2.msra.mxu0 0.0
    %2543 = vmatprep.subr.mxu0 0.0
    %2544 = vmatpush2.msra.mxu0 0.0
    %2545 = vmatprep.subr.mxu0 0.0
    %2546 = vmatpush2.msra.mxu0 0.0
    %2547 = vmatprep.subr.mxu0 0.0
    %2548 = vmatpush2.msra.mxu0 0.0
    %2549 = vmatprep.subr.mxu0 0.0
    %2550 = vmatpush2.msra.mxu0 0.0
    %2551 = vmatprep.subr.mxu0 0.0
    %2552 = vmatpush2.msra.mxu0 0.0
    %2553 = vmatprep.subr.mxu0 0.0
    %2554 = vmatpush2.msra.mxu0 0.0
    %2555 = vmatprep.subr.mxu0 0.0
    %2556 = vmatpush2.msra.mxu0 0.0
    %2557 = vmatprep.subr.mxu0 0.0
    %2558 = vmatpush2.msra.mxu0 0.0
    %2559 = vmatprep.subr.mxu0 0.0
    %2560 = vmatpush2.msra.mxu0 0.0
    %2561 = vmatprep.subr.mxu0 0.0
    %2562 = vmatpush2.msra.mxu0 0.0
    %2563 = vmatprep.subr.mxu0 0.0
    %2564 = vmatpush2.msra.mxu0 0.0
    %2565 = vmatprep.subr.mxu0 0.0
    %2566 = vmatpush2.msra.mxu0 0.0
    %2567 = vmatprep.subr.mxu0 0.0
    %2568 = vmatpush2.msra.mxu0 0.0
    %2569 = vmatprep.subr.mxu0 0.0
    %2570 = vmatpush2.msra.mxu0 0.0
    %2571 = vmatprep.mubr.f32.mxu0 0.0
    %2572 = vmatmul.mubr.f32.gmra.mxu0 %v2505
    %v2573 = vpop.f32.mrf.mxu0
    %v2574 = vadd.f32 0.0, %v2573
    %v2575 = vpop.f32.mrf.mxu0
    %2576 = vdwg.mxu0
    %v2577 = vadd.f32 %v2503, %v2574
    %v2578 = vld [vmem:[#allocation3 + $0x28] sm:$0xff]
    %v2580 = vsel %vm79, %v2502, 0
    %2582 = vmatprep.subr.mxu0 0.0
    %2583 = vmatpush1.msra.mxu0 0.0
    %2584 = vmatprep.subr.mxu0 0.0
    %2585 = vmatpush1.msra.mxu0 0.0
    %2586 = vmatprep.subr.mxu0 0.0
    %2587 = vmatpush1.msra.mxu0 0.0
    %2588 = vmatprep.subr.mxu0 0.0
    %2589 = vmatpush1.msra.mxu0 0.0
    %2590 = vmatprep.subr.mxu0 0.0
    %2591 = vmatpush1.msra.mxu0 0.0
    %2592 = vmatprep.subr.mxu0 0.0
    %2593 = vmatpush1.msra.mxu0 0.0
    %2594 = vmatprep.subr.mxu0 0.0
    %2595 = vmatpush1.msra.mxu0 0.0
    %2596 = vmatprep.subr.mxu0 0.0
    %2597 = vmatpush1.msra.mxu0 0.0
    %2598 = vmatprep.subr.mxu0 0.0
    %2599 = vmatpush1.msra.mxu0 0.0
    %2600 = vmatprep.subr.mxu0 0.0
    %2601 = vmatpush1.msra.mxu0 0.0
    %2602 = vmatprep.subr.mxu0 0.0
    %2603 = vmatpush1.msra.mxu0 0.0
    %2604 = vmatprep.subr.mxu0 0.0
    %2605 = vmatpush1.msra.mxu0 0.0
    %2606 = vmatprep.subr.mxu0 0.0
    %2607 = vmatpush1.msra.mxu0 %v2200
    %2608 = vmatprep.subr.mxu0 0.0
    %2609 = vmatpush1.msra.mxu0 %v2199
    %2610 = vmatprep.subr.mxu0 0.0
    %2611 = vmatpush1.msra.mxu0 %v2198
    %2612 = vmatprep.subr.mxu0 0.0
    %2613 = vmatpush1.msra.mxu0 %v2197
    %2614 = vmatprep.subr.mxu0 0.0
    %2615 = vmatpush2.msra.mxu0 0.0
    %2616 = vmatprep.subr.mxu0 0.0
    %2617 = vmatpush2.msra.mxu0 0.0
    %2618 = vmatprep.subr.mxu0 0.0
    %2619 = vmatpush2.msra.mxu0 0.0
    %2620 = vmatprep.subr.mxu0 0.0
    %2621 = vmatpush2.msra.mxu0 0.0
    %2622 = vmatprep.subr.mxu0 0.0
    %2623 = vmatpush2.msra.mxu0 0.0
    %2624 = vmatprep.subr.mxu0 0.0
    %2625 = vmatpush2.msra.mxu0 0.0
    %2626 = vmatprep.subr.mxu0 0.0
    %2627 = vmatpush2.msra.mxu0 0.0
    %2628 = vmatprep.subr.mxu0 0.0
    %2629 = vmatpush2.msra.mxu0 0.0
    %2630 = vmatprep.subr.mxu0 0.0
    %2631 = vmatpush2.msra.mxu0 0.0
    %2632 = vmatprep.subr.mxu0 0.0
    %2633 = vmatpush2.msra.mxu0 0.0
    %2634 = vmatprep.subr.mxu0 0.0
    %2635 = vmatpush2.msra.mxu0 0.0
    %2636 = vmatprep.subr.mxu0 0.0
    %2637 = vmatpush2.msra.mxu0 0.0
    %2638 = vmatprep.subr.mxu0 0.0
    %2639 = vmatpush2.msra.mxu0 0.0
    %2640 = vmatprep.subr.mxu0 0.0
    %2641 = vmatpush2.msra.mxu0 0.0
    %2642 = vmatprep.subr.mxu0 0.0
    %2643 = vmatpush2.msra.mxu0 0.0
    %2644 = vmatprep.subr.mxu0 0.0
    %2645 = vmatpush2.msra.mxu0 0.0
    %2646 = vmatprep.mubr.f32.mxu0 0.0
    %2647 = vmatmul.mubr.f32.gmra.mxu0 %v2580
    %v2648 = vpop.f32.mrf.mxu0
    %v2649 = vadd.f32 0.0, %v2648
    %v2650 = vpop.f32.mrf.mxu0
    %2651 = vdwg.mxu0
    %v2652 = vadd.f32 %v2578, %v2649
    %v2653 = vtanh.pop %v2577
    %v2654 = vsel %vm836, %v2653, %v2500
    %v2655 = vtanh.pop %v2652
    %v2656 = vsel %vm844, %v2655, %v2502
    %v2657 = vld [vmem:[#allocation2 + $0x18] sm:$0xff]
    %v2659 = vsel %vm79, %v2654, 0
    %2661 = vmatprep.subr.mxu0 0.0
    %2662 = vmatpush1.msra.mxu0 0.0
    %2663 = vmatprep.subr.mxu0 0.0
    %2664 = vmatpush1.msra.mxu0 0.0
    %2665 = vmatprep.subr.mxu0 0.0
    %2666 = vmatpush1.msra.mxu0 0.0
    %2667 = vmatprep.subr.mxu0 0.0
    %2668 = vmatpush1.msra.mxu0 0.0
    %2669 = vmatprep.subr.mxu0 0.0
    %2670 = vmatpush1.msra.mxu0 0.0
    %2671 = vmatprep.subr.mxu0 0.0
    %2672 = vmatpush1.msra.mxu0 0.0
    %2673 = vmatprep.subr.mxu0 0.0
    %2674 = vmatpush1.msra.mxu0 0.0
    %2675 = vmatprep.subr.mxu0 0.0
    %2676 = vmatpush1.msra.mxu0 0.0
    %2677 = vmatprep.subr.mxu0 0.0
    %2678 = vmatpush1.msra.mxu0 0.0
    %2679 = vmatprep.subr.mxu0 0.0
    %2680 = vmatpush1.msra.mxu0 0.0
    %2681 = vmatprep.subr.mxu0 0.0
    %2682 = vmatpush1.msra.mxu0 0.0
    %2683 = vmatprep.subr.mxu0 0.0
    %2684 = vmatpush1.msra.mxu0 0.0
    %2685 = vmatprep.subr.mxu0 0.0
    %2686 = vmatpush1.msra.mxu0 %v2195
    %2687 = vmatprep.subr.mxu0 0.0
    %2688 = vmatpush1.msra.mxu0 %v2194
    %2689 = vmatprep.subr.mxu0 0.0
    %2690 = vmatpush1.msra.mxu0 %v2193
    %2691 = vmatprep.subr.mxu0 0.0
    %2692 = vmatpush1.msra.mxu0 %v2192
    %2693 = vmatprep.subr.mxu0 0.0
    %2694 = vmatpush2.msra.mxu0 0.0
    %2695 = vmatprep.subr.mxu0 0.0
    %2696 = vmatpush2.msra.mxu0 0.0
    %2697 = vmatprep.subr.mxu0 0.0
    %2698 = vmatpush2.msra.mxu0 0.0
    %2699 = vmatprep.subr.mxu0 0.0
    %2700 = vmatpush2.msra.mxu0 0.0
    %2701 = vmatprep.subr.mxu0 0.0
    %2702 = vmatpush2.msra.mxu0 0.0
    %2703 = vmatprep.subr.mxu0 0.0
    %2704 = vmatpush2.msra.mxu0 0.0
    %2705 = vmatprep.subr.mxu0 0.0
    %2706 = vmatpush2.msra.mxu0 0.0
    %2707 = vmatprep.subr.mxu0 0.0
    %2708 = vmatpush2.msra.mxu0 0.0
    %2709 = vmatprep.subr.mxu0 0.0
    %2710 = vmatpush2.msra.mxu0 0.0
    %2711 = vmatprep.subr.mxu0 0.0
    %2712 = vmatpush2.msra.mxu0 0.0
    %2713 = vmatprep.subr.mxu0 0.0
    %2714 = vmatpush2.msra.mxu0 0.0
    %2715 = vmatprep.subr.mxu0 0.0
    %2716 = vmatpush2.msra.mxu0 0.0
    %2717 = vmatprep.subr.mxu0 0.0
    %2718 = vmatpush2.msra.mxu0 0.0
    %2719 = vmatprep.subr.mxu0 0.0
    %2720 = vmatpush2.msra.mxu0 0.0
    %2721 = vmatprep.subr.mxu0 0.0
    %2722 = vmatpush2.msra.mxu0 0.0
    %2723 = vmatprep.subr.mxu0 0.0
    %2724 = vmatpush2.msra.mxu0 0.0
    %2725 = vmatprep.mubr.f32.mxu0 0.0
    %2726 = vmatmul.mubr.f32.gmra.mxu0 %v2659
    %v2727 = vpop.f32.mrf.mxu0
    %v2728 = vadd.f32 0.0, %v2727
    %v2729 = vpop.f32.mrf.mxu0
    %2730 = vdwg.mxu0
    %v2731 = vadd.f32 %v2657, %v2728
    %v2732 = vld [vmem:[#allocation3 + $0x20] sm:$0xff]
    %v2734 = vsel %vm79, %v2656, 0
    %2736 = vmatprep.subr.mxu0 0.0
    %2737 = vmatpush1.msra.mxu0 0.0
    %2738 = vmatprep.subr.mxu0 0.0
    %2739 = vmatpush1.msra.mxu0 0.0
    %2740 = vmatprep.subr.mxu0 0.0
    %2741 = vmatpush1.msra.mxu0 0.0
    %2742 = vmatprep.subr.mxu0 0.0
    %2743 = vmatpush1.msra.mxu0 0.0
    %2744 = vmatprep.subr.mxu0 0.0
    %2745 = vmatpush1.msra.mxu0 0.0
    %2746 = vmatprep.subr.mxu0 0.0
    %2747 = vmatpush1.msra.mxu0 0.0
    %2748 = vmatprep.subr.mxu0 0.0
    %2749 = vmatpush1.msra.mxu0 0.0
    %2750 = vmatprep.subr.mxu0 0.0
    %2751 = vmatpush1.msra.mxu0 0.0
    %2752 = vmatprep.subr.mxu0 0.0
    %2753 = vmatpush1.msra.mxu0 0.0
    %2754 = vmatprep.subr.mxu0 0.0
    %2755 = vmatpush1.msra.mxu0 0.0
    %2756 = vmatprep.subr.mxu0 0.0
    %2757 = vmatpush1.msra.mxu0 0.0
    %2758 = vmatprep.subr.mxu0 0.0
    %2759 = vmatpush1.msra.mxu0 0.0
    %2760 = vmatprep.subr.mxu0 0.0
    %2761 = vmatpush1.msra.mxu0 %v2200
    %2762 = vmatprep.subr.mxu0 0.0
    %2763 = vmatpush1.msra.mxu0 %v2199
    %2764 = vmatprep.subr.mxu0 0.0
    %2765 = vmatpush1.msra.mxu0 %v2198
    %2766 = vmatprep.subr.mxu0 0.0
    %2767 = vmatpush1.msra.mxu0 %v2197
    %2768 = vmatprep.subr.mxu0 0.0
    %2769 = vmatpush2.msra.mxu0 0.0
    %2770 = vmatprep.subr.mxu0 0.0
    %2771 = vmatpush2.msra.mxu0 0.0
    %2772 = vmatprep.subr.mxu0 0.0
    %2773 = vmatpush2.msra.mxu0 0.0
    %2774 = vmatprep.subr.mxu0 0.0
    %2775 = vmatpush2.msra.mxu0 0.0
    %2776 = vmatprep.subr.mxu0 0.0
    %2777 = vmatpush2.msra.mxu0 0.0
    %2778 = vmatprep.subr.mxu0 0.0
    %2779 = vmatpush2.msra.mxu0 0.0
    %2780 = vmatprep.subr.mxu0 0.0
    %2781 = vmatpush2.msra.mxu0 0.0
    %2782 = vmatprep.subr.mxu0 0.0
    %2783 = vmatpush2.msra.mxu0 0.0
    %2784 = vmatprep.subr.mxu0 0.0
    %2785 = vmatpush2.msra.mxu0 0.0
    %2786 = vmatprep.subr.mxu0 0.0
    %2787 = vmatpush2.msra.mxu0 0.0
    %2788 = vmatprep.subr.mxu0 0.0
    %2789 = vmatpush2.msra.mxu0 0.0
    %2790 = vmatprep.subr.mxu0 0.0
    %2791 = vmatpush2.msra.mxu0 0.0
    %2792 = vmatprep.subr.mxu0 0.0
    %2793 = vmatpush2.msra.mxu0 0.0
    %2794 = vmatprep.subr.mxu0 0.0
    %2795 = vmatpush2.msra.mxu0 0.0
    %2796 = vmatprep.subr.mxu0 0.0
    %2797 = vmatpush2.msra.mxu0 0.0
    %2798 = vmatprep.subr.mxu0 0.0
    %2799 = vmatpush2.msra.mxu0 0.0
    %2800 = vmatprep.mubr.f32.mxu0 0.0
    %2801 = vmatmul.mubr.f32.gmra.mxu0 %v2734
    %v2802 = vpop.f32.mrf.mxu0
    %v2803 = vadd.f32 0.0, %v2802
    %v2804 = vpop.f32.mrf.mxu0
    %2805 = vdwg.mxu0
    %v2806 = vadd.f32 %v2732, %v2803
    %v2807 = vtanh.pop %v2731
    %v2808 = vsel %vm1004, %v2807, %v2654
    %v2809 = vtanh.pop %v2806
    %v2810 = vsel %vm1012, %v2809, %v2656
    %v2811 = vld [vmem:[#allocation2 + $0x20] sm:$0xff]
    %v2813 = vsel %vm79, %v2808, 0
    %2815 = vmatprep.subr.mxu0 0.0
    %2816 = vmatpush1.msra.mxu0 0.0
    %2817 = vmatprep.subr.mxu0 0.0
    %2818 = vmatpush1.msra.mxu0 0.0
    %2819 = vmatprep.subr.mxu0 0.0
    %2820 = vmatpush1.msra.mxu0 0.0
    %2821 = vmatprep.subr.mxu0 0.0
    %2822 = vmatpush1.msra.mxu0 0.0
    %2823 = vmatprep.subr.mxu0 0.0
    %2824 = vmatpush1.msra.mxu0 0.0
    %2825 = vmatprep.subr.mxu0 0.0
    %2826 = vmatpush1.msra.mxu0 0.0
    %2827 = vmatprep.subr.mxu0 0.0
    %2828 = vmatpush1.msra.mxu0 0.0
    %2829 = vmatprep.subr.mxu0 0.0
    %2830 = vmatpush1.msra.mxu0 0.0
    %2831 = vmatprep.subr.mxu0 0.0
    %2832 = vmatpush1.msra.mxu0 0.0
    %2833 = vmatprep.subr.mxu0 0.0
    %2834 = vmatpush1.msra.mxu0 0.0
    %2835 = vmatprep.subr.mxu0 0.0
    %2836 = vmatpush1.msra.mxu0 0.0
    %2837 = vmatprep.subr.mxu0 0.0
    %2838 = vmatpush1.msra.mxu0 0.0
    %2839 = vmatprep.subr.mxu0 0.0
    %2840 = vmatpush1.msra.mxu0 %v2195
    %2841 = vmatprep.subr.mxu0 0.0
    %2842 = vmatpush1.msra.mxu0 %v2194
    %2843 = vmatprep.subr.mxu0 0.0
    %2844 = vmatpush1.msra.mxu0 %v2193
    %2845 = vmatprep.subr.mxu0 0.0
    %2846 = vmatpush1.msra.mxu0 %v2192
    %2847 = vmatprep.subr.mxu0 0.0
    %2848 = vmatpush2.msra.mxu0 0.0
    %2849 = vmatprep.subr.mxu0 0.0
    %2850 = vmatpush2.msra.mxu0 0.0
    %2851 = vmatprep.subr.mxu0 0.0
    %2852 = vmatpush2.msra.mxu0 0.0
    %2853 = vmatprep.subr.mxu0 0.0
    %2854 = vmatpush2.msra.mxu0 0.0
    %2855 = vmatprep.subr.mxu0 0.0
    %2856 = vmatpush2.msra.mxu0 0.0
    %2857 = vmatprep.subr.mxu0 0.0
    %2858 = vmatpush2.msra.mxu0 0.0
    %2859 = vmatprep.subr.mxu0 0.0
    %2860 = vmatpush2.msra.mxu0 0.0
    %2861 = vmatprep.subr.mxu0 0.0
    %2862 = vmatpush2.msra.mxu0 0.0
    %2863 = vmatprep.subr.mxu0 0.0
    %2864 = vmatpush2.msra.mxu0 0.0
    %2865 = vmatprep.subr.mxu0 0.0
    %2866 = vmatpush2.msra.mxu0 0.0
    %2867 = vmatprep.subr.mxu0 0.0
    %2868 = vmatpush2.msra.mxu0 0.0
    %2869 = vmatprep.subr.mxu0 0.0
    %2870 = vmatpush2.msra.mxu0 0.0
    %2871 = vmatprep.subr.mxu0 0.0
    %2872 = vmatpush2.msra.mxu0 0.0
    %2873 = vmatprep.subr.mxu0 0.0
    %2874 = vmatpush2.msra.mxu0 0.0
    %2875 = vmatprep.subr.mxu0 0.0
    %2876 = vmatpush2.msra.mxu0 0.0
    %2877 = vmatprep.subr.mxu0 0.0
    %2878 = vmatpush2.msra.mxu0 0.0
    %2879 = vmatprep.mubr.f32.mxu0 0.0
    %2880 = vmatmul.mubr.f32.gmra.mxu0 %v2813
    %v2881 = vpop.f32.mrf.mxu0
    %v2882 = vadd.f32 0.0, %v2881
    %v2883 = vpop.f32.mrf.mxu0
    %2884 = vdwg.mxu0
    %v2885 = vadd.f32 %v2811, %v2882
    %v2886 = vld [vmem:[#allocation3 + $0x18] sm:$0xff]
    %v2888 = vsel %vm79, %v2810, 0
    %2890 = vmatprep.subr.mxu0 0.0
    %2891 = vmatpush1.msra.mxu0 0.0
    %2892 = vmatprep.subr.mxu0 0.0
    %2893 = vmatpush1.msra.mxu0 0.0
    %2894 = vmatprep.subr.mxu0 0.0
    %2895 = vmatpush1.msra.mxu0 0.0
    %2896 = vmatprep.subr.mxu0 0.0
    %2897 = vmatpush1.msra.mxu0 0.0
    %2898 = vmatprep.subr.mxu0 0.0
    %2899 = vmatpush1.msra.mxu0 0.0
    %2900 = vmatprep.subr.mxu0 0.0
    %2901 = vmatpush1.msra.mxu0 0.0
    %2902 = vmatprep.subr.mxu0 0.0
    %2903 = vmatpush1.msra.mxu0 0.0
    %2904 = vmatprep.subr.mxu0 0.0
    %2905 = vmatpush1.msra.mxu0 0.0
    %2906 = vmatprep.subr.mxu0 0.0
    %2907 = vmatpush1.msra.mxu0 0.0
    %2908 = vmatprep.subr.mxu0 0.0
    %2909 = vmatpush1.msra.mxu0 0.0
    %2910 = vmatprep.subr.mxu0 0.0
    %2911 = vmatpush1.msra.mxu0 0.0
    %2912 = vmatprep.subr.mxu0 0.0
    %2913 = vmatpush1.msra.mxu0 0.0
    %2914 = vmatprep.subr.mxu0 0.0
    %2915 = vmatpush1.msra.mxu0 %v2200
    %2916 = vmatprep.subr.mxu0 0.0
    %2917 = vmatpush1.msra.mxu0 %v2199
    %2918 = vmatprep.subr.mxu0 0.0
    %2919 = vmatpush1.msra.mxu0 %v2198
    %2920 = vmatprep.subr.mxu0 0.0
    %2921 = vmatpush1.msra.mxu0 %v2197
    %2922 = vmatprep.subr.mxu0 0.0
    %2923 = vmatpush2.msra.mxu0 0.0
    %2924 = vmatprep.subr.mxu0 0.0
    %2925 = vmatpush2.msra.mxu0 0.0
    %2926 = vmatprep.subr.mxu0 0.0
    %2927 = vmatpush2.msra.mxu0 0.0
    %2928 = vmatprep.subr.mxu0 0.0
    %2929 = vmatpush2.msra.mxu0 0.0
    %2930 = vmatprep.subr.mxu0 0.0
    %2931 = vmatpush2.msra.mxu0 0.0
    %2932 = vmatprep.subr.mxu0 0.0
    %2933 = vmatpush2.msra.mxu0 0.0
    %2934 = vmatprep.subr.mxu0 0.0
    %2935 = vmatpush2.msra.mxu0 0.0
    %2936 = vmatprep.subr.mxu0 0.0
    %2937 = vmatpush2.msra.mxu0 0.0
    %2938 = vmatprep.subr.mxu0 0.0
    %2939 = vmatpush2.msra.mxu0 0.0
    %2940 = vmatprep.subr.mxu0 0.0
    %2941 = vmatpush2.msra.mxu0 0.0
    %2942 = vmatprep.subr.mxu0 0.0
    %2943 = vmatpush2.msra.mxu0 0.0
    %2944 = vmatprep.subr.mxu0 0.0
    %2945 = vmatpush2.msra.mxu0 0.0
    %2946 = vmatprep.subr.mxu0 0.0
    %2947 = vmatpush2.msra.mxu0 0.0
    %2948 = vmatprep.subr.mxu0 0.0
    %2949 = vmatpush2.msra.mxu0 0.0
    %2950 = vmatprep.subr.mxu0 0.0
    %2951 = vmatpush2.msra.mxu0 0.0
    %2952 = vmatprep.subr.mxu0 0.0
    %2953 = vmatpush2.msra.mxu0 0.0
    %2954 = vmatprep.mubr.f32.mxu0 0.0
    %2955 = vmatmul.mubr.f32.gmra.mxu0 %v2888
    %v2956 = vpop.f32.mrf.mxu0
    %v2957 = vadd.f32 0.0, %v2956
    %v2958 = vpop.f32.mrf.mxu0
    %2959 = vdwg.mxu0
    %v2960 = vadd.f32 %v2886, %v2957
    %v2961 = vtanh.pop %v2885
    %v2962 = vsel %vm1012, %v2961, %v2808
    %v2963 = vtanh.pop %v2960
    %v2964 = vsel %vm1004, %v2963, %v2810
    %v2965 = vld [vmem:[#allocation2 + $0x28] sm:$0xff]
    %v2967 = vsel %vm79, %v2962, 0
    %2969 = vmatprep.subr.mxu0 0.0
    %2970 = vmatpush1.msra.mxu0 0.0
    %2971 = vmatprep.subr.mxu0 0.0
    %2972 = vmatpush1.msra.mxu0 0.0
    %2973 = vmatprep.subr.mxu0 0.0
    %2974 = vmatpush1.msra.mxu0 0.0
    %2975 = vmatprep.subr.mxu0 0.0
    %2976 = vmatpush1.msra.mxu0 0.0
    %2977 = vmatprep.subr.mxu0 0.0
    %2978 = vmatpush1.msra.mxu0 0.0
    %2979 = vmatprep.subr.mxu0 0.0
    %2980 = vmatpush1.msra.mxu0 0.0
    %2981 = vmatprep.subr.mxu0 0.0
    %2982 = vmatpush1.msra.mxu0 0.0
    %2983 = vmatprep.subr.mxu0 0.0
    %2984 = vmatpush1.msra.mxu0 0.0
    %2985 = vmatprep.subr.mxu0 0.0
    %2986 = vmatpush1.msra.mxu0 0.0
    %2987 = vmatprep.subr.mxu0 0.0
    %2988 = vmatpush1.msra.mxu0 0.0
    %2989 = vmatprep.subr.mxu0 0.0
    %2990 = vmatpush1.msra.mxu0 0.0
    %2991 = vmatprep.subr.mxu0 0.0
    %2992 = vmatpush1.msra.mxu0 0.0
    %2993 = vmatprep.subr.mxu0 0.0
    %2994 = vmatpush1.msra.mxu0 %v2195
    %2995 = vmatprep.subr.mxu0 0.0
    %2996 = vmatpush1.msra.mxu0 %v2194
    %2997 = vmatprep.subr.mxu0 0.0
    %2998 = vmatpush1.msra.mxu0 %v2193
    %2999 = vmatprep.subr.mxu0 0.0
    %3000 = vmatpush1.msra.mxu0 %v2192
    %3001 = vmatprep.subr.mxu0 0.0
    %3002 = vmatpush2.msra.mxu0 0.0
    %3003 = vmatprep.subr.mxu0 0.0
    %3004 = vmatpush2.msra.mxu0 0.0
    %3005 = vmatprep.subr.mxu0 0.0
    %3006 = vmatpush2.msra.mxu0 0.0
    %3007 = vmatprep.subr.mxu0 0.0
    %3008 = vmatpush2.msra.mxu0 0.0
    %3009 = vmatprep.subr.mxu0 0.0
    %3010 = vmatpush2.msra.mxu0 0.0
    %3011 = vmatprep.subr.mxu0 0.0
    %3012 = vmatpush2.msra.mxu0 0.0
    %3013 = vmatprep.subr.mxu0 0.0
    %3014 = vmatpush2.msra.mxu0 0.0
    %3015 = vmatprep.subr.mxu0 0.0
    %3016 = vmatpush2.msra.mxu0 0.0
    %3017 = vmatprep.subr.mxu0 0.0
    %3018 = vmatpush2.msra.mxu0 0.0
    %3019 = vmatprep.subr.mxu0 0.0
    %3020 = vmatpush2.msra.mxu0 0.0
    %3021 = vmatprep.subr.mxu0 0.0
    %3022 = vmatpush2.msra.mxu0 0.0
    %3023 = vmatprep.subr.mxu0 0.0
    %3024 = vmatpush2.msra.mxu0 0.0
    %3025 = vmatprep.subr.mxu0 0.0
    %3026 = vmatpush2.msra.mxu0 0.0
    %3027 = vmatprep.subr.mxu0 0.0
    %3028 = vmatpush2.msra.mxu0 0.0
    %3029 = vmatprep.subr.mxu0 0.0
    %3030 = vmatpush2.msra.mxu0 0.0
    %3031 = vmatprep.subr.mxu0 0.0
    %3032 = vmatpush2.msra.mxu0 0.0
    %3033 = vmatprep.mubr.f32.mxu0 0.0
    %3034 = vmatmul.mubr.f32.gmra.mxu0 %v2967
    %v3035 = vpop.f32.mrf.mxu0
    %v3036 = vadd.f32 0.0, %v3035
    %v3037 = vpop.f32.mrf.mxu0
    %3038 = vdwg.mxu0
    %v3039 = vadd.f32 %v2965, %v3036
    %v3040 = vld [vmem:[#allocation3 + $0x10] sm:$0xff]
    %v3042 = vsel %vm79, %v2964, 0
    %3044 = vmatprep.subr.mxu0 0.0
    %3045 = vmatpush1.msra.mxu0 0.0
    %3046 = vmatprep.subr.mxu0 0.0
    %3047 = vmatpush1.msra.mxu0 0.0
    %3048 = vmatprep.subr.mxu0 0.0
    %3049 = vmatpush1.msra.mxu0 0.0
    %3050 = vmatprep.subr.mxu0 0.0
    %3051 = vmatpush1.msra.mxu0 0.0
    %3052 = vmatprep.subr.mxu0 0.0
    %3053 = vmatpush1.msra.mxu0 0.0
    %3054 = vmatprep.subr.mxu0 0.0
    %3055 = vmatpush1.msra.mxu0 0.0
    %3056 = vmatprep.subr.mxu0 0.0
    %3057 = vmatpush1.msra.mxu0 0.0
    %3058 = vmatprep.subr.mxu0 0.0
    %3059 = vmatpush1.msra.mxu0 0.0
    %3060 = vmatprep.subr.mxu0 0.0
    %3061 = vmatpush1.msra.mxu0 0.0
    %3062 = vmatprep.subr.mxu0 0.0
    %3063 = vmatpush1.msra.mxu0 0.0
    %3064 = vmatprep.subr.mxu0 0.0
    %3065 = vmatpush1.msra.mxu0 0.0
    %3066 = vmatprep.subr.mxu0 0.0
    %3067 = vmatpush1.msra.mxu0 0.0
    %3068 = vmatprep.subr.mxu0 0.0
    %3069 = vmatpush1.msra.mxu0 %v2200
    %3070 = vmatprep.subr.mxu0 0.0
    %3071 = vmatpush1.msra.mxu0 %v2199
    %3072 = vmatprep.subr.mxu0 0.0
    %3073 = vmatpush1.msra.mxu0 %v2198
    %3074 = vmatprep.subr.mxu0 0.0
    %3075 = vmatpush1.msra.mxu0 %v2197
    %3076 = vmatprep.subr.mxu0 0.0
    %3077 = vmatpush2.msra.mxu0 0.0
    %3078 = vmatprep.subr.mxu0 0.0
    %3079 = vmatpush2.msra.mxu0 0.0
    %3080 = vmatprep.subr.mxu0 0.0
    %3081 = vmatpush2.msra.mxu0 0.0
    %3082 = vmatprep.subr.mxu0 0.0
    %3083 = vmatpush2.msra.mxu0 0.0
    %3084 = vmatprep.subr.mxu0 0.0
    %3085 = vmatpush2.msra.mxu0 0.0
    %3086 = vmatprep.subr.mxu0 0.0
    %3087 = vmatpush2.msra.mxu0 0.0
    %3088 = vmatprep.subr.mxu0 0.0
    %3089 = vmatpush2.msra.mxu0 0.0
    %3090 = vmatprep.subr.mxu0 0.0
    %3091 = vmatpush2.msra.mxu0 0.0
    %3092 = vmatprep.subr.mxu0 0.0
    %3093 = vmatpush2.msra.mxu0 0.0
    %3094 = vmatprep.subr.mxu0 0.0
    %3095 = vmatpush2.msra.mxu0 0.0
    %3096 = vmatprep.subr.mxu0 0.0
    %3097 = vmatpush2.msra.mxu0 0.0
    %3098 = vmatprep.subr.mxu0 0.0
    %3099 = vmatpush2.msra.mxu0 0.0
    %3100 = vmatprep.subr.mxu0 0.0
    %3101 = vmatpush2.msra.mxu0 0.0
    %3102 = vmatprep.subr.mxu0 0.0
    %3103 = vmatpush2.msra.mxu0 0.0
    %3104 = vmatprep.subr.mxu0 0.0
    %3105 = vmatpush2.msra.mxu0 0.0
    %3106 = vmatprep.subr.mxu0 0.0
    %3107 = vmatpush2.msra.mxu0 0.0
    %3108 = vmatprep.mubr.f32.mxu0 0.0
    %3109 = vmatmul.mubr.f32.gmra.mxu0 %v3042
    %v3110 = vpop.f32.mrf.mxu0
    %v3111 = vadd.f32 0.0, %v3110
    %v3112 = vpop.f32.mrf.mxu0
    %3113 = vdwg.mxu0
    %v3114 = vadd.f32 %v3040, %v3111
    %v3115 = vtanh.pop %v3039
    %v3116 = vsel %vm844, %v3115, %v2962
    %v3117 = vtanh.pop %v3114
    %v3118 = vsel %vm836, %v3117, %v2964
    %v3119 = vld [vmem:[#allocation2 + $0x30] sm:$0xff]
    %v3121 = vsel %vm79, %v3116, 0
    %3123 = vmatprep.subr.mxu0 0.0
    %3124 = vmatpush1.msra.mxu0 0.0
    %3125 = vmatprep.subr.mxu0 0.0
    %3126 = vmatpush1.msra.mxu0 0.0
    %3127 = vmatprep.subr.mxu0 0.0
    %3128 = vmatpush1.msra.mxu0 0.0
    %3129 = vmatprep.subr.mxu0 0.0
    %3130 = vmatpush1.msra.mxu0 0.0
    %3131 = vmatprep.subr.mxu0 0.0
    %3132 = vmatpush1.msra.mxu0 0.0
    %3133 = vmatprep.subr.mxu0 0.0
    %3134 = vmatpush1.msra.mxu0 0.0
    %3135 = vmatprep.subr.mxu0 0.0
    %3136 = vmatpush1.msra.mxu0 0.0
    %3137 = vmatprep.subr.mxu0 0.0
    %3138 = vmatpush1.msra.mxu0 0.0
    %3139 = vmatprep.subr.mxu0 0.0
    %3140 = vmatpush1.msra.mxu0 0.0
    %3141 = vmatprep.subr.mxu0 0.0
    %3142 = vmatpush1.msra.mxu0 0.0
    %3143 = vmatprep.subr.mxu0 0.0
    %3144 = vmatpush1.msra.mxu0 0.0
    %3145 = vmatprep.subr.mxu0 0.0
    %3146 = vmatpush1.msra.mxu0 0.0
    %3147 = vmatprep.subr.mxu0 0.0
    %3148 = vmatpush1.msra.mxu0 %v2195
    %3149 = vmatprep.subr.mxu0 0.0
    %3150 = vmatpush1.msra.mxu0 %v2194
    %3151 = vmatprep.subr.mxu0 0.0
    %3152 = vmatpush1.msra.mxu0 %v2193
    %3153 = vmatprep.subr.mxu0 0.0
    %3154 = vmatpush1.msra.mxu0 %v2192
    %3155 = vmatprep.subr.mxu0 0.0
    %3156 = vmatpush2.msra.mxu0 0.0
    %3157 = vmatprep.subr.mxu0 0.0
    %3158 = vmatpush2.msra.mxu0 0.0
    %3159 = vmatprep.subr.mxu0 0.0
    %3160 = vmatpush2.msra.mxu0 0.0
    %3161 = vmatprep.subr.mxu0 0.0
    %3162 = vmatpush2.msra.mxu0 0.0
    %3163 = vmatprep.subr.mxu0 0.0
    %3164 = vmatpush2.msra.mxu0 0.0
    %3165 = vmatprep.subr.mxu0 0.0
    %3166 = vmatpush2.msra.mxu0 0.0
    %3167 = vmatprep.subr.mxu0 0.0
    %3168 = vmatpush2.msra.mxu0 0.0
    %3169 = vmatprep.subr.mxu0 0.0
    %3170 = vmatpush2.msra.mxu0 0.0
    %3171 = vmatprep.subr.mxu0 0.0
    %3172 = vmatpush2.msra.mxu0 0.0
    %3173 = vmatprep.subr.mxu0 0.0
    %3174 = vmatpush2.msra.mxu0 0.0
    %3175 = vmatprep.subr.mxu0 0.0
    %3176 = vmatpush2.msra.mxu0 0.0
    %3177 = vmatprep.subr.mxu0 0.0
    %3178 = vmatpush2.msra.mxu0 0.0
    %3179 = vmatprep.subr.mxu0 0.0
    %3180 = vmatpush2.msra.mxu0 0.0
    %3181 = vmatprep.subr.mxu0 0.0
    %3182 = vmatpush2.msra.mxu0 0.0
    %3183 = vmatprep.subr.mxu0 0.0
    %3184 = vmatpush2.msra.mxu0 0.0
    %3185 = vmatprep.subr.mxu0 0.0
    %3186 = vmatpush2.msra.mxu0 0.0
    %3187 = vmatprep.mubr.f32.mxu0 0.0
    %3188 = vmatmul.mubr.f32.gmra.mxu0 %v3121
    %v3189 = vpop.f32.mrf.mxu0
    %v3190 = vadd.f32 0.0, %v3189
    %v3191 = vpop.f32.mrf.mxu0
    %3192 = vdwg.mxu0
    %v3193 = vadd.f32 %v3119, %v3190
    %v3194 = vld [vmem:[#allocation3 + $0x8] sm:$0xff]
    %v3196 = vsel %vm79, %v3118, 0
    %3198 = vmatprep.subr.mxu0 0.0
    %3199 = vmatpush1.msra.mxu0 0.0
    %3200 = vmatprep.subr.mxu0 0.0
    %3201 = vmatpush1.msra.mxu0 0.0
    %3202 = vmatprep.subr.mxu0 0.0
    %3203 = vmatpush1.msra.mxu0 0.0
    %3204 = vmatprep.subr.mxu0 0.0
    %3205 = vmatpush1.msra.mxu0 0.0
    %3206 = vmatprep.subr.mxu0 0.0
    %3207 = vmatpush1.msra.mxu0 0.0
    %3208 = vmatprep.subr.mxu0 0.0
    %3209 = vmatpush1.msra.mxu0 0.0
    %3210 = vmatprep.subr.mxu0 0.0
    %3211 = vmatpush1.msra.mxu0 0.0
    %3212 = vmatprep.subr.mxu0 0.0
    %3213 = vmatpush1.msra.mxu0 0.0
    %3214 = vmatprep.subr.mxu0 0.0
    %3215 = vmatpush1.msra.mxu0 0.0
    %3216 = vmatprep.subr.mxu0 0.0
    %3217 = vmatpush1.msra.mxu0 0.0
    %3218 = vmatprep.subr.mxu0 0.0
    %3219 = vmatpush1.msra.mxu0 0.0
    %3220 = vmatprep.subr.mxu0 0.0
    %3221 = vmatpush1.msra.mxu0 0.0
    %3222 = vmatprep.subr.mxu0 0.0
    %3223 = vmatpush1.msra.mxu0 %v2200
    %3224 = vmatprep.subr.mxu0 0.0
    %3225 = vmatpush1.msra.mxu0 %v2199
    %3226 = vmatprep.subr.mxu0 0.0
    %3227 = vmatpush1.msra.mxu0 %v2198
    %3228 = vmatprep.subr.mxu0 0.0
    %3229 = vmatpush1.msra.mxu0 %v2197
    %3230 = vmatprep.subr.mxu0 0.0
    %3231 = vmatpush2.msra.mxu0 0.0
    %3232 = vmatprep.subr.mxu0 0.0
    %3233 = vmatpush2.msra.mxu0 0.0
    %3234 = vmatprep.subr.mxu0 0.0
    %3235 = vmatpush2.msra.mxu0 0.0
    %3236 = vmatprep.subr.mxu0 0.0
    %3237 = vmatpush2.msra.mxu0 0.0
    %3238 = vmatprep.subr.mxu0 0.0
    %3239 = vmatpush2.msra.mxu0 0.0
    %3240 = vmatprep.subr.mxu0 0.0
    %3241 = vmatpush2.msra.mxu0 0.0
    %3242 = vmatprep.subr.mxu0 0.0
    %3243 = vmatpush2.msra.mxu0 0.0
    %3244 = vmatprep.subr.mxu0 0.0
    %3245 = vmatpush2.msra.mxu0 0.0
    %3246 = vmatprep.subr.mxu0 0.0
    %3247 = vmatpush2.msra.mxu0 0.0
    %3248 = vmatprep.subr.mxu0 0.0
    %3249 = vmatpush2.msra.mxu0 0.0
    %3250 = vmatprep.subr.mxu0 0.0
    %3251 = vmatpush2.msra.mxu0 0.0
    %3252 = vmatprep.subr.mxu0 0.0
    %3253 = vmatpush2.msra.mxu0 0.0
    %3254 = vmatprep.subr.mxu0 0.0
    %3255 = vmatpush2.msra.mxu0 0.0
    %3256 = vmatprep.subr.mxu0 0.0
    %3257 = vmatpush2.msra.mxu0 0.0
    %3258 = vmatprep.subr.mxu0 0.0
    %3259 = vmatpush2.msra.mxu0 0.0
    %3260 = vmatprep.subr.mxu0 0.0
    %3261 = vmatpush2.msra.mxu0 0.0
    %3262 = vmatprep.mubr.f32.mxu0 0.0
    %3263 = vmatmul.mubr.f32.gmra.mxu0 %v3196
    %v3264 = vpop.f32.mrf.mxu0
    %v3265 = vadd.f32 0.0, %v3264
    %v3266 = vpop.f32.mrf.mxu0
    %3267 = vdwg.mxu0
    %v3268 = vadd.f32 %v3194, %v3265
    %v3269 = vtanh.pop %v3193
    %v3270 = vsel %vm676, %v3269, %v3116
    %v3271 = vtanh.pop %v3268
    %v3272 = vsel %vm668, %v3271, %v3118
    %v3273 = vld [vmem:[#allocation2 + $0x38] sm:$0xff]
    %v3275 = vsel %vm79, %v3270, 0
    %3277 = vmatprep.subr.mxu0 0.0
    %3278 = vmatpush1.msra.mxu0 0.0
    %3279 = vmatprep.subr.mxu0 0.0
    %3280 = vmatpush1.msra.mxu0 0.0
    %3281 = vmatprep.subr.mxu0 0.0
    %3282 = vmatpush1.msra.mxu0 0.0
    %3283 = vmatprep.subr.mxu0 0.0
    %3284 = vmatpush1.msra.mxu0 0.0
    %3285 = vmatprep.subr.mxu0 0.0
    %3286 = vmatpush1.msra.mxu0 0.0
    %3287 = vmatprep.subr.mxu0 0.0
    %3288 = vmatpush1.msra.mxu0 0.0
    %3289 = vmatprep.subr.mxu0 0.0
    %3290 = vmatpush1.msra.mxu0 0.0
    %3291 = vmatprep.subr.mxu0 0.0
    %3292 = vmatpush1.msra.mxu0 0.0
    %3293 = vmatprep.subr.mxu0 0.0
    %3294 = vmatpush1.msra.mxu0 0.0
    %3295 = vmatprep.subr.mxu0 0.0
    %3296 = vmatpush1.msra.mxu0 0.0
    %3297 = vmatprep.subr.mxu0 0.0
    %3298 = vmatpush1.msra.mxu0 0.0
    %3299 = vmatprep.subr.mxu0 0.0
    %3300 = vmatpush1.msra.mxu0 0.0
    %3301 = vmatprep.subr.mxu0 0.0
    %3302 = vmatpush1.msra.mxu0 %v2195
    %3303 = vmatprep.subr.mxu0 0.0
    %3304 = vmatpush1.msra.mxu0 %v2194
    %3305 = vmatprep.subr.mxu0 0.0
    %3306 = vmatpush1.msra.mxu0 %v2193
    %3307 = vmatprep.subr.mxu0 0.0
    %3308 = vmatpush1.msra.mxu0 %v2192
    %3309 = vmatprep.subr.mxu0 0.0
    %3310 = vmatpush2.msra.mxu0 0.0
    %3311 = vmatprep.subr.mxu0 0.0
    %3312 = vmatpush2.msra.mxu0 0.0
    %3313 = vmatprep.subr.mxu0 0.0
    %3314 = vmatpush2.msra.mxu0 0.0
    %3315 = vmatprep.subr.mxu0 0.0
    %3316 = vmatpush2.msra.mxu0 0.0
    %3317 = vmatprep.subr.mxu0 0.0
    %3318 = vmatpush2.msra.mxu0 0.0
    %3319 = vmatprep.subr.mxu0 0.0
    %3320 = vmatpush2.msra.mxu0 0.0
    %3321 = vmatprep.subr.mxu0 0.0
    %3322 = vmatpush2.msra.mxu0 0.0
    %3323 = vmatprep.subr.mxu0 0.0
    %3324 = vmatpush2.msra.mxu0 0.0
    %3325 = vmatprep.subr.mxu0 0.0
    %3326 = vmatpush2.msra.mxu0 0.0
    %3327 = vmatprep.subr.mxu0 0.0
    %3328 = vmatpush2.msra.mxu0 0.0
    %3329 = vmatprep.subr.mxu0 0.0
    %3330 = vmatpush2.msra.mxu0 0.0
    %3331 = vmatprep.subr.mxu0 0.0
    %3332 = vmatpush2.msra.mxu0 0.0
    %3333 = vmatprep.subr.mxu0 0.0
    %3334 = vmatpush2.msra.mxu0 0.0
    %3335 = vmatprep.subr.mxu0 0.0
    %3336 = vmatpush2.msra.mxu0 0.0
    %3337 = vmatprep.subr.mxu0 0.0
    %3338 = vmatpush2.msra.mxu0 0.0
    %3339 = vmatprep.subr.mxu0 0.0
    %3340 = vmatpush2.msra.mxu0 0.0
    %3341 = vmatprep.mubr.f32.mxu0 0.0
    %3342 = vmatmul.mubr.f32.gmra.mxu0 %v3275
    %v3343 = vpop.f32.mrf.mxu0
    %v3344 = vadd.f32 0.0, %v3343
    %v3345 = vpop.f32.mrf.mxu0
    %3346 = vdwg.mxu0
    %v3347 = vadd.f32 %v3273, %v3344
    %v3348 = vld [vmem:[#allocation3] sm:$0xff]
    %v3350 = vsel %vm79, %v3272, 0
    %3352 = vmatprep.subr.mxu0 0.0
    %3353 = vmatpush1.msra.mxu0 0.0
    %3354 = vmatprep.subr.mxu0 0.0
    %3355 = vmatpush1.msra.mxu0 0.0
    %3356 = vmatprep.subr.mxu0 0.0
    %3357 = vmatpush1.msra.mxu0 0.0
    %3358 = vmatprep.subr.mxu0 0.0
    %3359 = vmatpush1.msra.mxu0 0.0
    %3360 = vmatprep.subr.mxu0 0.0
    %3361 = vmatpush1.msra.mxu0 0.0
    %3362 = vmatprep.subr.mxu0 0.0
    %3363 = vmatpush1.msra.mxu0 0.0
    %3364 = vmatprep.subr.mxu0 0.0
    %3365 = vmatpush1.msra.mxu0 0.0
    %3366 = vmatprep.subr.mxu0 0.0
    %3367 = vmatpush1.msra.mxu0 0.0
    %3368 = vmatprep.subr.mxu0 0.0
    %3369 = vmatpush1.msra.mxu0 0.0
    %3370 = vmatprep.subr.mxu0 0.0
    %3371 = vmatpush1.msra.mxu0 0.0
    %3372 = vmatprep.subr.mxu0 0.0
    %3373 = vmatpush1.msra.mxu0 0.0
    %3374 = vmatprep.subr.mxu0 0.0
    %3375 = vmatpush1.msra.mxu0 0.0
    %3376 = vmatprep.subr.mxu0 0.0
    %3377 = vmatpush1.msra.mxu0 %v2200
    %3378 = vmatprep.subr.mxu0 0.0
    %3379 = vmatpush1.msra.mxu0 %v2199
    %3380 = vmatprep.subr.mxu0 0.0
    %3381 = vmatpush1.msra.mxu0 %v2198
    %3382 = vmatprep.subr.mxu0 0.0
    %3383 = vmatpush1.msra.mxu0 %v2197
    %3384 = vmatprep.subr.mxu0 0.0
    %3385 = vmatpush2.msra.mxu0 0.0
    %3386 = vmatprep.subr.mxu0 0.0
    %3387 = vmatpush2.msra.mxu0 0.0
    %3388 = vmatprep.subr.mxu0 0.0
    %3389 = vmatpush2.msra.mxu0 0.0
    %3390 = vmatprep.subr.mxu0 0.0
    %3391 = vmatpush2.msra.mxu0 0.0
    %3392 = vmatprep.subr.mxu0 0.0
    %3393 = vmatpush2.msra.mxu0 0.0
    %3394 = vmatprep.subr.mxu0 0.0
    %3395 = vmatpush2.msra.mxu0 0.0
    %3396 = vmatprep.subr.mxu0 0.0
    %3397 = vmatpush2.msra.mxu0 0.0
    %3398 = vmatprep.subr.mxu0 0.0
    %3399 = vmatpush2.msra.mxu0 0.0
    %3400 = vmatprep.subr.mxu0 0.0
    %3401 = vmatpush2.msra.mxu0 0.0
    %3402 = vmatprep.subr.mxu0 0.0
    %3403 = vmatpush2.msra.mxu0 0.0
    %3404 = vmatprep.subr.mxu0 0.0
    %3405 = vmatpush2.msra.mxu0 0.0
    %3406 = vmatprep.subr.mxu0 0.0
    %3407 = vmatpush2.msra.mxu0 0.0
    %3408 = vmatprep.subr.mxu0 0.0
    %3409 = vmatpush2.msra.mxu0 0.0
    %3410 = vmatprep.subr.mxu0 0.0
    %3411 = vmatpush2.msra.mxu0 0.0
    %3412 = vmatprep.subr.mxu0 0.0
    %3413 = vmatpush2.msra.mxu0 0.0
    %3414 = vmatprep.subr.mxu0 0.0
    %3415 = vmatpush2.msra.mxu0 0.0
    %3416 = vmatprep.mubr.f32.mxu0 0.0
    %3417 = vmatmul.mubr.f32.gmra.mxu0 %v3350
    %v3418 = vpop.f32.mrf.mxu0
    %v3419 = vadd.f32 0.0, %v3418
    %v3420 = vpop.f32.mrf.mxu0
    %3421 = vdwg.mxu0
    %v3422 = vadd.f32 %v3348, %v3419
    %v3423 = vtanh.pop %v3347
    %v3424 = vsel %vm508, %v3423, %v3270
    %v3425 = vtanh.pop %v3422
    %v3426 = vsel %vm500, %v3425, %v3272
    %3427 = vst.msk [vmem:[#allocation13] sm:$0xff] %vm79, %v3424
    %3429 = vrot.lane.b32.xlu0 %v3426, 32
    %v3430 = vpop.permute.xlu0 %3429
    %vm3432 = vcmask 523520
    %3433 = vst.msk [vmem:[#allocation13] sm:$0xff] %vm3432, %v3430
    // Predicated region
    $region34: #{tpu_custom_call.1} parent=1 // pred_check
      _
    $region35: #{tpu_custom_call.1} parent=1 // pred_check_branch
      %3435 = sbr.rel (0) target = $region37
    $region36: #{tpu_custom_call.1} parent=1 // pred_region
      %s3437 = ssub.s32 128, 128
      %3438 = vsyncadd [#allocation10], %s3437
      %s3440 = sshll.u32 [#allocation13], 4
      %s3441 = int_to_ptr.vmem [resolvable:$true] %s3440
      %3443 = dma.vmem_to_hbm [thread:$0]  %s3441, 128, %s7, [#allocation10]
    $region37: #{tpu_custom_call.1} parent=1 // pred_fallthru
      _
    // Predicated region
    $region38: #{tpu_custom_call.1} parent=1 // pred_check
      _
    $region39: #{tpu_custom_call.1} parent=1 // pred_check_branch
      %3445 = sbr.rel (0) target = $region41
    $region40: #{tpu_custom_call.1} parent=1 // pred_region
      %3446 = dma.done [#allocation10], 128
    $region41: #{tpu_custom_call.1} parent=1 // pred_fallthru
      _
    %3447 = vsyncpa [#allocation9], 1
    %3448 = vsyncpa [#allocation12], 1
    %3449 = vsyncpa [#allocation10], 1

</llo_original>
